<compile_context>
chip_gen: v7x
topology: tpu7x:2x2x1
jax: 0.10.0
libtpu: 0.0.40
codegen_flags: <defaults>
</compile_context>

<pallas_src>
import jax
import jax.numpy as jnp
from jax import lax
from jax.experimental import pallas as pl
from jax.experimental.pallas import tpu as pltpu


def _round_up(x, m):
    return ((x + m - 1) // m) * m


# ----------------------------------------------------------------------------- kernel
def _make_kernel(n_layers, H, Hp, E, Vp, sos_idx, U, Bb):
    """Kernel body for one (batch-block, U-timestep) grid step."""
    G = 4 * Hp

    def kernel(*refs):
        enc_ref, emb_ref = refs[0], refs[1]
        layer_refs = refs[2:2 + 3 * n_layers]            # (w_ih, w_hh, b) per layer
        wout_ref = refs[2 + 3 * n_layers]
        bout_ref = refs[3 + 3 * n_layers]
        out_ref = refs[4 + 3 * n_layers]
        h_state, c_state, emb_scr = refs[5 + 3 * n_layers:]

        t = pl.program_id(1)                             # time axis (true recurrence)

        @pl.when(t == 0)
        def _init():
            enc = enc_ref[...]                           # (Bb, H) f32
            zeros = jnp.zeros((Bb, H), jnp.float32)
            for l in range(n_layers):
                h_state[l, :, :] = enc.astype(jnp.bfloat16)   # every layer h0 = enc
                c_state[l, :, :] = zeros                      # initial_c = 0
            sos_row = emb_ref[sos_idx:sos_idx + 1, :]         # (1, E) bf16
            emb_scr[...] = jnp.broadcast_to(sos_row, (Bb, E))

        # ---- loop-invariant loads / broadcasts, once per grid step ----
        emb = emb_ref[...]                                    # (Vp, E) bf16
        w_ih = [layer_refs[3 * l][...] for l in range(n_layers)]
        w_hh = [layer_refs[3 * l + 1][...] for l in range(n_layers)]
        b_g = [jnp.broadcast_to(layer_refs[3 * l + 2][...], (Bb, G))
               for l in range(n_layers)]
        w_out = wout_ref[...]
        b_out = jnp.broadcast_to(bout_ref[...], (Bb, Vp))
        iota_v = lax.broadcasted_iota(jnp.int32, (Bb, Vp), 1)

        # recurrence state: scratch -> registers for the U unrolled steps
        hs = [h_state[l, :, :] for l in range(n_layers)]      # bf16 (Bb, H)
        cs = [c_state[l, :, :] for l in range(n_layers)]      # f32  (Bb, H)
        x = emb_scr[...]                                      # bf16 (Bb, E)

        for u in range(U):
            inp = x
            for l in range(n_layers):
                # two MXU pushes per layer (no concat copy); f32 accumulation
                gates = (jnp.dot(inp, w_ih[l], preferred_element_type=jnp.float32)
                         + jnp.dot(hs[l], w_hh[l], preferred_element_type=jnp.float32)
                         + b_g[l])
                # lane-aligned gate slices (stride Hp), PyTorch gate order i, f, g, o
                i_g = jax.nn.sigmoid(gates[:, 0 * Hp:0 * Hp + H])
                f_g = jax.nn.sigmoid(gates[:, 1 * Hp:1 * Hp + H])
                g_g = jnp.tanh(gates[:, 2 * Hp:2 * Hp + H])
                o_g = jax.nn.sigmoid(gates[:, 3 * Hp:3 * Hp + H])
                c_new = f_g * cs[l] + i_g * g_g
                h_new = (o_g * jnp.tanh(c_new)).astype(jnp.bfloat16)
                cs[l] = c_new
                hs[l] = h_new
                inp = h_new

            # output projection: bf16 weights, f32 accumulation, lane-dense store
            logit = jnp.dot(inp, w_out, preferred_element_type=jnp.float32) + b_out
            out_ref[u, :, :] = logit                           # (Bb, Vp) unmasked vst

            # greedy first-argmax -> one-hot -> next-step embedding via the idle MXU
            m = jnp.max(logit, axis=-1, keepdims=True)         # (Bb, 1)
            cand = jnp.where(logit >= m, iota_v, Vp)           # (Bb, Vp) int32
            idx = jnp.min(cand, axis=-1, keepdims=True)        # first maximal index
            onehot = (cand == idx).astype(jnp.bfloat16)        # exactly one 1 per row
            x = jnp.dot(onehot, emb,
                        preferred_element_type=jnp.float32).astype(jnp.bfloat16)

        # write the carried state back once per grid step
        for l in range(n_layers):
            h_state[l, :, :] = hs[l]
            c_state[l, :, :] = cs[l]
        emb_scr[...] = x

    return kernel


# ----------------------------------------------------------------------------- wrapper
def _vmem_capacity_bytes():
    try:
        return int(pltpu.get_tpu_info().vmem_capacity_bytes)
    except Exception:
        return 64 << 20          # conservative fallback (= v7x per-TensorCore VMEM)


def _num_tensorcores_hint():
    try:
        kind = jax.devices()[0].device_kind.lower()
    except Exception:
        kind = ""
    return 2 if "v7" in kind else 1


def _build(packed, encoder_out, T, B, sos_idx, H, U, NB):
    Bb = B // NB
    Vp, E = packed["emb"].shape
    Hp = packed["Hp"]
    n_layers = len(packed["layers"])

    def const2(shape):
        return pl.BlockSpec(shape, lambda b, t: (0, 0))

    inputs = [encoder_out, packed["emb"]]
    in_specs = [
        pl.BlockSpec((Bb, H), lambda b, t: (b, 0)),       # encoder block per batch block
        const2(packed["emb"].shape),                      # embedding table (Vp, E) bf16
    ]
    for (w_ih, w_hh, bias) in packed["layers"]:
        inputs += [w_ih, w_hh, bias]
        in_specs += [const2(w_ih.shape), const2(w_hh.shape), const2(bias.shape)]
    inputs += [packed["w_out"], packed["b_out"]]
    in_specs += [const2(packed["w_out"].shape), const2(packed["b_out"].shape)]

    kernel = _make_kernel(n_layers, H, Hp, E, Vp, sos_idx, U, Bb)

    # explicit VMEM budget from the resident footprint, clamped to physical capacity
    def _nbytes(a):
        return int(a.size) * a.dtype.itemsize
    in_block_bytes = Bb * H * 4 + sum(_nbytes(a) for a in inputs[1:])
    out_block_bytes = U * Bb * Vp * 4
    scratch_bytes = n_layers * Bb * H * (2 + 4) + Bb * E * 2
    need = 2 * (in_block_bytes + out_block_bytes) + scratch_bytes
    cap = _vmem_capacity_bytes()
    vmem_limit = int(min(max(2 * need, 32 << 20), cap - (8 << 20)))

    grid_spec = pltpu.PrefetchScalarGridSpec(
        num_scalar_prefetch=0,
        grid=(NB, T // U),                                # (batch blocks, time chunks)
        in_specs=in_specs,
        out_specs=pl.BlockSpec((U, Bb, Vp), lambda b, t: (t, b, 0)),
        scratch_shapes=[
            pltpu.VMEM((n_layers, Bb, H), jnp.bfloat16),  # h states (persist across t)
            pltpu.VMEM((n_layers, Bb, H), jnp.float32),   # c states
            pltpu.VMEM((Bb, E), jnp.bfloat16),            # next-step token embedding
        ],
    )

    fn = pl.pallas_call(
        kernel,
        out_shape=jax.ShapeDtypeStruct((T, B, Vp), jnp.float32),
        grid_spec=grid_spec,
        compiler_params=pltpu.CompilerParams(
            # batch axis is embarrassingly parallel (only split when 2 TCs exist);
            # time axis is the recurrence and MUST stay sequential ("arbitrary").
            dimension_semantics=("parallel", "arbitrary"),
            vmem_limit_bytes=vmem_limit),
    )
    return fn, inputs


def lstm_decoder_forward(encoder_out, x, packed, sos_idx, hidden_size):
    """Eval-mode greedy decode. x only supplies T (teacher forcing is train-only)."""
    T, B = x.shape
    H = hidden_size
    V = packed["V"]

    # unroll factor (amortize ~0.35us per-grid-step overhead)
    U = 1
    for cand in (4, 2):
        if T % cand == 0:
            U = cand
            break

    # batch "parallel" blocks only when 2 TensorCores are present (v7x)
    NB = 2 if (_num_tensorcores_hint() == 2 and B % 2 == 0 and (B // 2) % 8 == 0) else 1

    fn, inputs = _build(packed, encoder_out, T, B, int(sos_idx), H, U, NB)
    out = fn(*inputs)                                     # (T, B, Vp) f32
    return out[:, :, :V]                                  # trim vocab lane padding


# ----------------------------------------------------------------------------- params
def init_params(key, emb_dim, hidden_size, n_hidden, vocab_size):
    """Module-faithful parameters (f32, PyTorch-style shapes, gate order i,f,g,o)."""
    ks = jax.random.split(key, 4 + 4 * n_hidden)
    s = 1.0 / jnp.sqrt(hidden_size)
    params = {
        "emb": jax.random.normal(ks[0], (vocab_size, emb_dim), jnp.float32),
        "w_out": jax.random.uniform(ks[1], (hidden_size, vocab_size), jnp.float32, -s, s),
        "b_out": jax.random.uniform(ks[2], (1, vocab_size), jnp.float32, -s, s),
        "layers": [],
    }
    for l in range(n_hidden):
        in_dim = emb_dim if l == 0 else hidden_size
        kw = ks[3 + 4 * l: 3 + 4 * (l + 1)]
        w_ih = jax.random.uniform(kw[0], (in_dim, 4 * hidden_size), jnp.float32, -s, s)
        w_hh = jax.random.uniform(kw[1], (hidden_size, 4 * hidden_size), jnp.float32, -s, s)
        b = (jax.random.uniform(kw[2], (1, 4 * hidden_size), jnp.float32, -s, s)
             + jax.random.uniform(kw[3], (1, 4 * hidden_size), jnp.float32, -s, s))
        params["layers"].append((w_ih, w_hh, b))
    return params


def pack_params(params, hidden_size):
    """Kernel layout: bf16 weight matrices (f32 accumulation in-kernel), gate columns
    padded to a lane-aligned stride Hp, vocab padded to Vp=round_up(V,128) with -1e30
    padded output-bias columns (never win the argmax), embedding rows padded to Vp."""
    H = hidden_size
    Hp = _round_up(H, 128)
    V, E = params["emb"].shape
    Vp = _round_up(V, 128)

    emb_pad = jnp.zeros((Vp, E), jnp.float32).at[:V, :].set(params["emb"])
    w_out_pad = jnp.zeros((H, Vp), jnp.float32).at[:, :V].set(params["w_out"])
    b_out_pad = jnp.full((1, Vp), -1e30, jnp.float32).at[:, :V].set(params["b_out"])

    packed = {
        "Hp": Hp, "V": V, "Vp": Vp,
        "emb": emb_pad.astype(jnp.bfloat16),
        "w_out": w_out_pad.astype(jnp.bfloat16),
        "b_out": b_out_pad,
        "layers": [],
    }
    for (w_ih, w_hh, b) in params["layers"]:
        in_dim = w_ih.shape[0]
        w_ih_p = jnp.zeros((in_dim, 4 * Hp), jnp.float32)
        w_hh_p = jnp.zeros((H, 4 * Hp), jnp.float32)
        b_p = jnp.zeros((1, 4 * Hp), jnp.float32)
        for g in range(4):                                # gate order i, f, g, o
            w_ih_p = w_ih_p.at[:, g * Hp:g * Hp + H].set(w_ih[:, g * H:(g + 1) * H])
            w_hh_p = w_hh_p.at[:, g * Hp:g * Hp + H].set(w_hh[:, g * H:(g + 1) * H])
            b_p = b_p.at[:, g * Hp:g * Hp + H].set(b[:, g * H:(g + 1) * H])
        packed["layers"].append((w_ih_p.astype(jnp.bfloat16),
                                 w_hh_p.astype(jnp.bfloat16), b_p))
    return packed


# ----------------------------------------------------------------------------- reference
def lstm_decoder_ref(encoder_out, T, packed, sos_idx, hidden_size):
    """Pure-JAX reference mirroring the kernel math (bf16 weights / bf16 h / f32 acc)."""
    H = hidden_size
    Hp = packed["Hp"]
    V = packed["V"]
    B = encoder_out.shape[0]
    L = len(packed["layers"])
    emb = packed["emb"]
    hs = [encoder_out.astype(jnp.bfloat16) for _ in range(L)]
    cs = [jnp.zeros((B, H), jnp.float32) for _ in range(L)]
    x = jnp.broadcast_to(emb[sos_idx:sos_idx + 1, :], (B, emb.shape[1]))
    logits_all = []
    for _ in range(T):
        inp = x
        for l in range(L):
            w_ih, w_hh, b = packed["layers"][l]
            gates = (jnp.dot(inp, w_ih, preferred_element_type=jnp.float32)
                     + jnp.dot(hs[l], w_hh, preferred_element_type=jnp.float32) + b)
            i = jax.nn.sigmoid(gates[:, 0 * Hp:0 * Hp + H])
            f = jax.nn.sigmoid(gates[:, 1 * Hp:1 * Hp + H])
            g = jnp.tanh(gates[:, 2 * Hp:2 * Hp + H])
            o = jax.nn.sigmoid(gates[:, 3 * Hp:3 * Hp + H])
            c = f * cs[l] + i * g
            h = (o * jnp.tanh(c)).astype(jnp.bfloat16)
            cs[l], hs[l] = c, h
            inp = h
        logit = (jnp.dot(inp, packed["w_out"], preferred_element_type=jnp.float32)
                 + packed["b_out"])
        logits_all.append(logit[:, :V])
        tok = jnp.argmax(logit, axis=1)                   # pads are -1e30: never chosen
        x = emb[tok]
    return jnp.stack(logits_all, axis=0)


# ----------------------------------------------------------------------------- main
if __name__ == "__main__":
    emb_dim, hidden_size, n_hidden, vocab_size = 16, 32, 2, 32
    T, B = 8, 16
    sos_idx = 1

    key = jax.random.PRNGKey(0)
    kp, ke, kx = jax.random.split(key, 3)
    params = init_params(kp, emb_dim, hidden_size, n_hidden, vocab_size)
    packed = pack_params(params, hidden_size)
    encoder_out = jax.random.normal(ke, (B, hidden_size), jnp.float32)
    x = jax.random.randint(kx, (T, B), 0, vocab_size, jnp.int32)  # only T used (eval)

    logits = lstm_decoder_forward(encoder_out, x, packed, sos_idx, hidden_size)
    logits = jax.block_until_ready(logits)

    ref = lstm_decoder_ref(encoder_out, T, packed, sos_idx, hidden_size)

    assert logits.shape == (T, B, vocab_size)
    assert bool(jnp.all(jnp.isfinite(logits)))

    # Greedy decode is only expected to match the reference while the decoded prefixes
    # agree; a near-tie may flip the chosen token under tiny accumulation-order
    # differences. Compare logits only at positions whose full prefix of greedy tokens
    # matches the reference trajectory, and require the comparison to be non-vacuous.
    tok_k = jnp.argmax(logits, axis=-1)
    tok_r = jnp.argmax(ref, axis=-1)
    agree = (tok_k == tok_r).astype(jnp.int32)                      # (T, B)
    prefix = jnp.cumprod(agree, axis=0)
    prefix_ok = jnp.concatenate(
        [jnp.ones((1, B), jnp.int32), prefix[:-1]], axis=0).astype(bool)
    err = jnp.where(prefix_ok[..., None], jnp.abs(logits - ref), 0.0)
    assert float(err.max()) < 1e-2
    assert float(prefix_ok.astype(jnp.float32).mean()) > 0.25

    print("KERNEL_OK")
</pallas_src>

<mosaic_0001>
module attributes {stable_mosaic.version = 11 : i64} {
  func.func @kernel(%arg0: i32, %arg1: i32, %arg2: memref<16x32xf32, #tpu.memory_space<vmem>>, %arg3: memref<128x16xbf16, #tpu.memory_space<vmem>>, %arg4: memref<16x512xbf16, #tpu.memory_space<vmem>>, %arg5: memref<32x512xbf16, #tpu.memory_space<vmem>>, %arg6: memref<1x512xf32, #tpu.memory_space<vmem>>, %arg7: memref<32x512xbf16, #tpu.memory_space<vmem>>, %arg8: memref<32x512xbf16, #tpu.memory_space<vmem>>, %arg9: memref<1x512xf32, #tpu.memory_space<vmem>>, %arg10: memref<32x128xbf16, #tpu.memory_space<vmem>>, %arg11: memref<1x128xf32, #tpu.memory_space<vmem>>, %arg12: memref<4x16x128xf32, #tpu.memory_space<vmem>>, %arg13: memref<2x16x32xbf16, #tpu.memory_space<vmem>>, %arg14: memref<2x16x32xf32, #tpu.memory_space<vmem>>, %arg15: memref<16x16xbf16, #tpu.memory_space<vmem>>) attributes {dimension_semantics = [#tpu.dimension_semantics<parallel>, #tpu.dimension_semantics<arbitrary>], iteration_bounds = array<i64: 1, 2>, scalar_prefetch = 0 : i64, scratch_operands = 3 : i64, tpu.core_type = #tpu.core_type<tc>, window_params = [{transform_indices = @transform_0, window_bounds = array<i64: 16, 32>}, {pipeline_mode = #tpu.pipeline_mode<synchronous>, transform_indices = @transform_1, window_bounds = array<i64: 128, 16>}, {pipeline_mode = #tpu.pipeline_mode<synchronous>, transform_indices = @transform_2, window_bounds = array<i64: 16, 512>}, {pipeline_mode = #tpu.pipeline_mode<synchronous>, transform_indices = @transform_3, window_bounds = array<i64: 32, 512>}, {pipeline_mode = #tpu.pipeline_mode<synchronous>, transform_indices = @transform_4, window_bounds = array<i64: 1, 512>}, {pipeline_mode = #tpu.pipeline_mode<synchronous>, transform_indices = @transform_5, window_bounds = array<i64: 32, 512>}, {pipeline_mode = #tpu.pipeline_mode<synchronous>, transform_indices = @transform_6, window_bounds = array<i64: 32, 512>}, {pipeline_mode = #tpu.pipeline_mode<synchronous>, transform_indices = @transform_7, window_bounds = array<i64: 1, 512>}, {pipeline_mode = #tpu.pipeline_mode<synchronous>, transform_indices = @transform_8, window_bounds = array<i64: 32, 128>}, {pipeline_mode = #tpu.pipeline_mode<synchronous>, transform_indices = @transform_9, window_bounds = array<i64: 1, 128>}, {transform_indices = @transform_10, window_bounds = array<i64: 4, 16, 128>}]} {
    %c0_i32 = arith.constant 0 : i32
    %0 = arith.cmpi eq, %arg1, %c0_i32 : i32
    %1 = arith.extui %0 : i1 to i32
    %c0_i32_0 = arith.constant 0 : i32
    %2 = arith.cmpi ne, %1, %c0_i32_0 : i32
    scf.if %2 {
      %c0_113 = arith.constant 0 : index
      %c0_114 = arith.constant 0 : index
      %361 = vector.load %arg2[%c0_113, %c0_114] : memref<16x32xf32, #tpu.memory_space<vmem>>, vector<16x32xf32>
      %cst_115 = arith.constant 0.000000e+00 : f32
      %362 = vector.broadcast %cst_115 : f32 to vector<16x32xf32>
      %363 = arith.truncf %361 : vector<16x32xf32> to vector<16x32xbf16>
      %c0_116 = arith.constant 0 : index
      %c0_117 = arith.constant 0 : index
      %c0_118 = arith.constant 0 : index
      %364 = vector.load %arg13[%c0_116, %c0_117, %c0_118] : memref<2x16x32xbf16, #tpu.memory_space<vmem>>, vector<1x16x32xbf16>
      %365 = vector.shape_cast %364 : vector<1x16x32xbf16> to vector<16x32xbf16>
      %366 = vector.shape_cast %363 : vector<16x32xbf16> to vector<1x16x32xbf16>
      tpu.vector_store %arg13[%c0_116, %c0_117, %c0_118], %366 {strides = array<i32>} : memref<2x16x32xbf16, #tpu.memory_space<vmem>>, vector<1x16x32xbf16>,
      %c0_119 = arith.constant 0 : index
      %c0_120 = arith.constant 0 : index
      %c0_121 = arith.constant 0 : index
      %367 = vector.load %arg14[%c0_119, %c0_120, %c0_121] : memref<2x16x32xf32, #tpu.memory_space<vmem>>, vector<1x16x32xf32>
      %368 = vector.shape_cast %367 : vector<1x16x32xf32> to vector<16x32xf32>
      %369 = vector.shape_cast %362 : vector<16x32xf32> to vector<1x16x32xf32>
      tpu.vector_store %arg14[%c0_119, %c0_120, %c0_121], %369 {strides = array<i32>} : memref<2x16x32xf32, #tpu.memory_space<vmem>>, vector<1x16x32xf32>,
      %370 = arith.truncf %361 : vector<16x32xf32> to vector<16x32xbf16>
      %c1_122 = arith.constant 1 : index
      %c0_123 = arith.constant 0 : index
      %c0_124 = arith.constant 0 : index
      %371 = vector.load %arg13[%c1_122, %c0_123, %c0_124] : memref<2x16x32xbf16, #tpu.memory_space<vmem>>, vector<1x16x32xbf16>
      %372 = vector.shape_cast %371 : vector<1x16x32xbf16> to vector<16x32xbf16>
      %373 = vector.shape_cast %370 : vector<16x32xbf16> to vector<1x16x32xbf16>
      tpu.vector_store %arg13[%c1_122, %c0_123, %c0_124], %373 {strides = array<i32>} : memref<2x16x32xbf16, #tpu.memory_space<vmem>>, vector<1x16x32xbf16>,
      %c1_125 = arith.constant 1 : index
      %c0_126 = arith.constant 0 : index
      %c0_127 = arith.constant 0 : index
      %374 = vector.load %arg14[%c1_125, %c0_126, %c0_127] : memref<2x16x32xf32, #tpu.memory_space<vmem>>, vector<1x16x32xf32>
      %375 = vector.shape_cast %374 : vector<1x16x32xf32> to vector<16x32xf32>
      %376 = vector.shape_cast %362 : vector<16x32xf32> to vector<1x16x32xf32>
      tpu.vector_store %arg14[%c1_125, %c0_126, %c0_127], %376 {strides = array<i32>} : memref<2x16x32xf32, #tpu.memory_space<vmem>>, vector<1x16x32xf32>,
      %c1_128 = arith.constant 1 : index
      %c0_129 = arith.constant 0 : index
      %377 = vector.load %arg3[%c1_128, %c0_129] : memref<128x16xbf16, #tpu.memory_space<vmem>>, vector<1x16xbf16>
      %378 = vector.shape_cast %377 : vector<1x16xbf16> to vector<1x16xbf16>
      %379 = vector.broadcast %378 : vector<1x16xbf16> to vector<16x16xbf16>
      %c0_130 = arith.constant 0 : index
      %c0_131 = arith.constant 0 : index
      %380 = vector.load %arg15[%c0_130, %c0_131] : memref<16x16xbf16, #tpu.memory_space<vmem>>, vector<16x16xbf16>
      tpu.vector_store %arg15[%c0_130, %c0_131], %379 {strides = array<i32>} : memref<16x16xbf16, #tpu.memory_space<vmem>>, vector<16x16xbf16>,
    } else {
    }
    %c0 = arith.constant 0 : index
    %c0_1 = arith.constant 0 : index
    %3 = vector.load %arg3[%c0, %c0_1] : memref<128x16xbf16, #tpu.memory_space<vmem>>, vector<128x16xbf16>
    %c0_2 = arith.constant 0 : index
    %c0_3 = arith.constant 0 : index
    %4 = vector.load %arg4[%c0_2, %c0_3] : memref<16x512xbf16, #tpu.memory_space<vmem>>, vector<16x512xbf16>
    %c0_4 = arith.constant 0 : index
    %c0_5 = arith.constant 0 : index
    %5 = vector.load %arg7[%c0_4, %c0_5] : memref<32x512xbf16, #tpu.memory_space<vmem>>, vector<32x512xbf16>
    %c0_6 = arith.constant 0 : index
    %c0_7 = arith.constant 0 : index
    %6 = vector.load %arg5[%c0_6, %c0_7] : memref<32x512xbf16, #tpu.memory_space<vmem>>, vector<32x512xbf16>
    %c0_8 = arith.constant 0 : index
    %c0_9 = arith.constant 0 : index
    %7 = vector.load %arg8[%c0_8, %c0_9] : memref<32x512xbf16, #tpu.memory_space<vmem>>, vector<32x512xbf16>
    %c0_10 = arith.constant 0 : index
    %c0_11 = arith.constant 0 : index
    %8 = vector.load %arg6[%c0_10, %c0_11] : memref<1x512xf32, #tpu.memory_space<vmem>>, vector<1x512xf32>
    %9 = vector.shape_cast %8 : vector<1x512xf32> to vector<1x512xf32>
    %10 = vector.broadcast %9 : vector<1x512xf32> to vector<16x512xf32>
    %c0_12 = arith.constant 0 : index
    %c0_13 = arith.constant 0 : index
    %11 = vector.load %arg9[%c0_12, %c0_13] : memref<1x512xf32, #tpu.memory_space<vmem>>, vector<1x512xf32>
    %12 = vector.shape_cast %11 : vector<1x512xf32> to vector<1x512xf32>
    %13 = vector.broadcast %12 : vector<1x512xf32> to vector<16x512xf32>
    %c0_14 = arith.constant 0 : index
    %c0_15 = arith.constant 0 : index
    %14 = vector.load %arg10[%c0_14, %c0_15] : memref<32x128xbf16, #tpu.memory_space<vmem>>, vector<32x128xbf16>
    %c0_16 = arith.constant 0 : index
    %c0_17 = arith.constant 0 : index
    %15 = vector.load %arg11[%c0_16, %c0_17] : memref<1x128xf32, #tpu.memory_space<vmem>>, vector<1x128xf32>
    %16 = vector.shape_cast %15 : vector<1x128xf32> to vector<1x128xf32>
    %17 = vector.broadcast %16 : vector<1x128xf32> to vector<16x128xf32>
    %18 = tpu.iota {dimensions = array<i32: 1>} : vector<16x128xi32>
    %c0_18 = arith.constant 0 : index
    %c0_19 = arith.constant 0 : index
    %c0_20 = arith.constant 0 : index
    %19 = vector.load %arg13[%c0_18, %c0_19, %c0_20] : memref<2x16x32xbf16, #tpu.memory_space<vmem>>, vector<1x16x32xbf16>
    %20 = vector.shape_cast %19 : vector<1x16x32xbf16> to vector<16x32xbf16>
    %c1 = arith.constant 1 : index
    %c0_21 = arith.constant 0 : index
    %c0_22 = arith.constant 0 : index
    %21 = vector.load %arg13[%c1, %c0_21, %c0_22] : memref<2x16x32xbf16, #tpu.memory_space<vmem>>, vector<1x16x32xbf16>
    %22 = vector.shape_cast %21 : vector<1x16x32xbf16> to vector<16x32xbf16>
    %c0_23 = arith.constant 0 : index
    %c0_24 = arith.constant 0 : index
    %c0_25 = arith.constant 0 : index
    %23 = vector.load %arg14[%c0_23, %c0_24, %c0_25] : memref<2x16x32xf32, #tpu.memory_space<vmem>>, vector<1x16x32xf32>
    %24 = vector.shape_cast %23 : vector<1x16x32xf32> to vector<16x32xf32>
    %c1_26 = arith.constant 1 : index
    %c0_27 = arith.constant 0 : index
    %c0_28 = arith.constant 0 : index
    %25 = vector.load %arg14[%c1_26, %c0_27, %c0_28] : memref<2x16x32xf32, #tpu.memory_space<vmem>>, vector<1x16x32xf32>
    %26 = vector.shape_cast %25 : vector<1x16x32xf32> to vector<16x32xf32>
    %c0_29 = arith.constant 0 : index
    %c0_30 = arith.constant 0 : index
    %27 = vector.load %arg15[%c0_29, %c0_30] : memref<16x16xbf16, #tpu.memory_space<vmem>>, vector<16x16xbf16>
    %cst = arith.constant dense<0.000000e+00> : vector<16x512xf32>
    %28 = tpu.matmul %27, %4, %cst {dimension_numbers = #tpu.dot_dimension_numbers<[1], [0], [0], [1], [0, 0, 1, 1], [], []>} : vector<16x16xbf16>, vector<16x512xbf16>, vector<16x512xf32> -> vector<16x512xf32>
    %cst_31 = arith.constant dense<0.000000e+00> : vector<16x512xf32>
    %29 = tpu.matmul %20, %6, %cst_31 {dimension_numbers = #tpu.dot_dimension_numbers<[1], [0], [0], [1], [0, 0, 1, 1], [], []>} : vector<16x32xbf16>, vector<32x512xbf16>, vector<16x512xf32> -> vector<16x512xf32>
    %30 = arith.addf %28, %29 : vector<16x512xf32>
    %31 = arith.addf %30, %10 : vector<16x512xf32>
    %32 = vector.extract_strided_slice %31 {offsets = [0, 0], sizes = [16, 32], strides = [1, 1]} : vector<16x512xf32> to vector<16x32xf32>
    %33 = arith.negf %32 : vector<16x32xf32>
    %34 = math.exp %33 : vector<16x32xf32>
    %cst_32 = arith.constant 1.000000e+00 : f32
    %35 = vector.broadcast %cst_32 : f32 to vector<16x32xf32>
    %36 = arith.addf %35, %34 : vector<16x32xf32>
    %37 = arith.divf %35, %36 : vector<16x32xf32>
    %38 = vector.extract_strided_slice %31 {offsets = [0, 128], sizes = [16, 32], strides = [1, 1]} : vector<16x512xf32> to vector<16x32xf32>
    %39 = arith.negf %38 : vector<16x32xf32>
    %40 = math.exp %39 : vector<16x32xf32>
    %cst_33 = arith.constant 1.000000e+00 : f32
    %41 = vector.broadcast %cst_33 : f32 to vector<16x32xf32>
    %42 = arith.addf %41, %40 : vector<16x32xf32>
    %43 = arith.divf %41, %42 : vector<16x32xf32>
    %44 = vector.extract_strided_slice %31 {offsets = [0, 256], sizes = [16, 32], strides = [1, 1]} : vector<16x512xf32> to vector<16x32xf32>
    %45 = math.tanh %44 : vector<16x32xf32>
    %46 = vector.extract_strided_slice %31 {offsets = [0, 384], sizes = [16, 32], strides = [1, 1]} : vector<16x512xf32> to vector<16x32xf32>
    %47 = arith.negf %46 : vector<16x32xf32>
    %48 = math.exp %47 : vector<16x32xf32>
    %cst_34 = arith.constant 1.000000e+00 : f32
    %49 = vector.broadcast %cst_34 : f32 to vector<16x32xf32>
    %50 = arith.addf %49, %48 : vector<16x32xf32>
    %51 = arith.divf %49, %50 : vector<16x32xf32>
    %52 = arith.mulf %43, %24 : vector<16x32xf32>
    %53 = arith.mulf %37, %45 : vector<16x32xf32>
    %54 = arith.addf %52, %53 : vector<16x32xf32>
    %55 = math.tanh %54 : vector<16x32xf32>
    %56 = arith.mulf %51, %55 : vector<16x32xf32>
    %57 = arith.truncf %56 : vector<16x32xf32> to vector<16x32xbf16>
    %cst_35 = arith.constant dense<0.000000e+00> : vector<16x512xf32>
    %58 = tpu.matmul %57, %5, %cst_35 {dimension_numbers = #tpu.dot_dimension_numbers<[1], [0], [0], [1], [0, 0, 1, 1], [], []>} : vector<16x32xbf16>, vector<32x512xbf16>, vector<16x512xf32> -> vector<16x512xf32>
    %cst_36 = arith.constant dense<0.000000e+00> : vector<16x512xf32>
    %59 = tpu.matmul %22, %7, %cst_36 {dimension_numbers = #tpu.dot_dimension_numbers<[1], [0], [0], [1], [0, 0, 1, 1], [], []>} : vector<16x32xbf16>, vector<32x512xbf16>, vector<16x512xf32> -> vector<16x512xf32>
    %60 = arith.addf %58, %59 : vector<16x512xf32>
    %61 = arith.addf %60, %13 : vector<16x512xf32>
    %62 = vector.extract_strided_slice %61 {offsets = [0, 0], sizes = [16, 32], strides = [1, 1]} : vector<16x512xf32> to vector<16x32xf32>
    %63 = arith.negf %62 : vector<16x32xf32>
    %64 = math.exp %63 : vector<16x32xf32>
    %cst_37 = arith.constant 1.000000e+00 : f32
    %65 = vector.broadcast %cst_37 : f32 to vector<16x32xf32>
    %66 = arith.addf %65, %64 : vector<16x32xf32>
    %67 = arith.divf %65, %66 : vector<16x32xf32>
    %68 = vector.extract_strided_slice %61 {offsets = [0, 128], sizes = [16, 32], strides = [1, 1]} : vector<16x512xf32> to vector<16x32xf32>
    %69 = arith.negf %68 : vector<16x32xf32>
    %70 = math.exp %69 : vector<16x32xf32>
    %cst_38 = arith.constant 1.000000e+00 : f32
    %71 = vector.broadcast %cst_38 : f32 to vector<16x32xf32>
    %72 = arith.addf %71, %70 : vector<16x32xf32>
    %73 = arith.divf %71, %72 : vector<16x32xf32>
    %74 = vector.extract_strided_slice %61 {offsets = [0, 256], sizes = [16, 32], strides = [1, 1]} : vector<16x512xf32> to vector<16x32xf32>
    %75 = math.tanh %74 : vector<16x32xf32>
    %76 = vector.extract_strided_slice %61 {offsets = [0, 384], sizes = [16, 32], strides = [1, 1]} : vector<16x512xf32> to vector<16x32xf32>
    %77 = arith.negf %76 : vector<16x32xf32>
    %78 = math.exp %77 : vector<16x32xf32>
    %cst_39 = arith.constant 1.000000e+00 : f32
    %79 = vector.broadcast %cst_39 : f32 to vector<16x32xf32>
    %80 = arith.addf %79, %78 : vector<16x32xf32>
    %81 = arith.divf %79, %80 : vector<16x32xf32>
    %82 = arith.mulf %73, %26 : vector<16x32xf32>
    %83 = arith.mulf %67, %75 : vector<16x32xf32>
    %84 = arith.addf %82, %83 : vector<16x32xf32>
    %85 = math.tanh %84 : vector<16x32xf32>
    %86 = arith.mulf %81, %85 : vector<16x32xf32>
    %87 = arith.truncf %86 : vector<16x32xf32> to vector<16x32xbf16>
    %cst_40 = arith.constant dense<0.000000e+00> : vector<16x128xf32>
    %88 = tpu.matmul %87, %14, %cst_40 {dimension_numbers = #tpu.dot_dimension_numbers<[1], [0], [0], [1], [0, 0, 1, 1], [], []>} : vector<16x32xbf16>, vector<32x128xbf16>, vector<16x128xf32> -> vector<16x128xf32>
    %89 = arith.addf %88, %17 : vector<16x128xf32>
    %c0_41 = arith.constant 0 : index
    %c0_42 = arith.constant 0 : index
    %c0_43 = arith.constant 0 : index
    %90 = vector.load %arg12[%c0_41, %c0_42, %c0_43] : memref<4x16x128xf32, #tpu.memory_space<vmem>>, vector<1x16x128xf32>
    %91 = vector.shape_cast %90 : vector<1x16x128xf32> to vector<16x128xf32>
    %92 = vector.shape_cast %89 : vector<16x128xf32> to vector<1x16x128xf32>
    tpu.vector_store %arg12[%c0_41, %c0_42, %c0_43], %92 {strides = array<i32>} : memref<4x16x128xf32, #tpu.memory_space<vmem>>, vector<1x16x128xf32>,
    %cst_44 = arith.constant dense<0xFF800000> : vector<16xf32>
    %93 = vector.multi_reduction <maximumf>, %89, %cst_44 [1] : vector<16x128xf32> to vector<16xf32>
    %94 = vector.shape_cast %93 : vector<16xf32> to vector<16x1xf32>
    %95 = vector.broadcast %94 : vector<16x1xf32> to vector<16x128xf32>
    %96 = arith.cmpf oge, %89, %95 : vector<16x128xf32>
    %c128_i32 = arith.constant 128 : i32
    %97 = vector.broadcast %c128_i32 : i32 to vector<16x128xi32>
    %98 = arith.select %96, %18, %97 : vector<16x128xi1>, vector<16x128xi32>
    %cst_45 = arith.constant dense<2147483647> : vector<16xi32>
    %99 = vector.multi_reduction <minsi>, %98, %cst_45 [1] : vector<16x128xi32> to vector<16xi32>
    %100 = vector.shape_cast %99 : vector<16xi32> to vector<16x1xi32>
    %101 = vector.broadcast %100 : vector<16x1xi32> to vector<16x128xi32>
    %102 = arith.cmpi eq, %98, %101 : vector<16x128xi32>
    %103 = arith.extui %102 : vector<16x128xi1> to vector<16x128xi32>
    %104 = arith.sitofp %103 : vector<16x128xi32> to vector<16x128xf32>
    %105 = arith.truncf %104 : vector<16x128xf32> to vector<16x128xbf16>
    %cst_46 = arith.constant dense<0.000000e+00> : vector<16x16xf32>
    %106 = tpu.matmul %105, %3, %cst_46 {dimension_numbers = #tpu.dot_dimension_numbers<[1], [0], [0], [1], [0, 0, 1, 1], [], []>} : vector<16x128xbf16>, vector<128x16xbf16>, vector<16x16xf32> -> vector<16x16xf32>
    %107 = arith.truncf %106 : vector<16x16xf32> to vector<16x16xbf16>
    %cst_47 = arith.constant dense<0.000000e+00> : vector<16x512xf32>
    %108 = tpu.matmul %107, %4, %cst_47 {dimension_numbers = #tpu.dot_dimension_numbers<[1], [0], [0], [1], [0, 0, 1, 1], [], []>} : vector<16x16xbf16>, vector<16x512xbf16>, vector<16x512xf32> -> vector<16x512xf32>
    %cst_48 = arith.constant dense<0.000000e+00> : vector<16x512xf32>
    %109 = tpu.matmul %57, %6, %cst_48 {dimension_numbers = #tpu.dot_dimension_numbers<[1], [0], [0], [1], [0, 0, 1, 1], [], []>} : vector<16x32xbf16>, vector<32x512xbf16>, vector<16x512xf32> -> vector<16x512xf32>
    %110 = arith.addf %108, %109 : vector<16x512xf32>
    %111 = arith.addf %110, %10 : vector<16x512xf32>
    %112 = vector.extract_strided_slice %111 {offsets = [0, 0], sizes = [16, 32], strides = [1, 1]} : vector<16x512xf32> to vector<16x32xf32>
    %113 = arith.negf %112 : vector<16x32xf32>
    %114 = math.exp %113 : vector<16x32xf32>
    %cst_49 = arith.constant 1.000000e+00 : f32
    %115 = vector.broadcast %cst_49 : f32 to vector<16x32xf32>
    %116 = arith.addf %115, %114 : vector<16x32xf32>
    %117 = arith.divf %115, %116 : vector<16x32xf32>
    %118 = vector.extract_strided_slice %111 {offsets = [0, 128], sizes = [16, 32], strides = [1, 1]} : vector<16x512xf32> to vector<16x32xf32>
    %119 = arith.negf %118 : vector<16x32xf32>
    %120 = math.exp %119 : vector<16x32xf32>
    %cst_50 = arith.constant 1.000000e+00 : f32
    %121 = vector.broadcast %cst_50 : f32 to vector<16x32xf32>
    %122 = arith.addf %121, %120 : vector<16x32xf32>
    %123 = arith.divf %121, %122 : vector<16x32xf32>
    %124 = vector.extract_strided_slice %111 {offsets = [0, 256], sizes = [16, 32], strides = [1, 1]} : vector<16x512xf32> to vector<16x32xf32>
    %125 = math.tanh %124 : vector<16x32xf32>
    %126 = vector.extract_strided_slice %111 {offsets = [0, 384], sizes = [16, 32], strides = [1, 1]} : vector<16x512xf32> to vector<16x32xf32>
    %127 = arith.negf %126 : vector<16x32xf32>
    %128 = math.exp %127 : vector<16x32xf32>
    %cst_51 = arith.constant 1.000000e+00 : f32
    %129 = vector.broadcast %cst_51 : f32 to vector<16x32xf32>
    %130 = arith.addf %129, %128 : vector<16x32xf32>
    %131 = arith.divf %129, %130 : vector<16x32xf32>
    %132 = arith.mulf %123, %54 : vector<16x32xf32>
    %133 = arith.mulf %117, %125 : vector<16x32xf32>
    %134 = arith.addf %132, %133 : vector<16x32xf32>
    %135 = math.tanh %134 : vector<16x32xf32>
    %136 = arith.mulf %131, %135 : vector<16x32xf32>
    %137 = arith.truncf %136 : vector<16x32xf32> to vector<16x32xbf16>
    %cst_52 = arith.constant dense<0.000000e+00> : vector<16x512xf32>
    %138 = tpu.matmul %137, %5, %cst_52 {dimension_numbers = #tpu.dot_dimension_numbers<[1], [0], [0], [1], [0, 0, 1, 1], [], []>} : vector<16x32xbf16>, vector<32x512xbf16>, vector<16x512xf32> -> vector<16x512xf32>
    %cst_53 = arith.constant dense<0.000000e+00> : vector<16x512xf32>
    %139 = tpu.matmul %87, %7, %cst_53 {dimension_numbers = #tpu.dot_dimension_numbers<[1], [0], [0], [1], [0, 0, 1, 1], [], []>} : vector<16x32xbf16>, vector<32x512xbf16>, vector<16x512xf32> -> vector<16x512xf32>
    %140 = arith.addf %138, %139 : vector<16x512xf32>
    %141 = arith.addf %140, %13 : vector<16x512xf32>
    %142 = vector.extract_strided_slice %141 {offsets = [0, 0], sizes = [16, 32], strides = [1, 1]} : vector<16x512xf32> to vector<16x32xf32>
    %143 = arith.negf %142 : vector<16x32xf32>
    %144 = math.exp %143 : vector<16x32xf32>
    %cst_54 = arith.constant 1.000000e+00 : f32
    %145 = vector.broadcast %cst_54 : f32 to vector<16x32xf32>
    %146 = arith.addf %145, %144 : vector<16x32xf32>
    %147 = arith.divf %145, %146 : vector<16x32xf32>
    %148 = vector.extract_strided_slice %141 {offsets = [0, 128], sizes = [16, 32], strides = [1, 1]} : vector<16x512xf32> to vector<16x32xf32>
    %149 = arith.negf %148 : vector<16x32xf32>
    %150 = math.exp %149 : vector<16x32xf32>
    %cst_55 = arith.constant 1.000000e+00 : f32
    %151 = vector.broadcast %cst_55 : f32 to vector<16x32xf32>
    %152 = arith.addf %151, %150 : vector<16x32xf32>
    %153 = arith.divf %151, %152 : vector<16x32xf32>
    %154 = vector.extract_strided_slice %141 {offsets = [0, 256], sizes = [16, 32], strides = [1, 1]} : vector<16x512xf32> to vector<16x32xf32>
    %155 = math.tanh %154 : vector<16x32xf32>
    %156 = vector.extract_strided_slice %141 {offsets = [0, 384], sizes = [16, 32], strides = [1, 1]} : vector<16x512xf32> to vector<16x32xf32>
    %157 = arith.negf %156 : vector<16x32xf32>
    %158 = math.exp %157 : vector<16x32xf32>
    %cst_56 = arith.constant 1.000000e+00 : f32
    %159 = vector.broadcast %cst_56 : f32 to vector<16x32xf32>
    %160 = arith.addf %159, %158 : vector<16x32xf32>
    %161 = arith.divf %159, %160 : vector<16x32xf32>
    %162 = arith.mulf %153, %84 : vector<16x32xf32>
    %163 = arith.mulf %147, %155 : vector<16x32xf32>
    %164 = arith.addf %162, %163 : vector<16x32xf32>
    %165 = math.tanh %164 : vector<16x32xf32>
    %166 = arith.mulf %161, %165 : vector<16x32xf32>
    %167 = arith.truncf %166 : vector<16x32xf32> to vector<16x32xbf16>
    %cst_57 = arith.constant dense<0.000000e+00> : vector<16x128xf32>
    %168 = tpu.matmul %167, %14, %cst_57 {dimension_numbers = #tpu.dot_dimension_numbers<[1], [0], [0], [1], [0, 0, 1, 1], [], []>} : vector<16x32xbf16>, vector<32x128xbf16>, vector<16x128xf32> -> vector<16x128xf32>
    %169 = arith.addf %168, %17 : vector<16x128xf32>
    %c1_58 = arith.constant 1 : index
    %c0_59 = arith.constant 0 : index
    %c0_60 = arith.constant 0 : index
    %170 = vector.load %arg12[%c1_58, %c0_59, %c0_60] : memref<4x16x128xf32, #tpu.memory_space<vmem>>, vector<1x16x128xf32>
    %171 = vector.shape_cast %170 : vector<1x16x128xf32> to vector<16x128xf32>
    %172 = vector.shape_cast %169 : vector<16x128xf32> to vector<1x16x128xf32>
    tpu.vector_store %arg12[%c1_58, %c0_59, %c0_60], %172 {strides = array<i32>} : memref<4x16x128xf32, #tpu.memory_space<vmem>>, vector<1x16x128xf32>,
    %cst_61 = arith.constant dense<0xFF800000> : vector<16xf32>
    %173 = vector.multi_reduction <maximumf>, %169, %cst_61 [1] : vector<16x128xf32> to vector<16xf32>
    %174 = vector.shape_cast %173 : vector<16xf32> to vector<16x1xf32>
    %175 = vector.broadcast %174 : vector<16x1xf32> to vector<16x128xf32>
    %176 = arith.cmpf oge, %169, %175 : vector<16x128xf32>
    %c128_i32_62 = arith.constant 128 : i32
    %177 = vector.broadcast %c128_i32_62 : i32 to vector<16x128xi32>
    %178 = arith.select %176, %18, %177 : vector<16x128xi1>, vector<16x128xi32>
    %cst_63 = arith.constant dense<2147483647> : vector<16xi32>
    %179 = vector.multi_reduction <minsi>, %178, %cst_63 [1] : vector<16x128xi32> to vector<16xi32>
    %180 = vector.shape_cast %179 : vector<16xi32> to vector<16x1xi32>
    %181 = vector.broadcast %180 : vector<16x1xi32> to vector<16x128xi32>
    %182 = arith.cmpi eq, %178, %181 : vector<16x128xi32>
    %183 = arith.extui %182 : vector<16x128xi1> to vector<16x128xi32>
    %184 = arith.sitofp %183 : vector<16x128xi32> to vector<16x128xf32>
    %185 = arith.truncf %184 : vector<16x128xf32> to vector<16x128xbf16>
    %cst_64 = arith.constant dense<0.000000e+00> : vector<16x16xf32>
    %186 = tpu.matmul %185, %3, %cst_64 {dimension_numbers = #tpu.dot_dimension_numbers<[1], [0], [0], [1], [0, 0, 1, 1], [], []>} : vector<16x128xbf16>, vector<128x16xbf16>, vector<16x16xf32> -> vector<16x16xf32>
    %187 = arith.truncf %186 : vector<16x16xf32> to vector<16x16xbf16>
    %cst_65 = arith.constant dense<0.000000e+00> : vector<16x512xf32>
    %188 = tpu.matmul %187, %4, %cst_65 {dimension_numbers = #tpu.dot_dimension_numbers<[1], [0], [0], [1], [0, 0, 1, 1], [], []>} : vector<16x16xbf16>, vector<16x512xbf16>, vector<16x512xf32> -> vector<16x512xf32>
    %cst_66 = arith.constant dense<0.000000e+00> : vector<16x512xf32>
    %189 = tpu.matmul %137, %6, %cst_66 {dimension_numbers = #tpu.dot_dimension_numbers<[1], [0], [0], [1], [0, 0, 1, 1], [], []>} : vector<16x32xbf16>, vector<32x512xbf16>, vector<16x512xf32> -> vector<16x512xf32>
    %190 = arith.addf %188, %189 : vector<16x512xf32>
    %191 = arith.addf %190, %10 : vector<16x512xf32>
    %192 = vector.extract_strided_slice %191 {offsets = [0, 0], sizes = [16, 32], strides = [1, 1]} : vector<16x512xf32> to vector<16x32xf32>
    %193 = arith.negf %192 : vector<16x32xf32>
    %194 = math.exp %193 : vector<16x32xf32>
    %cst_67 = arith.constant 1.000000e+00 : f32
    %195 = vector.broadcast %cst_67 : f32 to vector<16x32xf32>
    %196 = arith.addf %195, %194 : vector<16x32xf32>
    %197 = arith.divf %195, %196 : vector<16x32xf32>
    %198 = vector.extract_strided_slice %191 {offsets = [0, 128], sizes = [16, 32], strides = [1, 1]} : vector<16x512xf32> to vector<16x32xf32>
    %199 = arith.negf %198 : vector<16x32xf32>
    %200 = math.exp %199 : vector<16x32xf32>
    %cst_68 = arith.constant 1.000000e+00 : f32
    %201 = vector.broadcast %cst_68 : f32 to vector<16x32xf32>
    %202 = arith.addf %201, %200 : vector<16x32xf32>
    %203 = arith.divf %201, %202 : vector<16x32xf32>
    %204 = vector.extract_strided_slice %191 {offsets = [0, 256], sizes = [16, 32], strides = [1, 1]} : vector<16x512xf32> to vector<16x32xf32>
    %205 = math.tanh %204 : vector<16x32xf32>
    %206 = vector.extract_strided_slice %191 {offsets = [0, 384], sizes = [16, 32], strides = [1, 1]} : vector<16x512xf32> to vector<16x32xf32>
    %207 = arith.negf %206 : vector<16x32xf32>
    %208 = math.exp %207 : vector<16x32xf32>
    %cst_69 = arith.constant 1.000000e+00 : f32
    %209 = vector.broadcast %cst_69 : f32 to vector<16x32xf32>
    %210 = arith.addf %209, %208 : vector<16x32xf32>
    %211 = arith.divf %209, %210 : vector<16x32xf32>
    %212 = arith.mulf %203, %134 : vector<16x32xf32>
    %213 = arith.mulf %197, %205 : vector<16x32xf32>
    %214 = arith.addf %212, %213 : vector<16x32xf32>
    %215 = math.tanh %214 : vector<16x32xf32>
    %216 = arith.mulf %211, %215 : vector<16x32xf32>
    %217 = arith.truncf %216 : vector<16x32xf32> to vector<16x32xbf16>
    %cst_70 = arith.constant dense<0.000000e+00> : vector<16x512xf32>
    %218 = tpu.matmul %217, %5, %cst_70 {dimension_numbers = #tpu.dot_dimension_numbers<[1], [0], [0], [1], [0, 0, 1, 1], [], []>} : vector<16x32xbf16>, vector<32x512xbf16>, vector<16x512xf32> -> vector<16x512xf32>
    %cst_71 = arith.constant dense<0.000000e+00> : vector<16x512xf32>
    %219 = tpu.matmul %167, %7, %cst_71 {dimension_numbers = #tpu.dot_dimension_numbers<[1], [0], [0], [1], [0, 0, 1, 1], [], []>} : vector<16x32xbf16>, vector<32x512xbf16>, vector<16x512xf32> -> vector<16x512xf32>
    %220 = arith.addf %218, %219 : vector<16x512xf32>
    %221 = arith.addf %220, %13 : vector<16x512xf32>
    %222 = vector.extract_strided_slice %221 {offsets = [0, 0], sizes = [16, 32], strides = [1, 1]} : vector<16x512xf32> to vector<16x32xf32>
    %223 = arith.negf %222 : vector<16x32xf32>
    %224 = math.exp %223 : vector<16x32xf32>
    %cst_72 = arith.constant 1.000000e+00 : f32
    %225 = vector.broadcast %cst_72 : f32 to vector<16x32xf32>
    %226 = arith.addf %225, %224 : vector<16x32xf32>
    %227 = arith.divf %225, %226 : vector<16x32xf32>
    %228 = vector.extract_strided_slice %221 {offsets = [0, 128], sizes = [16, 32], strides = [1, 1]} : vector<16x512xf32> to vector<16x32xf32>
    %229 = arith.negf %228 : vector<16x32xf32>
    %230 = math.exp %229 : vector<16x32xf32>
    %cst_73 = arith.constant 1.000000e+00 : f32
    %231 = vector.broadcast %cst_73 : f32 to vector<16x32xf32>
    %232 = arith.addf %231, %230 : vector<16x32xf32>
    %233 = arith.divf %231, %232 : vector<16x32xf32>
    %234 = vector.extract_strided_slice %221 {offsets = [0, 256], sizes = [16, 32], strides = [1, 1]} : vector<16x512xf32> to vector<16x32xf32>
    %235 = math.tanh %234 : vector<16x32xf32>
    %236 = vector.extract_strided_slice %221 {offsets = [0, 384], sizes = [16, 32], strides = [1, 1]} : vector<16x512xf32> to vector<16x32xf32>
    %237 = arith.negf %236 : vector<16x32xf32>
    %238 = math.exp %237 : vector<16x32xf32>
    %cst_74 = arith.constant 1.000000e+00 : f32
    %239 = vector.broadcast %cst_74 : f32 to vector<16x32xf32>
    %240 = arith.addf %239, %238 : vector<16x32xf32>
    %241 = arith.divf %239, %240 : vector<16x32xf32>
    %242 = arith.mulf %233, %164 : vector<16x32xf32>
    %243 = arith.mulf %227, %235 : vector<16x32xf32>
    %244 = arith.addf %242, %243 : vector<16x32xf32>
    %245 = math.tanh %244 : vector<16x32xf32>
    %246 = arith.mulf %241, %245 : vector<16x32xf32>
    %247 = arith.truncf %246 : vector<16x32xf32> to vector<16x32xbf16>
    %cst_75 = arith.constant dense<0.000000e+00> : vector<16x128xf32>
    %248 = tpu.matmul %247, %14, %cst_75 {dimension_numbers = #tpu.dot_dimension_numbers<[1], [0], [0], [1], [0, 0, 1, 1], [], []>} : vector<16x32xbf16>, vector<32x128xbf16>, vector<16x128xf32> -> vector<16x128xf32>
    %249 = arith.addf %248, %17 : vector<16x128xf32>
    %c2 = arith.constant 2 : index
    %c0_76 = arith.constant 0 : index
    %c0_77 = arith.constant 0 : index
    %250 = vector.load %arg12[%c2, %c0_76, %c0_77] : memref<4x16x128xf32, #tpu.memory_space<vmem>>, vector<1x16x128xf32>
    %251 = vector.shape_cast %250 : vector<1x16x128xf32> to vector<16x128xf32>
    %252 = vector.shape_cast %249 : vector<16x128xf32> to vector<1x16x128xf32>
    tpu.vector_store %arg12[%c2, %c0_76, %c0_77], %252 {strides = array<i32>} : memref<4x16x128xf32, #tpu.memory_space<vmem>>, vector<1x16x128xf32>,
    %cst_78 = arith.constant dense<0xFF800000> : vector<16xf32>
    %253 = vector.multi_reduction <maximumf>, %249, %cst_78 [1] : vector<16x128xf32> to vector<16xf32>
    %254 = vector.shape_cast %253 : vector<16xf32> to vector<16x1xf32>
    %255 = vector.broadcast %254 : vector<16x1xf32> to vector<16x128xf32>
    %256 = arith.cmpf oge, %249, %255 : vector<16x128xf32>
    %c128_i32_79 = arith.constant 128 : i32
    %257 = vector.broadcast %c128_i32_79 : i32 to vector<16x128xi32>
    %258 = arith.select %256, %18, %257 : vector<16x128xi1>, vector<16x128xi32>
    %cst_80 = arith.constant dense<2147483647> : vector<16xi32>
    %259 = vector.multi_reduction <minsi>, %258, %cst_80 [1] : vector<16x128xi32> to vector<16xi32>
    %260 = vector.shape_cast %259 : vector<16xi32> to vector<16x1xi32>
    %261 = vector.broadcast %260 : vector<16x1xi32> to vector<16x128xi32>
    %262 = arith.cmpi eq, %258, %261 : vector<16x128xi32>
    %263 = arith.extui %262 : vector<16x128xi1> to vector<16x128xi32>
    %264 = arith.sitofp %263 : vector<16x128xi32> to vector<16x128xf32>
    %265 = arith.truncf %264 : vector<16x128xf32> to vector<16x128xbf16>
    %cst_81 = arith.constant dense<0.000000e+00> : vector<16x16xf32>
    %266 = tpu.matmul %265, %3, %cst_81 {dimension_numbers = #tpu.dot_dimension_numbers<[1], [0], [0], [1], [0, 0, 1, 1], [], []>} : vector<16x128xbf16>, vector<128x16xbf16>, vector<16x16xf32> -> vector<16x16xf32>
    %267 = arith.truncf %266 : vector<16x16xf32> to vector<16x16xbf16>
    %cst_82 = arith.constant dense<0.000000e+00> : vector<16x512xf32>
    %268 = tpu.matmul %267, %4, %cst_82 {dimension_numbers = #tpu.dot_dimension_numbers<[1], [0], [0], [1], [0, 0, 1, 1], [], []>} : vector<16x16xbf16>, vector<16x512xbf16>, vector<16x512xf32> -> vector<16x512xf32>
    %cst_83 = arith.constant dense<0.000000e+00> : vector<16x512xf32>
    %269 = tpu.matmul %217, %6, %cst_83 {dimension_numbers = #tpu.dot_dimension_numbers<[1], [0], [0], [1], [0, 0, 1, 1], [], []>} : vector<16x32xbf16>, vector<32x512xbf16>, vector<16x512xf32> -> vector<16x512xf32>
    %270 = arith.addf %268, %269 : vector<16x512xf32>
    %271 = arith.addf %270, %10 : vector<16x512xf32>
    %272 = vector.extract_strided_slice %271 {offsets = [0, 0], sizes = [16, 32], strides = [1, 1]} : vector<16x512xf32> to vector<16x32xf32>
    %273 = arith.negf %272 : vector<16x32xf32>
    %274 = math.exp %273 : vector<16x32xf32>
    %cst_84 = arith.constant 1.000000e+00 : f32
    %275 = vector.broadcast %cst_84 : f32 to vector<16x32xf32>
    %276 = arith.addf %275, %274 : vector<16x32xf32>
    %277 = arith.divf %275, %276 : vector<16x32xf32>
    %278 = vector.extract_strided_slice %271 {offsets = [0, 128], sizes = [16, 32], strides = [1, 1]} : vector<16x512xf32> to vector<16x32xf32>
    %279 = arith.negf %278 : vector<16x32xf32>
    %280 = math.exp %279 : vector<16x32xf32>
    %cst_85 = arith.constant 1.000000e+00 : f32
    %281 = vector.broadcast %cst_85 : f32 to vector<16x32xf32>
    %282 = arith.addf %281, %280 : vector<16x32xf32>
    %283 = arith.divf %281, %282 : vector<16x32xf32>
    %284 = vector.extract_strided_slice %271 {offsets = [0, 256], sizes = [16, 32], strides = [1, 1]} : vector<16x512xf32> to vector<16x32xf32>
    %285 = math.tanh %284 : vector<16x32xf32>
    %286 = vector.extract_strided_slice %271 {offsets = [0, 384], sizes = [16, 32], strides = [1, 1]} : vector<16x512xf32> to vector<16x32xf32>
    %287 = arith.negf %286 : vector<16x32xf32>
    %288 = math.exp %287 : vector<16x32xf32>
    %cst_86 = arith.constant 1.000000e+00 : f32
    %289 = vector.broadcast %cst_86 : f32 to vector<16x32xf32>
    %290 = arith.addf %289, %288 : vector<16x32xf32>
    %291 = arith.divf %289, %290 : vector<16x32xf32>
    %292 = arith.mulf %283, %214 : vector<16x32xf32>
    %293 = arith.mulf %277, %285 : vector<16x32xf32>
    %294 = arith.addf %292, %293 : vector<16x32xf32>
    %295 = math.tanh %294 : vector<16x32xf32>
    %296 = arith.mulf %291, %295 : vector<16x32xf32>
    %297 = arith.truncf %296 : vector<16x32xf32> to vector<16x32xbf16>
    %cst_87 = arith.constant dense<0.000000e+00> : vector<16x512xf32>
    %298 = tpu.matmul %297, %5, %cst_87 {dimension_numbers = #tpu.dot_dimension_numbers<[1], [0], [0], [1], [0, 0, 1, 1], [], []>} : vector<16x32xbf16>, vector<32x512xbf16>, vector<16x512xf32> -> vector<16x512xf32>
    %cst_88 = arith.constant dense<0.000000e+00> : vector<16x512xf32>
    %299 = tpu.matmul %247, %7, %cst_88 {dimension_numbers = #tpu.dot_dimension_numbers<[1], [0], [0], [1], [0, 0, 1, 1], [], []>} : vector<16x32xbf16>, vector<32x512xbf16>, vector<16x512xf32> -> vector<16x512xf32>
    %300 = arith.addf %298, %299 : vector<16x512xf32>
    %301 = arith.addf %300, %13 : vector<16x512xf32>
    %302 = vector.extract_strided_slice %301 {offsets = [0, 0], sizes = [16, 32], strides = [1, 1]} : vector<16x512xf32> to vector<16x32xf32>
    %303 = arith.negf %302 : vector<16x32xf32>
    %304 = math.exp %303 : vector<16x32xf32>
    %cst_89 = arith.constant 1.000000e+00 : f32
    %305 = vector.broadcast %cst_89 : f32 to vector<16x32xf32>
    %306 = arith.addf %305, %304 : vector<16x32xf32>
    %307 = arith.divf %305, %306 : vector<16x32xf32>
    %308 = vector.extract_strided_slice %301 {offsets = [0, 128], sizes = [16, 32], strides = [1, 1]} : vector<16x512xf32> to vector<16x32xf32>
    %309 = arith.negf %308 : vector<16x32xf32>
    %310 = math.exp %309 : vector<16x32xf32>
    %cst_90 = arith.constant 1.000000e+00 : f32
    %311 = vector.broadcast %cst_90 : f32 to vector<16x32xf32>
    %312 = arith.addf %311, %310 : vector<16x32xf32>
    %313 = arith.divf %311, %312 : vector<16x32xf32>
    %314 = vector.extract_strided_slice %301 {offsets = [0, 256], sizes = [16, 32], strides = [1, 1]} : vector<16x512xf32> to vector<16x32xf32>
    %315 = math.tanh %314 : vector<16x32xf32>
    %316 = vector.extract_strided_slice %301 {offsets = [0, 384], sizes = [16, 32], strides = [1, 1]} : vector<16x512xf32> to vector<16x32xf32>
    %317 = arith.negf %316 : vector<16x32xf32>
    %318 = math.exp %317 : vector<16x32xf32>
    %cst_91 = arith.constant 1.000000e+00 : f32
    %319 = vector.broadcast %cst_91 : f32 to vector<16x32xf32>
    %320 = arith.addf %319, %318 : vector<16x32xf32>
    %321 = arith.divf %319, %320 : vector<16x32xf32>
    %322 = arith.mulf %313, %244 : vector<16x32xf32>
    %323 = arith.mulf %307, %315 : vector<16x32xf32>
    %324 = arith.addf %322, %323 : vector<16x32xf32>
    %325 = math.tanh %324 : vector<16x32xf32>
    %326 = arith.mulf %321, %325 : vector<16x32xf32>
    %327 = arith.truncf %326 : vector<16x32xf32> to vector<16x32xbf16>
    %cst_92 = arith.constant dense<0.000000e+00> : vector<16x128xf32>
    %328 = tpu.matmul %327, %14, %cst_92 {dimension_numbers = #tpu.dot_dimension_numbers<[1], [0], [0], [1], [0, 0, 1, 1], [], []>} : vector<16x32xbf16>, vector<32x128xbf16>, vector<16x128xf32> -> vector<16x128xf32>
    %329 = arith.addf %328, %17 : vector<16x128xf32>
    %c3 = arith.constant 3 : index
    %c0_93 = arith.constant 0 : index
    %c0_94 = arith.constant 0 : index
    %330 = vector.load %arg12[%c3, %c0_93, %c0_94] : memref<4x16x128xf32, #tpu.memory_space<vmem>>, vector<1x16x128xf32>
    %331 = vector.shape_cast %330 : vector<1x16x128xf32> to vector<16x128xf32>
    %332 = vector.shape_cast %329 : vector<16x128xf32> to vector<1x16x128xf32>
    tpu.vector_store %arg12[%c3, %c0_93, %c0_94], %332 {strides = array<i32>} : memref<4x16x128xf32, #tpu.memory_space<vmem>>, vector<1x16x128xf32>,
    %cst_95 = arith.constant dense<0xFF800000> : vector<16xf32>
    %333 = vector.multi_reduction <maximumf>, %329, %cst_95 [1] : vector<16x128xf32> to vector<16xf32>
    %334 = vector.shape_cast %333 : vector<16xf32> to vector<16x1xf32>
    %335 = vector.broadcast %334 : vector<16x1xf32> to vector<16x128xf32>
    %336 = arith.cmpf oge, %329, %335 : vector<16x128xf32>
    %c128_i32_96 = arith.constant 128 : i32
    %337 = vector.broadcast %c128_i32_96 : i32 to vector<16x128xi32>
    %338 = arith.select %336, %18, %337 : vector<16x128xi1>, vector<16x128xi32>
    %cst_97 = arith.constant dense<2147483647> : vector<16xi32>
    %339 = vector.multi_reduction <minsi>, %338, %cst_97 [1] : vector<16x128xi32> to vector<16xi32>
    %340 = vector.shape_cast %339 : vector<16xi32> to vector<16x1xi32>
    %341 = vector.broadcast %340 : vector<16x1xi32> to vector<16x128xi32>
    %342 = arith.cmpi eq, %338, %341 : vector<16x128xi32>
    %343 = arith.extui %342 : vector<16x128xi1> to vector<16x128xi32>
    %344 = arith.sitofp %343 : vector<16x128xi32> to vector<16x128xf32>
    %345 = arith.truncf %344 : vector<16x128xf32> to vector<16x128xbf16>
    %cst_98 = arith.constant dense<0.000000e+00> : vector<16x16xf32>
    %346 = tpu.matmul %345, %3, %cst_98 {dimension_numbers = #tpu.dot_dimension_numbers<[1], [0], [0], [1], [0, 0, 1, 1], [], []>} : vector<16x128xbf16>, vector<128x16xbf16>, vector<16x16xf32> -> vector<16x16xf32>
    %347 = arith.truncf %346 : vector<16x16xf32> to vector<16x16xbf16>
    %c0_99 = arith.constant 0 : index
    %c0_100 = arith.constant 0 : index
    %c0_101 = arith.constant 0 : index
    %348 = vector.load %arg13[%c0_99, %c0_100, %c0_101] : memref<2x16x32xbf16, #tpu.memory_space<vmem>>, vector<1x16x32xbf16>
    %349 = vector.shape_cast %348 : vector<1x16x32xbf16> to vector<16x32xbf16>
    %350 = vector.shape_cast %297 : vector<16x32xbf16> to vector<1x16x32xbf16>
    tpu.vector_store %arg13[%c0_99, %c0_100, %c0_101], %350 {strides = array<i32>} : memref<2x16x32xbf16, #tpu.memory_space<vmem>>, vector<1x16x32xbf16>,
    %c0_102 = arith.constant 0 : index
    %c0_103 = arith.constant 0 : index
    %c0_104 = arith.constant 0 : index
    %351 = vector.load %arg14[%c0_102, %c0_103, %c0_104] : memref<2x16x32xf32, #tpu.memory_space<vmem>>, vector<1x16x32xf32>
    %352 = vector.shape_cast %351 : vector<1x16x32xf32> to vector<16x32xf32>
    %353 = vector.shape_cast %294 : vector<16x32xf32> to vector<1x16x32xf32>
    tpu.vector_store %arg14[%c0_102, %c0_103, %c0_104], %353 {strides = array<i32>} : memref<2x16x32xf32, #tpu.memory_space<vmem>>, vector<1x16x32xf32>,
    %c1_105 = arith.constant 1 : index
    %c0_106 = arith.constant 0 : index
    %c0_107 = arith.constant 0 : index
    %354 = vector.load %arg13[%c1_105, %c0_106, %c0_107] : memref<2x16x32xbf16, #tpu.memory_space<vmem>>, vector<1x16x32xbf16>
    %355 = vector.shape_cast %354 : vector<1x16x32xbf16> to vector<16x32xbf16>
    %356 = vector.shape_cast %327 : vector<16x32xbf16> to vector<1x16x32xbf16>
    tpu.vector_store %arg13[%c1_105, %c0_106, %c0_107], %356 {strides = array<i32>} : memref<2x16x32xbf16, #tpu.memory_space<vmem>>, vector<1x16x32xbf16>,
    %c1_108 = arith.constant 1 : index
    %c0_109 = arith.constant 0 : index
    %c0_110 = arith.constant 0 : index
    %357 = vector.load %arg14[%c1_108, %c0_109, %c0_110] : memref<2x16x32xf32, #tpu.memory_space<vmem>>, vector<1x16x32xf32>
    %358 = vector.shape_cast %357 : vector<1x16x32xf32> to vector<16x32xf32>
    %359 = vector.shape_cast %324 : vector<16x32xf32> to vector<1x16x32xf32>
    tpu.vector_store %arg14[%c1_108, %c0_109, %c0_110], %359 {strides = array<i32>} : memref<2x16x32xf32, #tpu.memory_space<vmem>>, vector<1x16x32xf32>,
    %c0_111 = arith.constant 0 : index
    %c0_112 = arith.constant 0 : index
    %360 = vector.load %arg15[%c0_111, %c0_112] : memref<16x16xbf16, #tpu.memory_space<vmem>>, vector<16x16xbf16>
    tpu.vector_store %arg15[%c0_111, %c0_112], %347 {strides = array<i32>} : memref<16x16xbf16, #tpu.memory_space<vmem>>, vector<16x16xbf16>,
    return
  }
  func.func @transform_0(%arg0: i32, %arg1: i32) -> (i32, i32) {
    %c0_i32 = arith.constant 0 : i32
    %c0_i32_0 = arith.constant 0 : i32
    return %arg0, %c0_i32 : i32, i32
  }
  func.func @transform_1(%arg0: i32, %arg1: i32) -> (i32, i32) {
    %c0_i32 = arith.constant 0 : i32
    %c0_i32_0 = arith.constant 0 : i32
    %c0_i32_1 = arith.constant 0 : i32
    return %c0_i32, %c0_i32_0 : i32, i32
  }
  func.func @transform_2(%arg0: i32, %arg1: i32) -> (i32, i32) {
    %c0_i32 = arith.constant 0 : i32
    %c0_i32_0 = arith.constant 0 : i32
    %c0_i32_1 = arith.constant 0 : i32
    return %c0_i32, %c0_i32_0 : i32, i32
  }
  func.func @transform_3(%arg0: i32, %arg1: i32) -> (i32, i32) {
    %c0_i32 = arith.constant 0 : i32
    %c0_i32_0 = arith.constant 0 : i32
    %c0_i32_1 = arith.constant 0 : i32
    return %c0_i32, %c0_i32_0 : i32, i32
  }
  func.func @transform_4(%arg0: i32, %arg1: i32) -> (i32, i32) {
    %c0_i32 = arith.constant 0 : i32
    %c0_i32_0 = arith.constant 0 : i32
    %c0_i32_1 = arith.constant 0 : i32
    return %c0_i32, %c0_i32_0 : i32, i32
  }
  func.func @transform_5(%arg0: i32, %arg1: i32) -> (i32, i32) {
    %c0_i32 = arith.constant 0 : i32
    %c0_i32_0 = arith.constant 0 : i32
    %c0_i32_1 = arith.constant 0 : i32
    return %c0_i32, %c0_i32_0 : i32, i32
  }
  func.func @transform_6(%arg0: i32, %arg1: i32) -> (i32, i32) {
    %c0_i32 = arith.constant 0 : i32
    %c0_i32_0 = arith.constant 0 : i32
    %c0_i32_1 = arith.constant 0 : i32
    return %c0_i32, %c0_i32_0 : i32, i32
  }
  func.func @transform_7(%arg0: i32, %arg1: i32) -> (i32, i32) {
    %c0_i32 = arith.constant 0 : i32
    %c0_i32_0 = arith.constant 0 : i32
    %c0_i32_1 = arith.constant 0 : i32
    return %c0_i32, %c0_i32_0 : i32, i32
  }
  func.func @transform_8(%arg0: i32, %arg1: i32) -> (i32, i32) {
    %c0_i32 = arith.constant 0 : i32
    %c0_i32_0 = arith.constant 0 : i32
    %c0_i32_1 = arith.constant 0 : i32
    return %c0_i32, %c0_i32_0 : i32, i32
  }
  func.func @transform_9(%arg0: i32, %arg1: i32) -> (i32, i32) {
    %c0_i32 = arith.constant 0 : i32
    %c0_i32_0 = arith.constant 0 : i32
    %c0_i32_1 = arith.constant 0 : i32
    return %c0_i32, %c0_i32_0 : i32, i32
  }
  func.func @transform_10(%arg0: i32, %arg1: i32) -> (i32, i32, i32) {
    %c0_i32 = arith.constant 0 : i32
    %c0_i32_0 = arith.constant 0 : i32
    return %arg1, %arg0, %c0_i32 : i32, i32, i32
  }
}

</mosaic_0001>

<llo_original>
// kernel: tpu_custom_call.1
$region0: #{tpu_custom_call.1}
  #allocation0 [shape = 'u32[]', space=smem, size = 0x4, offset = 0x4, fixed_abs, tag = 'smem constant byte address 0x4 - core index']
  #allocation1 [shape = 'u32[144,128]{1,0:T(1,128)}', space=vmem, size = 0x12000, scoped, tag = 'internal scratch']
  #allocation2 [shape = 'bf16[2,16,32]{2,1,0:T(16,128)(2,1)}', space=vmem, size = 0x2000, scoped, tag = 'scratch operand']
  #allocation3 [shape = 'f32[2,16,32]{2,1,0:T(8,128)}', space=vmem, size = 0x4000, scoped, tag = 'scratch operand']
  #allocation4 [shape = 'bf16[16,16]{1,0:T(16,128)(2,1)}', space=vmem, size = 0x1000, scoped, tag = 'scratch operand']
  %s0 = inlined_call_operand.vmem [shape: f32[16,32], index: 0, kind: input, shape index: {}]
  %s1 = inlined_call_operand.vmem [shape: bf16[128,16], index: 1, kind: input, shape index: {}]
  %s2 = inlined_call_operand.hbm [shape: bf16[16,512], index: 2, kind: input, shape index: {}]
  %s3 = inlined_call_operand.vmem [shape: bf16[32,512], index: 3, kind: input, shape index: {}]
  %s4 = inlined_call_operand.hbm [shape: f32[1,512], index: 4, kind: input, shape index: {}]
  %s5 = inlined_call_operand.hbm [shape: bf16[32,512], index: 5, kind: input, shape index: {}]
  %s6 = inlined_call_operand.hbm [shape: bf16[32,512], index: 6, kind: input, shape index: {}]
  %s7 = inlined_call_operand.hbm [shape: f32[1,512], index: 7, kind: input, shape index: {}]
  %s8 = inlined_call_operand.vmem [shape: bf16[32,128], index: 8, kind: input, shape index: {}]
  %s9 = inlined_call_operand.vmem [shape: f32[1,128], index: 9, kind: input, shape index: {}]
  %s10 = inlined_call_operand.hbm [shape: f32[8,16,128], index: 10, kind: output, shape index: {}]
  %s11 = sld [smem:[#allocation0]]
  $region97: #{tpu_custom_call.1} parent=0
    _
  %s13 = ssub.s32 1, %s11
  %s14 = scalar_select 0, %s13, %s11
  $region1: #{tpu_custom_call.1} parent=0
    #allocation5 [shape = 'u8[16384]{0}', space=vmem, size = 0x4000, scoped, tag = 'input window, operand 2, single buffered']
    #allocation6 [shape = 's32[2]{0}', space=sflag, size = 0x8, scoped, tag = 'scoped memory for tpu_custom_call.1']
    #allocation7 [shape = 's32[2]{0}', space=sflag, size = 0x8, scoped, tag = 'scoped memory for tpu_custom_call.1']
    #allocation8 [shape = 'u8[2048]{0}', space=vmem, size = 0x800, scoped, tag = 'input window, operand 4, single buffered']
    #allocation9 [shape = 's32[1]{0}', space=sflag, size = 0x4, scoped, tag = 'scoped memory for tpu_custom_call.1']
    #allocation10 [shape = 'u8[32768]{0}', space=vmem, size = 0x8000, scoped, tag = 'input window, operand 5, single buffered']
    #allocation11 [shape = 'u8[32768]{0}', space=vmem, size = 0x8000, scoped, tag = 'input window, operand 6, single buffered']
    #allocation12 [shape = 's32[1]{0}', space=sflag, size = 0x4, scoped, tag = 'scoped memory for tpu_custom_call.1']
    #allocation13 [shape = 'u8[2048]{0}', space=vmem, size = 0x800, scoped, tag = 'input window, operand 7, single buffered']
    #allocation14 [shape = 'u8[65536]{0}', space=vmem, size = 0x10000, scoped, tag = 'output window, operand 0']
    %15 = vsyncpa [#allocation6], 0
    %16 = vsyncpa [#allocation9], 0
    %17 = vsyncpa [#allocation12], 0
    %18 = vsyncpa [#allocation7], 0
    %s19 = scalar_lea.sflag [#allocation7], 1
    %20 = vsyncpa %s19, 0
    loop: start=0, step=1, limit=4
    $region2: #{tpu_custom_call.1} parent=1 // loop_pre_header
      _
    $region3: #{tpu_custom_call.1} parent=1 // loop_header
      %s22 = sphi 0, %s26
      %p23 = scmp.ge.s32.totalorder %s22, 4
      %s29 = sphi 0, %s41
      %s30 = sphi 0, %s37
      %s31 = sphi 0, %s29
      %s32 = sphi 0, %s30
      %s33 = sphi 0, %s31
      %s34 = sphi 0, %s32
      %s44 = sphi 0, %s46
      %s47 = sphi 0, %s44
      %s48 = sphi 0, %s47
      %s64 = sphi 0, %s48
      %s68 = sphi 0, %s68
      %s70 = sphi 0, %s68
      %s71 = sphi 0, %s70
      %s85 = sphi 0, %s71
      %s89 = sphi 0, %s89
      %s91 = sphi 0, %s89
      %s92 = sphi 0, %s91
      %s106 = sphi 0, %s92
      %s110 = sphi 0, %s110
      %s112 = sphi 0, %s110
      %s113 = sphi 0, %s112
      %s127 = sphi 0, %s113
      %s131 = sphi 0, %s131
      %s133 = sphi 0, %s131
      %s134 = sphi 0, %s133
      %s148 = sphi 0, %s134
      %s152 = sphi 0, %s152
      %s154 = sphi 0, %s152
      %s155 = sphi 0, %s154
      %s169 = sphi 0, %s155
      %s173 = sphi 0, %s173
      %s175 = sphi 0, %s173
      %s176 = sphi 0, %s175
      %s190 = sphi 0, %s176
      %s194 = sphi 0, %s194
      %s196 = sphi 0, %s194
      %s197 = sphi 0, %s196
      %s211 = sphi 0, %s197
      %s215 = sphi 0, %s215
      %s217 = sphi 0, %s215
      %s218 = sphi 0, %s217
      %s232 = sphi 0, %s218
      %s236 = sphi 0, %s236
      %s238 = sphi 0, %s236
      %s239 = sphi 0, %s238
      %s253 = sphi 0, %s239
      %s261 = sphi 0, %s263
      %s264 = sphi 0, %s261
      %s265 = sphi 0, %s264
      %s281 = sphi 0, %s265
    $region4: #{tpu_custom_call.1} parent=1 // loop_header_branch
      %25 = sbr.rel (%p23) target = $region8
    $region5: #{tpu_custom_call.1} parent=1 // loop_body
      %s27 = ssub.s32 %s22, 1
      %s28 = ssub.s32 %s22, 2
      %s35 = sadd.s32 1, %s30
      %p36 = scmp.ge.s32.totalorder %s35, 2
      %s37 = scalar_select %p36, 0, %s35
      %s38 = sadd.s32 1, %s29
      %s39 = scalar_select %p36, %s38, %s29
      %p40 = scmp.ge.s32.totalorder %s39, 1
      %s41 = scalar_select %p40, 0, %s39
      %s42 = ssub.s32 %s29, %s41
      %p43 = scmp.eq.s32.totalorder %s42, 0
      %s45 = sadd.s32 %s44, 1
      %s46 = scalar_select %p43, %s44, %s45
      %p49 = pneg %p43
      %p50 = scmp.eq.s32.totalorder %s22, 1
      %p51 = por %p49, %p50
      %p52 = scmp.ne.s32.totalorder %s44, %s47
      %p53 = scmp.eq.s32.totalorder %s22, 0
      %p54 = por %p52, %p53
      %p55 = scmp.ne.s32.totalorder %s44, %s47
      %p56 = scmp.eq.s32.totalorder %s27, 1
      %p57 = por %p55, %p56
      %p58 = scmp.ne.s32.totalorder %s47, %s48
      %p59 = scmp.eq.s32.totalorder %s27, 0
      %p60 = por %p58, %p59
      %p61 = scmp.ne.s32.totalorder %s47, %s48
      %p62 = scmp.eq.s32.totalorder %s28, 1
      %p63 = por %p61, %p62
      %p65 = scmp.ne.s32.totalorder %s48, %s64
      %p66 = scmp.eq.s32.totalorder %s28, 0
      %p67 = por %p65, %p66
      %s69 = sadd.s32 %s68, 1
      %p72 = scmp.eq.s32.totalorder %s22, 1
      %p73 = scmp.ne.s32.totalorder %s68, %s70
      %p74 = scmp.eq.s32.totalorder %s22, 0
      %p75 = por %p73, %p74
      %p76 = scmp.ne.s32.totalorder %s68, %s70
      %p77 = scmp.eq.s32.totalorder %s27, 1
      %p78 = por %p76, %p77
      %p79 = scmp.ne.s32.totalorder %s70, %s71
      %p80 = scmp.eq.s32.totalorder %s27, 0
      %p81 = por %p79, %p80
      %p82 = scmp.ne.s32.totalorder %s70, %s71
      %p83 = scmp.eq.s32.totalorder %s28, 1
      %p84 = por %p82, %p83
      %p86 = scmp.ne.s32.totalorder %s71, %s85
      %p87 = scmp.eq.s32.totalorder %s28, 0
      %p88 = por %p86, %p87
      %s90 = sadd.s32 %s89, 1
      %p93 = scmp.eq.s32.totalorder %s22, 1
      %p94 = scmp.ne.s32.totalorder %s89, %s91
      %p95 = scmp.eq.s32.totalorder %s22, 0
      %p96 = por %p94, %p95
      %p97 = scmp.ne.s32.totalorder %s89, %s91
      %p98 = scmp.eq.s32.totalorder %s27, 1
      %p99 = por %p97, %p98
      %p100 = scmp.ne.s32.totalorder %s91, %s92
      %p101 = scmp.eq.s32.totalorder %s27, 0
      %p102 = por %p100, %p101
      %p103 = scmp.ne.s32.totalorder %s91, %s92
      %p104 = scmp.eq.s32.totalorder %s28, 1
      %p105 = por %p103, %p104
      %p107 = scmp.ne.s32.totalorder %s92, %s106
      %p108 = scmp.eq.s32.totalorder %s28, 0
      %p109 = por %p107, %p108
      %s111 = sadd.s32 %s110, 1
      %p114 = scmp.eq.s32.totalorder %s22, 1
      %p115 = scmp.ne.s32.totalorder %s110, %s112
      %p116 = scmp.eq.s32.totalorder %s22, 0
      %p117 = por %p115, %p116
      %p118 = scmp.ne.s32.totalorder %s110, %s112
      %p119 = scmp.eq.s32.totalorder %s27, 1
      %p120 = por %p118, %p119
      %p121 = scmp.ne.s32.totalorder %s112, %s113
      %p122 = scmp.eq.s32.totalorder %s27, 0
      %p123 = por %p121, %p122
      %p124 = scmp.ne.s32.totalorder %s112, %s113
      %p125 = scmp.eq.s32.totalorder %s28, 1
      %p126 = por %p124, %p125
      %p128 = scmp.ne.s32.totalorder %s113, %s127
      %p129 = scmp.eq.s32.totalorder %s28, 0
      %p130 = por %p128, %p129
      %s132 = sadd.s32 %s131, 1
      %p135 = scmp.eq.s32.totalorder %s22, 1
      %p136 = scmp.ne.s32.totalorder %s131, %s133
      %p137 = scmp.eq.s32.totalorder %s22, 0
      %p138 = por %p136, %p137
      %p139 = scmp.ne.s32.totalorder %s131, %s133
      %p140 = scmp.eq.s32.totalorder %s27, 1
      %p141 = por %p139, %p140
      %p142 = scmp.ne.s32.totalorder %s133, %s134
      %p143 = scmp.eq.s32.totalorder %s27, 0
      %p144 = por %p142, %p143
      %p145 = scmp.ne.s32.totalorder %s133, %s134
      %p146 = scmp.eq.s32.totalorder %s28, 1
      %p147 = por %p145, %p146
      %p149 = scmp.ne.s32.totalorder %s134, %s148
      %p150 = scmp.eq.s32.totalorder %s28, 0
      %p151 = por %p149, %p150
      %s153 = sadd.s32 %s152, 1
      %p156 = scmp.eq.s32.totalorder %s22, 1
      %p157 = scmp.ne.s32.totalorder %s152, %s154
      %p158 = scmp.eq.s32.totalorder %s22, 0
      %p159 = por %p157, %p158
      %p160 = scmp.ne.s32.totalorder %s152, %s154
      %p161 = scmp.eq.s32.totalorder %s27, 1
      %p162 = por %p160, %p161
      %p163 = scmp.ne.s32.totalorder %s154, %s155
      %p164 = scmp.eq.s32.totalorder %s27, 0
      %p165 = por %p163, %p164
      %p166 = scmp.ne.s32.totalorder %s154, %s155
      %p167 = scmp.eq.s32.totalorder %s28, 1
      %p168 = por %p166, %p167
      %p170 = scmp.ne.s32.totalorder %s155, %s169
      %p171 = scmp.eq.s32.totalorder %s28, 0
      %p172 = por %p170, %p171
      %s174 = sadd.s32 %s173, 1
      %p177 = scmp.eq.s32.totalorder %s22, 1
      %p178 = scmp.ne.s32.totalorder %s173, %s175
      %p179 = scmp.eq.s32.totalorder %s22, 0
      %p180 = por %p178, %p179
      %p181 = scmp.ne.s32.totalorder %s173, %s175
      %p182 = scmp.eq.s32.totalorder %s27, 1
      %p183 = por %p181, %p182
      %p184 = scmp.ne.s32.totalorder %s175, %s176
      %p185 = scmp.eq.s32.totalorder %s27, 0
      %p186 = por %p184, %p185
      %p187 = scmp.ne.s32.totalorder %s175, %s176
      %p188 = scmp.eq.s32.totalorder %s28, 1
      %p189 = por %p187, %p188
      %p191 = scmp.ne.s32.totalorder %s176, %s190
      %p192 = scmp.eq.s32.totalorder %s28, 0
      %p193 = por %p191, %p192
      %s195 = sadd.s32 %s194, 1
      %p198 = scmp.eq.s32.totalorder %s22, 1
      %p199 = scmp.ne.s32.totalorder %s194, %s196
      %p200 = scmp.eq.s32.totalorder %s22, 0
      %p201 = por %p199, %p200
      %p202 = scmp.ne.s32.totalorder %s194, %s196
      %p203 = scmp.eq.s32.totalorder %s27, 1
      %p204 = por %p202, %p203
      %p205 = scmp.ne.s32.totalorder %s196, %s197
      %p206 = scmp.eq.s32.totalorder %s27, 0
      %p207 = por %p205, %p206
      %p208 = scmp.ne.s32.totalorder %s196, %s197
      %p209 = scmp.eq.s32.totalorder %s28, 1
      %p210 = por %p208, %p209
      %p212 = scmp.ne.s32.totalorder %s197, %s211
      %p213 = scmp.eq.s32.totalorder %s28, 0
      %p214 = por %p212, %p213
      %s216 = sadd.s32 %s215, 1
      %p219 = scmp.eq.s32.totalorder %s22, 1
      %p220 = scmp.ne.s32.totalorder %s215, %s217
      %p221 = scmp.eq.s32.totalorder %s22, 0
      %p222 = por %p220, %p221
      %p223 = scmp.ne.s32.totalorder %s215, %s217
      %p224 = scmp.eq.s32.totalorder %s27, 1
      %p225 = por %p223, %p224
      %p226 = scmp.ne.s32.totalorder %s217, %s218
      %p227 = scmp.eq.s32.totalorder %s27, 0
      %p228 = por %p226, %p227
      %p229 = scmp.ne.s32.totalorder %s217, %s218
      %p230 = scmp.eq.s32.totalorder %s28, 1
      %p231 = por %p229, %p230
      %p233 = scmp.ne.s32.totalorder %s218, %s232
      %p234 = scmp.eq.s32.totalorder %s28, 0
      %p235 = por %p233, %p234
      %s237 = sadd.s32 %s236, 1
      %p240 = scmp.eq.s32.totalorder %s22, 1
      %p241 = scmp.ne.s32.totalorder %s236, %s238
      %p242 = scmp.eq.s32.totalorder %s22, 0
      %p243 = por %p241, %p242
      %p244 = scmp.ne.s32.totalorder %s236, %s238
      %p245 = scmp.eq.s32.totalorder %s27, 1
      %p246 = por %p244, %p245
      %p247 = scmp.ne.s32.totalorder %s238, %s239
      %p248 = scmp.eq.s32.totalorder %s27, 0
      %p249 = por %p247, %p248
      %p250 = scmp.ne.s32.totalorder %s238, %s239
      %p251 = scmp.eq.s32.totalorder %s28, 1
      %p252 = por %p250, %p251
      %p254 = scmp.ne.s32.totalorder %s239, %s253
      %p255 = scmp.eq.s32.totalorder %s28, 0
      %p256 = por %p254, %p255
      %s257 = ssub.s32 %s30, %s37
      %s258 = ssub.s32 %s29, %s41
      %s259 = sor.u32 %s257, %s258
      %p260 = scmp.eq.s32.totalorder %s259, 0
      %s262 = sadd.s32 %s261, 1
      %s263 = scalar_select %p260, %s261, %s262
      %p266 = pneg %p260
      %p267 = scmp.eq.s32.totalorder %s22, 1
      %p268 = por %p266, %p267
      %p269 = scmp.ne.s32.totalorder %s261, %s264
      %p270 = scmp.eq.s32.totalorder %s22, 0
      %p271 = por %p269, %p270
      %p272 = scmp.ne.s32.totalorder %s261, %s264
      %p273 = scmp.eq.s32.totalorder %s27, 1
      %p274 = por %p272, %p273
      %p275 = scmp.ne.s32.totalorder %s264, %s265
      %p276 = scmp.eq.s32.totalorder %s27, 0
      %p277 = por %p275, %p276
      %p278 = scmp.ne.s32.totalorder %s264, %s265
      %p279 = scmp.eq.s32.totalorder %s28, 1
      %p280 = por %p278, %p279
      %p282 = scmp.ne.s32.totalorder %s265, %s281
      %p283 = scmp.eq.s32.totalorder %s28, 0
      %p284 = por %p282, %p283
      %p285 = scmp.le.s32.totalorder 1, %s22
      %p286 = scmp.lt.s32.totalorder %s22, 3
      %p287 = pnand %p285, %p286
      %p288 = pneg %p287
      // Predicated region
      $region9: #{tpu_custom_call.1} parent=5 // pred_check
        _
      $region10: #{tpu_custom_call.1} parent=5 // pred_check_branch
        %290 = sbr.rel (%p287) target = $region12
      $region11: #{tpu_custom_call.1} parent=5 // pred_region
        %s291 = ssub.s32 %s22, 1
        // Predicated region
        $region13: #{tpu_custom_call.1} parent=11 // pred_check
          %p292 = pneg %p60
        $region14: #{tpu_custom_call.1} parent=11 // pred_check_branch
          %294 = sbr.rel (%p292) target = $region16
        $region15: #{tpu_custom_call.1} parent=11 // pred_region
          %s295 = smul.u32 2, %s31
          %p296 = scmp.lt.s32.totalorder %s295, 1
          %s297 = scalar_select %p296, %s295, 1
          %s298 = smul.addr %s297, 8
          %s299 = scalar_lea.vmem %s0, %s298
          %s300 = smul.u32 2, %s31
        $region16: #{tpu_custom_call.1} parent=11 // pred_fallthru
          _
        // Predicated region
        $region17: #{tpu_custom_call.1} parent=11 // pred_check
          %p301 = pneg %p81
        $region18: #{tpu_custom_call.1} parent=11 // pred_check_branch
          %303 = sbr.rel (%p301) target = $region20
        $region19: #{tpu_custom_call.1} parent=11 // pred_region
          _
        $region20: #{tpu_custom_call.1} parent=11 // pred_fallthru
          _
        // Predicated region
        $region21: #{tpu_custom_call.1} parent=11 // pred_check
          %p304 = pneg %p102
        $region22: #{tpu_custom_call.1} parent=11 // pred_check_branch
          %306 = sbr.rel (%p304) target = $region24
        $region23: #{tpu_custom_call.1} parent=11 // pred_region
          %s308 = ssub.s32 512, 512
          %309 = vsyncadd [#allocation6], %s308
          %s310 = sshll.u32 [#allocation5], 4
          %s311 = int_to_ptr.vmem [resolvable:$true] %s310
          %316 = dma.hbm_to_vmem [thread:$0]  %s2, 512, %s311, [#allocation6], 256, 256, 16
        $region24: #{tpu_custom_call.1} parent=11 // pred_fallthru
          _
        // Predicated region
        $region25: #{tpu_custom_call.1} parent=11 // pred_check
          %p317 = pneg %p123
        $region26: #{tpu_custom_call.1} parent=11 // pred_check_branch
          %319 = sbr.rel (%p317) target = $region28
        $region27: #{tpu_custom_call.1} parent=11 // pred_region
          _
        $region28: #{tpu_custom_call.1} parent=11 // pred_fallthru
          _
        // Predicated region
        $region29: #{tpu_custom_call.1} parent=11 // pred_check
          %p320 = pneg %p144
        $region30: #{tpu_custom_call.1} parent=11 // pred_check_branch
          %322 = sbr.rel (%p320) target = $region32
        $region31: #{tpu_custom_call.1} parent=11 // pred_region
          %s324 = ssub.s32 64, 64
          %325 = vsyncadd [#allocation9], %s324
          %s327 = sshll.u32 [#allocation8], 4
          %s328 = int_to_ptr.vmem [resolvable:$true] %s327
          %330 = dma.hbm_to_vmem [thread:$0]  %s4, 64, %s328, [#allocation9]
        $region32: #{tpu_custom_call.1} parent=11 // pred_fallthru
          _
        // Predicated region
        $region33: #{tpu_custom_call.1} parent=11 // pred_check
          %p331 = pneg %p165
        $region34: #{tpu_custom_call.1} parent=11 // pred_check_branch
          %333 = sbr.rel (%p331) target = $region36
        $region35: #{tpu_custom_call.1} parent=11 // pred_region
          %s335 = ssub.s32 1024, 1024
          %336 = vsyncadd [#allocation9], %s335
          %s337 = sshll.u32 [#allocation10], 4
          %s338 = int_to_ptr.vmem [resolvable:$true] %s337
          %343 = dma.hbm_to_vmem [thread:$0]  %s5, 1024, %s338, [#allocation9], 256, 256, 16
        $region36: #{tpu_custom_call.1} parent=11 // pred_fallthru
          _
        // Predicated region
        $region37: #{tpu_custom_call.1} parent=11 // pred_check
          %p344 = pneg %p186
        $region38: #{tpu_custom_call.1} parent=11 // pred_check_branch
          %346 = sbr.rel (%p344) target = $region40
        $region39: #{tpu_custom_call.1} parent=11 // pred_region
          %s348 = ssub.s32 1024, 1024
          %349 = vsyncadd [#allocation12], %s348
          %s350 = sshll.u32 [#allocation11], 4
          %s351 = int_to_ptr.vmem [resolvable:$true] %s350
          %356 = dma.hbm_to_vmem [thread:$0]  %s6, 1024, %s351, [#allocation12], 256, 256, 16
        $region40: #{tpu_custom_call.1} parent=11 // pred_fallthru
          _
        // Predicated region
        $region41: #{tpu_custom_call.1} parent=11 // pred_check
          %p357 = pneg %p207
        $region42: #{tpu_custom_call.1} parent=11 // pred_check_branch
          %359 = sbr.rel (%p357) target = $region44
        $region43: #{tpu_custom_call.1} parent=11 // pred_region
          %s361 = ssub.s32 64, 64
          %362 = vsyncadd [#allocation12], %s361
          %s364 = sshll.u32 [#allocation13], 4
          %s365 = int_to_ptr.vmem [resolvable:$true] %s364
          %367 = dma.hbm_to_vmem [thread:$0]  %s7, 64, %s365, [#allocation12]
        $region44: #{tpu_custom_call.1} parent=11 // pred_fallthru
          _
        // Predicated region
        $region45: #{tpu_custom_call.1} parent=11 // pred_check
          %p368 = pneg %p228
        $region46: #{tpu_custom_call.1} parent=11 // pred_check_branch
          %370 = sbr.rel (%p368) target = $region48
        $region47: #{tpu_custom_call.1} parent=11 // pred_region
          _
        $region48: #{tpu_custom_call.1} parent=11 // pred_fallthru
          _
        // Predicated region
        $region49: #{tpu_custom_call.1} parent=11 // pred_check
          %p371 = pneg %p249
        $region50: #{tpu_custom_call.1} parent=11 // pred_check_branch
          %373 = sbr.rel (%p371) target = $region52
        $region51: #{tpu_custom_call.1} parent=11 // pred_region
          _
        $region52: #{tpu_custom_call.1} parent=11 // pred_fallthru
          _
      $region12: #{tpu_custom_call.1} parent=5 // pred_fallthru
        _
      %p374 = scmp.lt.s32.totalorder %s22, 2
      // Predicated region
      $region53: #{tpu_custom_call.1} parent=5 // pred_check
        %p375 = pneg %p374
      $region54: #{tpu_custom_call.1} parent=5 // pred_check_branch
        %377 = sbr.rel (%p375) target = $region56
      $region55: #{tpu_custom_call.1} parent=5 // pred_region
        _
      $region56: #{tpu_custom_call.1} parent=5 // pred_fallthru
        _
      %p378 = scmp.le.s32.totalorder 1, %s22
      %p379 = scmp.lt.s32.totalorder %s22, 3
      %p380 = pnand %p378, %p379
      %p381 = pneg %p380
      // Predicated region
      $region57: #{tpu_custom_call.1} parent=5 // pred_check
        _
      $region58: #{tpu_custom_call.1} parent=5 // pred_check_branch
        %383 = sbr.rel (%p380) target = $region60
      $region59: #{tpu_custom_call.1} parent=5 // pred_region
        %s384 = ssub.s32 %s22, 1
        // Predicated region
        $region61: #{tpu_custom_call.1} parent=59 // pred_check
          %p385 = pneg %p102
        $region62: #{tpu_custom_call.1} parent=59 // pred_check_branch
          %387 = sbr.rel (%p385) target = $region64
        $region63: #{tpu_custom_call.1} parent=59 // pred_region
          %388 = dma.done [#allocation6], 512
        $region64: #{tpu_custom_call.1} parent=59 // pred_fallthru
          _
        // Predicated region
        $region65: #{tpu_custom_call.1} parent=59 // pred_check
          %p389 = pneg %p144
        $region66: #{tpu_custom_call.1} parent=59 // pred_check_branch
          %391 = sbr.rel (%p389) target = $region68
        $region67: #{tpu_custom_call.1} parent=59 // pred_region
          %392 = dma.done [#allocation9], 64
        $region68: #{tpu_custom_call.1} parent=59 // pred_fallthru
          _
        // Predicated region
        $region69: #{tpu_custom_call.1} parent=59 // pred_check
          %p393 = pneg %p165
        $region70: #{tpu_custom_call.1} parent=59 // pred_check_branch
          %395 = sbr.rel (%p393) target = $region72
        $region71: #{tpu_custom_call.1} parent=59 // pred_region
          %396 = dma.done [#allocation9], 1024
        $region72: #{tpu_custom_call.1} parent=59 // pred_fallthru
          _
        // Predicated region
        $region73: #{tpu_custom_call.1} parent=59 // pred_check
          %p397 = pneg %p186
        $region74: #{tpu_custom_call.1} parent=59 // pred_check_branch
          %399 = sbr.rel (%p397) target = $region76
        $region75: #{tpu_custom_call.1} parent=59 // pred_region
          %400 = dma.done [#allocation12], 1024
        $region76: #{tpu_custom_call.1} parent=59 // pred_fallthru
          _
        // Predicated region
        $region77: #{tpu_custom_call.1} parent=59 // pred_check
          %p401 = pneg %p207
        $region78: #{tpu_custom_call.1} parent=59 // pred_check_branch
          %403 = sbr.rel (%p401) target = $region80
        $region79: #{tpu_custom_call.1} parent=59 // pred_region
          %404 = dma.done [#allocation12], 64
        $region80: #{tpu_custom_call.1} parent=59 // pred_fallthru
          _
        %s405 = smul.u32 2, %s31
        %p406 = scmp.lt.s32.totalorder %s405, 1
        %s407 = scalar_select %p406, %s405, 1
        %s408 = smul.addr %s407, 8
        %s409 = scalar_lea.vmem %s0, %s408
        %p410 = pneg %p60
        %p411 = pneg %p57
        %p412 = pneg %p81
        %p413 = pneg %p78
        %p414 = pneg %p102
        %p415 = pneg %p99
        %p416 = pneg %p123
        %p417 = pneg %p120
        %p418 = pneg %p144
        %p419 = pneg %p141
        %p420 = pneg %p165
        %p421 = pneg %p162
        %p422 = pneg %p186
        %p423 = pneg %p183
        %p424 = pneg %p207
        %p425 = pneg %p204
        %p426 = pneg %p228
        %p427 = pneg %p225
        %p428 = pneg %p249
        %p429 = pneg %p246
        %p430 = pneg %p277
        %p431 = pneg %p274
        %s432 = sand.u32 %s264, 1
        %s433 = scalar_lea.sflag [#allocation7], %s432
        %s434 = sand.u32 %s264, 1
        %s435 = smul.addr %s434, 64
        %s436 = scalar_lea.vmem [#allocation14], %s435
        %s437 = smul.u32 2, %s31
        %p438 = scmp.lt.s32.totalorder %s437, 1
        %s439 = scalar_select %p438, %s437, 1
        %s440 = smul.addr %s439, 8
        %s441 = scalar_lea.vmem %s0, %s440
        %s442 = smul.u32 2, %s31
        %s443 = smul.u32 4, %s32
        %s444 = smul.u32 2, %s31
        %p446 = scmp.eq.s32.totalorder %s32, 0
        // Predicated region
        $region81: #{tpu_custom_call.1} parent=59 // pred_check
          %p447 = pneg %p446
        $region82: #{tpu_custom_call.1} parent=59 // pred_check_branch
          %449 = sbr.rel (%p447) target = $region84
        $region83: #{tpu_custom_call.1} parent=59 // pred_region
          %v450 = vld [vmem:[%s441] sm:$0xff]
          %v451 = vld [vmem:[%s441 + $0x8] sm:$0xff]
          %v452 = vpack.c.bf16 %v451, %v450
          %vm453 = vcmask 261120
          %454 = vst.msk [vmem:[#allocation2] sm:$0xff] %vm453, %v452
          %455 = vst.msk [vmem:[#allocation3] sm:$0xff] %vm453, 0.0
          %456 = vst.msk [vmem:[#allocation3 + $0x8] sm:$0xff] %vm453, 0.0
          %s457 = scalar_lea.vmem [#allocation2], 8
          %458 = vst.msk [vmem:[%s457] sm:$0xff] %vm453, %v452
          %s459 = scalar_lea.vmem [#allocation3], 16
          %460 = vst.msk [vmem:[%s459] sm:$0xff] %vm453, 0.0
          %461 = vst.msk [vmem:[%s459 + $0x8] sm:$0xff] %vm453, 0.0
          %v462 = vld [vmem:[%s1] sm:$0x1]
          %v464 = vshrl.u32 %v462, 16
          %v465 = vpack.i.b16 %v464, %v464
          %v467 = vlaneseq
          %v468 = vshrl.u32 %v467, 7
          %v469 = vsub.s32 0, %v468
          %v470 = vrot.slane %v465, %v469
          %vm471 = vcmask 130048
          %472 = vst.msk [vmem:[#allocation4] sm:$0xff] %vm471, %v470
        $region84: #{tpu_custom_call.1} parent=59 // pred_fallthru
          _
        %v473 = vld [vmem:[%s1] sm:$0xf]
        %v474 = vld [vmem:[%s1 + $0x4] sm:$0xf]
        %v475 = vld [vmem:[%s1 + $0x8] sm:$0xf]
        %v476 = vld [vmem:[%s1 + $0xc] sm:$0xf]
        %v477 = vld [vmem:[%s1 + $0x10] sm:$0xf]
        %v478 = vld [vmem:[%s1 + $0x14] sm:$0xf]
        %v479 = vld [vmem:[%s1 + $0x18] sm:$0xf]
        %v480 = vld [vmem:[%s1 + $0x1c] sm:$0xf]
        %v481 = vld [vmem:[%s1 + $0x20] sm:$0xf]
        %v482 = vld [vmem:[%s1 + $0x24] sm:$0xf]
        %v483 = vld [vmem:[%s1 + $0x28] sm:$0xf]
        %v484 = vld [vmem:[%s1 + $0x2c] sm:$0xf]
        %v485 = vld [vmem:[%s1 + $0x30] sm:$0xf]
        %v486 = vld [vmem:[%s1 + $0x34] sm:$0xf]
        %v487 = vld [vmem:[%s1 + $0x38] sm:$0xf]
        %v488 = vld [vmem:[%s1 + $0x3c] sm:$0xf]
        %v489 = vld [vmem:[#allocation5] sm:$0xff]
        %v490 = vld [vmem:[#allocation5 + $0x8] sm:$0xff]
        %v491 = vld [vmem:[#allocation5 + $0x10] sm:$0xff]
        %v492 = vld [vmem:[#allocation5 + $0x18] sm:$0xff]
        %v493 = vld [vmem:[#allocation10] sm:$0xff]
        %v494 = vld [vmem:[#allocation10 + $0x8] sm:$0xff]
        %v495 = vld [vmem:[#allocation10 + $0x10] sm:$0xff]
        %v496 = vld [vmem:[#allocation10 + $0x18] sm:$0xff]
        %v497 = vld [vmem:[#allocation10 + $0x20] sm:$0xff]
        %v498 = vld [vmem:[#allocation10 + $0x28] sm:$0xff]
        %v499 = vld [vmem:[#allocation10 + $0x30] sm:$0xff]
        %v500 = vld [vmem:[#allocation10 + $0x38] sm:$0xff]
        %v501 = vld [vmem:[%s3] sm:$0xff]
        %v502 = vld [vmem:[%s3 + $0x8] sm:$0xff]
        %v503 = vld [vmem:[%s3 + $0x10] sm:$0xff]
        %v504 = vld [vmem:[%s3 + $0x18] sm:$0xff]
        %v505 = vld [vmem:[%s3 + $0x20] sm:$0xff]
        %v506 = vld [vmem:[%s3 + $0x28] sm:$0xff]
        %v507 = vld [vmem:[%s3 + $0x30] sm:$0xff]
        %v508 = vld [vmem:[%s3 + $0x38] sm:$0xff]
        %v509 = vld [vmem:[#allocation11] sm:$0xff]
        %v510 = vld [vmem:[#allocation11 + $0x8] sm:$0xff]
        %v511 = vld [vmem:[#allocation11 + $0x10] sm:$0xff]
        %v512 = vld [vmem:[#allocation11 + $0x18] sm:$0xff]
        %v513 = vld [vmem:[#allocation11 + $0x20] sm:$0xff]
        %v514 = vld [vmem:[#allocation11 + $0x28] sm:$0xff]
        %v515 = vld [vmem:[#allocation11 + $0x30] sm:$0xff]
        %v516 = vld [vmem:[#allocation11 + $0x38] sm:$0xff]
        %v517 = vld [vmem:[#allocation8] sm:$0xf]
        %v519 = vlaneseq
        %v520 = vshrl.u32 %v519, 7
        %v521 = vsub.s32 0, %v520
        %v522 = vrot.slane %v517, %v521
        %v523 = vlaneseq
        %v524 = vshrl.u32 %v523, 7
        %v525 = vsub.s32 1, %v524
        %v526 = vrot.slane %v517, %v525
        %v527 = vlaneseq
        %v528 = vshrl.u32 %v527, 7
        %v529 = vsub.s32 2, %v528
        %v530 = vrot.slane %v517, %v529
        %v531 = vlaneseq
        %v532 = vshrl.u32 %v531, 7
        %v533 = vsub.s32 3, %v532
        %v534 = vrot.slane %v517, %v533
        %v539 = vld [vmem:[#allocation13] sm:$0xf]
        %v541 = vlaneseq
        %v542 = vshrl.u32 %v541, 7
        %v543 = vsub.s32 0, %v542
        %v544 = vrot.slane %v539, %v543
        %v545 = vlaneseq
        %v546 = vshrl.u32 %v545, 7
        %v547 = vsub.s32 1, %v546
        %v548 = vrot.slane %v539, %v547
        %v549 = vlaneseq
        %v550 = vshrl.u32 %v549, 7
        %v551 = vsub.s32 2, %v550
        %v552 = vrot.slane %v539, %v551
        %v553 = vlaneseq
        %v554 = vshrl.u32 %v553, 7
        %v555 = vsub.s32 3, %v554
        %v556 = vrot.slane %v539, %v555
        %v561 = vld [vmem:[%s8] sm:$0xf]
        %v562 = vld [vmem:[%s8 + $0x4] sm:$0xf]
        %v563 = vld [vmem:[%s8 + $0x8] sm:$0xf]
        %v564 = vld [vmem:[%s8 + $0xc] sm:$0xf]
        %v565 = vld [vmem:[%s9] sm:$0x1]
        %v567 = vlaneseq
        %v568 = vshrl.u32 %v567, 7
        %v569 = vsub.s32 0, %v568
        %v570 = vrot.slane %v565, %v569
        %v572 = vlaneseq
        %v573 = vand.u32 %v572, 127
        %v574 = vld [vmem:[#allocation2] sm:$0xff]
        %s575 = scalar_lea.vmem [#allocation2], 8
        %v576 = vld [vmem:[%s575] sm:$0xff]
        %v577 = vld [vmem:[#allocation3] sm:$0xff]
        %v578 = vld [vmem:[#allocation3 + $0x8] sm:$0xff]
        %s579 = scalar_lea.vmem [#allocation3], 16
        %v580 = vld [vmem:[%s579] sm:$0xff]
        %v581 = vld [vmem:[%s579 + $0x8] sm:$0xff]
        %v582 = vld [vmem:[#allocation4] sm:$0xff]
        %v591 = vunpack.c.l.b16 %v501
        %v592 = vunpack.c.h.b16 %v501
        %v593 = vunpack.c.l.b16 %v502
        %v594 = vunpack.c.h.b16 %v502
        %v595 = vunpack.c.l.b16 %v503
        %v596 = vunpack.c.h.b16 %v503
        %v597 = vunpack.c.l.b16 %v504
        %v598 = vunpack.c.h.b16 %v504
        %v599 = vunpack.c.l.b16 %v505
        %v600 = vunpack.c.h.b16 %v505
        %v601 = vunpack.c.l.b16 %v506
        %v602 = vunpack.c.h.b16 %v506
        %v603 = vunpack.c.l.b16 %v507
        %v604 = vunpack.c.h.b16 %v507
        %v605 = vunpack.c.l.b16 %v508
        %v606 = vunpack.c.h.b16 %v508
        %v607 = vpack.c.b16 %v595, %v591
        %v608 = vpack.c.b16 %v596, %v592
        %v609 = vpack.c.b16 %v597, %v593
        %v610 = vpack.c.b16 %v598, %v594
        %v611 = vpack.c.b16 %v603, %v599
        %v612 = vpack.c.b16 %v604, %v600
        %v613 = vpack.c.b16 %v605, %v601
        %v614 = vpack.c.b16 %v606, %v602
        %vm623 = vcmask 261120
        %v625 = vsel %vm623, %v574, 0
        %627 = vmatprep.subr.bf16.mxu0 %v608
        %628 = vmatpush1.bf16.msra.mxu0 %v607
        %629 = vmatprep.subr.bf16.mxu0 %v612
        %630 = vmatpush1.bf16.msra.mxu0 %v611
        %631 = vmatprep.subr.bf16.mxu0 0
        %632 = vmatpush1.bf16.msra.mxu0 0
        %633 = vmatprep.subr.bf16.mxu0 0
        %634 = vmatpush1.bf16.msra.mxu0 0
        %635 = vmatprep.subr.bf16.mxu0 0
        %636 = vmatpush1.bf16.msra.mxu0 0
        %637 = vmatprep.subr.bf16.mxu0 0
        %638 = vmatpush1.bf16.msra.mxu0 0
        %639 = vmatprep.subr.bf16.mxu0 0
        %640 = vmatpush1.bf16.msra.mxu0 0
        %641 = vmatprep.subr.bf16.mxu0 0
        %642 = vmatpush1.bf16.msra.mxu0 0
        %643 = vmatprep.subr.bf16.mxu0 0
        %644 = vmatpush1.bf16.msra.mxu0 0
        %645 = vmatprep.subr.bf16.mxu0 0
        %646 = vmatpush1.bf16.msra.mxu0 0
        %647 = vmatprep.subr.bf16.mxu0 0
        %648 = vmatpush1.bf16.msra.mxu0 0
        %649 = vmatprep.subr.bf16.mxu0 0
        %650 = vmatpush1.bf16.msra.mxu0 0
        %651 = vmatprep.subr.bf16.mxu0 0
        %652 = vmatpush1.bf16.msra.mxu0 0
        %653 = vmatprep.subr.bf16.mxu0 0
        %654 = vmatpush1.bf16.msra.mxu0 0
        %655 = vmatprep.subr.bf16.mxu0 0
        %656 = vmatpush1.bf16.msra.mxu0 0
        %657 = vmatprep.subr.bf16.mxu0 0
        %658 = vmatpush1.bf16.msra.mxu0 0
        %659 = vmatprep.mubr.bf16.mxu0 0
        %660 = vmatmul.mubr.bf16.gmra.mrb[0].mxu0 %v625
        %v661 = vpop.f32.mrb[0].mxu0
        %v662 = vadd.f32 0.0, %v661
        %v663 = vpop.f32.mrb[0].mxu0
        %v664 = vadd.f32 0.0, %v663
        %v665 = vpop.f32.mrb[0].mxu0
        %v666 = vadd.f32 0.0, %v665
        %v667 = vpop.f32.mrb[0].mxu0
        %v668 = vadd.f32 0.0, %v667
        %669 = vdwg.mxu0
        %670 = vmatprep.subr.bf16.mxu0 %v610
        %671 = vmatpush1.bf16.msra.mxu0 %v609
        %672 = vmatprep.subr.bf16.mxu0 %v614
        %673 = vmatpush1.bf16.msra.mxu0 %v613
        %674 = vmatprep.subr.bf16.mxu0 0
        %675 = vmatpush1.bf16.msra.mxu0 0
        %676 = vmatprep.subr.bf16.mxu0 0
        %677 = vmatpush1.bf16.msra.mxu0 0
        %678 = vmatprep.subr.bf16.mxu0 0
        %679 = vmatpush1.bf16.msra.mxu0 0
        %680 = vmatprep.subr.bf16.mxu0 0
        %681 = vmatpush1.bf16.msra.mxu0 0
        %682 = vmatprep.subr.bf16.mxu0 0
        %683 = vmatpush1.bf16.msra.mxu0 0
        %684 = vmatprep.subr.bf16.mxu0 0
        %685 = vmatpush1.bf16.msra.mxu0 0
        %686 = vmatprep.subr.bf16.mxu0 0
        %687 = vmatpush1.bf16.msra.mxu0 0
        %688 = vmatprep.subr.bf16.mxu0 0
        %689 = vmatpush1.bf16.msra.mxu0 0
        %690 = vmatprep.subr.bf16.mxu0 0
        %691 = vmatpush1.bf16.msra.mxu0 0
        %692 = vmatprep.subr.bf16.mxu0 0
        %693 = vmatpush1.bf16.msra.mxu0 0
        %694 = vmatprep.subr.bf16.mxu0 0
        %695 = vmatpush1.bf16.msra.mxu0 0
        %696 = vmatprep.subr.bf16.mxu0 0
        %697 = vmatpush1.bf16.msra.mxu0 0
        %698 = vmatprep.subr.bf16.mxu0 0
        %699 = vmatpush1.bf16.msra.mxu0 0
        %700 = vmatprep.subr.bf16.mxu0 0
        %701 = vmatpush1.bf16.msra.mxu0 0
        %702 = vmatprep.mubr.bf16.mxu0 0
        %703 = vmatmul.mubr.bf16.gmra.mrb[0].mxu0 %v625
        %v704 = vpop.f32.mrb[0].mxu0
        %v705 = vadd.f32 0.0, %v704
        %v706 = vpop.f32.mrb[0].mxu0
        %v707 = vadd.f32 0.0, %v706
        %v708 = vpop.f32.mrb[0].mxu0
        %v709 = vadd.f32 0.0, %v708
        %v710 = vpop.f32.mrb[0].mxu0
        %v711 = vadd.f32 0.0, %v710
        %712 = vdwg.mxu0
        %v717 = vunpack.c.l.b16 %v489
        %v718 = vunpack.c.h.b16 %v489
        %v719 = vunpack.c.l.b16 %v490
        %v720 = vunpack.c.h.b16 %v490
        %v721 = vunpack.c.l.b16 %v491
        %v722 = vunpack.c.h.b16 %v491
        %v723 = vunpack.c.l.b16 %v492
        %v724 = vunpack.c.h.b16 %v492
        %v725 = vpack.c.b16 %v721, %v717
        %v726 = vpack.c.b16 %v722, %v718
        %v727 = vpack.c.b16 %v723, %v719
        %v728 = vpack.c.b16 %v724, %v720
        %vm733 = vcmask 130048
        %v735 = vsel %vm733, %v582, 0
        %737 = vmatprep.subr.bf16.mxu0 %v726
        %738 = vmatpush1.bf16.msra.mxu0 %v725
        %739 = vmatprep.subr.bf16.mxu0 0
        %740 = vmatpush1.bf16.msra.mxu0 0
        %741 = vmatprep.subr.bf16.mxu0 0
        %742 = vmatpush1.bf16.msra.mxu0 0
        %743 = vmatprep.subr.bf16.mxu0 0
        %744 = vmatpush1.bf16.msra.mxu0 0
        %745 = vmatprep.subr.bf16.mxu0 0
        %746 = vmatpush1.bf16.msra.mxu0 0
        %747 = vmatprep.subr.bf16.mxu0 0
        %748 = vmatpush1.bf16.msra.mxu0 0
        %749 = vmatprep.subr.bf16.mxu0 0
        %750 = vmatpush1.bf16.msra.mxu0 0
        %751 = vmatprep.subr.bf16.mxu0 0
        %752 = vmatpush1.bf16.msra.mxu0 0
        %753 = vmatprep.subr.bf16.mxu0 0
        %754 = vmatpush1.bf16.msra.mxu0 0
        %755 = vmatprep.subr.bf16.mxu0 0
        %756 = vmatpush1.bf16.msra.mxu0 0
        %757 = vmatprep.subr.bf16.mxu0 0
        %758 = vmatpush1.bf16.msra.mxu0 0
        %759 = vmatprep.subr.bf16.mxu0 0
        %760 = vmatpush1.bf16.msra.mxu0 0
        %761 = vmatprep.subr.bf16.mxu0 0
        %762 = vmatpush1.bf16.msra.mxu0 0
        %763 = vmatprep.subr.bf16.mxu0 0
        %764 = vmatpush1.bf16.msra.mxu0 0
        %765 = vmatprep.subr.bf16.mxu0 0
        %766 = vmatpush1.bf16.msra.mxu0 0
        %767 = vmatprep.subr.bf16.mxu0 0
        %768 = vmatpush1.bf16.msra.mxu0 0
        %769 = vmatprep.mubr.bf16.mxu0 0
        %770 = vmatmul.mubr.bf16.gmra.mrb[0].mxu0 %v735
        %v771 = vpop.f32.mrb[0].mxu0
        %v772 = vadd.f32 %v662, %v771
        %v773 = vpop.f32.mrb[0].mxu0
        %v774 = vadd.f32 %v664, %v773
        %v775 = vpop.f32.mrb[0].mxu0
        %v776 = vadd.f32 %v666, %v775
        %v777 = vpop.f32.mrb[0].mxu0
        %v778 = vadd.f32 %v668, %v777
        %779 = vdwg.mxu0
        %780 = vmatprep.subr.bf16.mxu0 %v728
        %781 = vmatpush1.bf16.msra.mxu0 %v727
        %782 = vmatprep.subr.bf16.mxu0 0
        %783 = vmatpush1.bf16.msra.mxu0 0
        %784 = vmatprep.subr.bf16.mxu0 0
        %785 = vmatpush1.bf16.msra.mxu0 0
        %786 = vmatprep.subr.bf16.mxu0 0
        %787 = vmatpush1.bf16.msra.mxu0 0
        %788 = vmatprep.subr.bf16.mxu0 0
        %789 = vmatpush1.bf16.msra.mxu0 0
        %790 = vmatprep.subr.bf16.mxu0 0
        %791 = vmatpush1.bf16.msra.mxu0 0
        %792 = vmatprep.subr.bf16.mxu0 0
        %793 = vmatpush1.bf16.msra.mxu0 0
        %794 = vmatprep.subr.bf16.mxu0 0
        %795 = vmatpush1.bf16.msra.mxu0 0
        %796 = vmatprep.subr.bf16.mxu0 0
        %797 = vmatpush1.bf16.msra.mxu0 0
        %798 = vmatprep.subr.bf16.mxu0 0
        %799 = vmatpush1.bf16.msra.mxu0 0
        %800 = vmatprep.subr.bf16.mxu0 0
        %801 = vmatpush1.bf16.msra.mxu0 0
        %802 = vmatprep.subr.bf16.mxu0 0
        %803 = vmatpush1.bf16.msra.mxu0 0
        %804 = vmatprep.subr.bf16.mxu0 0
        %805 = vmatpush1.bf16.msra.mxu0 0
        %806 = vmatprep.subr.bf16.mxu0 0
        %807 = vmatpush1.bf16.msra.mxu0 0
        %808 = vmatprep.subr.bf16.mxu0 0
        %809 = vmatpush1.bf16.msra.mxu0 0
        %810 = vmatprep.subr.bf16.mxu0 0
        %811 = vmatpush1.bf16.msra.mxu0 0
        %812 = vmatprep.mubr.bf16.mxu0 0
        %813 = vmatmul.mubr.bf16.gmra.mrb[0].mxu0 %v735
        %v814 = vpop.f32.mrb[0].mxu0
        %v815 = vadd.f32 %v705, %v814
        %v816 = vpop.f32.mrb[0].mxu0
        %v817 = vadd.f32 %v707, %v816
        %v818 = vpop.f32.mrb[0].mxu0
        %v819 = vadd.f32 %v709, %v818
        %v820 = vpop.f32.mrb[0].mxu0
        %v821 = vadd.f32 %v711, %v820
        %822 = vdwg.mxu0
        %v823 = vadd.f32 %v772, %v522
        %v824 = vadd.f32 %v774, %v526
        %v825 = vadd.f32 %v815, %v530
        %v826 = vadd.f32 %v817, %v534
        %v827 = vadd.f32 %v776, %v522
        %v828 = vadd.f32 %v778, %v526
        %v829 = vadd.f32 %v819, %v530
        %v830 = vadd.f32 %v821, %v534
        %v831 = vxor.u32 %v823, 2147483648
        %v832 = vxor.u32 %v827, 2147483648
        %v833 = vmul.f32 %v831, 1.442695
        %v834 = vpow.pop %v833
        %v835 = vmul.f32 %v832, 1.442695
        %v836 = vpow.pop %v835
        %v837 = vadd.f32 %v834, 1.0
        %v838 = vadd.f32 %v836, 1.0
        %v839 = vrcp.pop %v837
        %v840 = vmul.f32 1.0, %v839
        %v841 = vrcp.pop %v838
        %v842 = vmul.f32 1.0, %v841
        %v843 = vxor.u32 %v824, 2147483648
        %v844 = vxor.u32 %v828, 2147483648
        %v845 = vmul.f32 %v843, 1.442695
        %v846 = vpow.pop %v845
        %v847 = vmul.f32 %v844, 1.442695
        %v848 = vpow.pop %v847
        %v849 = vadd.f32 %v846, 1.0
        %v850 = vadd.f32 %v848, 1.0
        %v851 = vrcp.pop %v849
        %v852 = vmul.f32 1.0, %v851
        %v853 = vrcp.pop %v850
        %v854 = vmul.f32 1.0, %v853
        %v855 = vtanh.pop %v825
        %v856 = vtanh.pop %v829
        %v857 = vxor.u32 %v826, 2147483648
        %v858 = vxor.u32 %v830, 2147483648
        %v859 = vmul.f32 %v857, 1.442695
        %v860 = vpow.pop %v859
        %v861 = vmul.f32 %v858, 1.442695
        %v862 = vpow.pop %v861
        %v863 = vadd.f32 %v860, 1.0
        %v864 = vadd.f32 %v862, 1.0
        %v865 = vrcp.pop %v863
        %v866 = vmul.f32 1.0, %v865
        %v867 = vrcp.pop %v864
        %v868 = vmul.f32 1.0, %v867
        %v869 = vmul.f32 %v852, %v577
        %v870 = vmul.f32 %v854, %v578
        %v871 = vmul.f32 %v840, %v855
        %v872 = vmul.f32 %v842, %v856
        %v873 = vadd.f32 %v869, %v871
        %v874 = vadd.f32 %v870, %v872
        %v875 = vtanh.pop %v873
        %v876 = vtanh.pop %v874
        %v877 = vmul.f32 %v866, %v875
        %v878 = vmul.f32 %v868, %v876
        %v879 = vpack.c.bf16 %v878, %v877
        %v888 = vunpack.c.l.b16 %v509
        %v889 = vunpack.c.h.b16 %v509
        %v890 = vunpack.c.l.b16 %v510
        %v891 = vunpack.c.h.b16 %v510
        %v892 = vunpack.c.l.b16 %v511
        %v893 = vunpack.c.h.b16 %v511
        %v894 = vunpack.c.l.b16 %v512
        %v895 = vunpack.c.h.b16 %v512
        %v896 = vunpack.c.l.b16 %v513
        %v897 = vunpack.c.h.b16 %v513
        %v898 = vunpack.c.l.b16 %v514
        %v899 = vunpack.c.h.b16 %v514
        %v900 = vunpack.c.l.b16 %v515
        %v901 = vunpack.c.h.b16 %v515
        %v902 = vunpack.c.l.b16 %v516
        %v903 = vunpack.c.h.b16 %v516
        %v904 = vpack.c.b16 %v892, %v888
        %v905 = vpack.c.b16 %v893, %v889
        %v906 = vpack.c.b16 %v894, %v890
        %v907 = vpack.c.b16 %v895, %v891
        %v908 = vpack.c.b16 %v900, %v896
        %v909 = vpack.c.b16 %v901, %v897
        %v910 = vpack.c.b16 %v902, %v898
        %v911 = vpack.c.b16 %v903, %v899
        %v921 = vsel %vm623, %v576, 0
        %923 = vmatprep.subr.bf16.mxu0 %v905
        %924 = vmatpush1.bf16.msra.mxu0 %v904
        %925 = vmatprep.subr.bf16.mxu0 %v909
        %926 = vmatpush1.bf16.msra.mxu0 %v908
        %927 = vmatprep.subr.bf16.mxu0 0
        %928 = vmatpush1.bf16.msra.mxu0 0
        %929 = vmatprep.subr.bf16.mxu0 0
        %930 = vmatpush1.bf16.msra.mxu0 0
        %931 = vmatprep.subr.bf16.mxu0 0
        %932 = vmatpush1.bf16.msra.mxu0 0
        %933 = vmatprep.subr.bf16.mxu0 0
        %934 = vmatpush1.bf16.msra.mxu0 0
        %935 = vmatprep.subr.bf16.mxu0 0
        %936 = vmatpush1.bf16.msra.mxu0 0
        %937 = vmatprep.subr.bf16.mxu0 0
        %938 = vmatpush1.bf16.msra.mxu0 0
        %939 = vmatprep.subr.bf16.mxu0 0
        %940 = vmatpush1.bf16.msra.mxu0 0
        %941 = vmatprep.subr.bf16.mxu0 0
        %942 = vmatpush1.bf16.msra.mxu0 0
        %943 = vmatprep.subr.bf16.mxu0 0
        %944 = vmatpush1.bf16.msra.mxu0 0
        %945 = vmatprep.subr.bf16.mxu0 0
        %946 = vmatpush1.bf16.msra.mxu0 0
        %947 = vmatprep.subr.bf16.mxu0 0
        %948 = vmatpush1.bf16.msra.mxu0 0
        %949 = vmatprep.subr.bf16.mxu0 0
        %950 = vmatpush1.bf16.msra.mxu0 0
        %951 = vmatprep.subr.bf16.mxu0 0
        %952 = vmatpush1.bf16.msra.mxu0 0
        %953 = vmatprep.subr.bf16.mxu0 0
        %954 = vmatpush1.bf16.msra.mxu0 0
        %955 = vmatprep.mubr.bf16.mxu0 0
        %956 = vmatmul.mubr.bf16.gmra.mrb[0].mxu0 %v921
        %v957 = vpop.f32.mrb[0].mxu0
        %v958 = vadd.f32 0.0, %v957
        %v959 = vpop.f32.mrb[0].mxu0
        %v960 = vadd.f32 0.0, %v959
        %v961 = vpop.f32.mrb[0].mxu0
        %v962 = vadd.f32 0.0, %v961
        %v963 = vpop.f32.mrb[0].mxu0
        %v964 = vadd.f32 0.0, %v963
        %965 = vdwg.mxu0
        %966 = vmatprep.subr.bf16.mxu0 %v907
        %967 = vmatpush1.bf16.msra.mxu0 %v906
        %968 = vmatprep.subr.bf16.mxu0 %v911
        %969 = vmatpush1.bf16.msra.mxu0 %v910
        %970 = vmatprep.subr.bf16.mxu0 0
        %971 = vmatpush1.bf16.msra.mxu0 0
        %972 = vmatprep.subr.bf16.mxu0 0
        %973 = vmatpush1.bf16.msra.mxu0 0
        %974 = vmatprep.subr.bf16.mxu0 0
        %975 = vmatpush1.bf16.msra.mxu0 0
        %976 = vmatprep.subr.bf16.mxu0 0
        %977 = vmatpush1.bf16.msra.mxu0 0
        %978 = vmatprep.subr.bf16.mxu0 0
        %979 = vmatpush1.bf16.msra.mxu0 0
        %980 = vmatprep.subr.bf16.mxu0 0
        %981 = vmatpush1.bf16.msra.mxu0 0
        %982 = vmatprep.subr.bf16.mxu0 0
        %983 = vmatpush1.bf16.msra.mxu0 0
        %984 = vmatprep.subr.bf16.mxu0 0
        %985 = vmatpush1.bf16.msra.mxu0 0
        %986 = vmatprep.subr.bf16.mxu0 0
        %987 = vmatpush1.bf16.msra.mxu0 0
        %988 = vmatprep.subr.bf16.mxu0 0
        %989 = vmatpush1.bf16.msra.mxu0 0
        %990 = vmatprep.subr.bf16.mxu0 0
        %991 = vmatpush1.bf16.msra.mxu0 0
        %992 = vmatprep.subr.bf16.mxu0 0
        %993 = vmatpush1.bf16.msra.mxu0 0
        %994 = vmatprep.subr.bf16.mxu0 0
        %995 = vmatpush1.bf16.msra.mxu0 0
        %996 = vmatprep.subr.bf16.mxu0 0
        %997 = vmatpush1.bf16.msra.mxu0 0
        %998 = vmatprep.mubr.bf16.mxu0 0
        %999 = vmatmul.mubr.bf16.gmra.mrb[0].mxu0 %v921
        %v1000 = vpop.f32.mrb[0].mxu0
        %v1001 = vadd.f32 0.0, %v1000
        %v1002 = vpop.f32.mrb[0].mxu0
        %v1003 = vadd.f32 0.0, %v1002
        %v1004 = vpop.f32.mrb[0].mxu0
        %v1005 = vadd.f32 0.0, %v1004
        %v1006 = vpop.f32.mrb[0].mxu0
        %v1007 = vadd.f32 0.0, %v1006
        %1008 = vdwg.mxu0
        %v1017 = vunpack.c.l.b16 %v493
        %v1018 = vunpack.c.h.b16 %v493
        %v1019 = vunpack.c.l.b16 %v494
        %v1020 = vunpack.c.h.b16 %v494
        %v1021 = vunpack.c.l.b16 %v495
        %v1022 = vunpack.c.h.b16 %v495
        %v1023 = vunpack.c.l.b16 %v496
        %v1024 = vunpack.c.h.b16 %v496
        %v1025 = vunpack.c.l.b16 %v497
        %v1026 = vunpack.c.h.b16 %v497
        %v1027 = vunpack.c.l.b16 %v498
        %v1028 = vunpack.c.h.b16 %v498
        %v1029 = vunpack.c.l.b16 %v499
        %v1030 = vunpack.c.h.b16 %v499
        %v1031 = vunpack.c.l.b16 %v500
        %v1032 = vunpack.c.h.b16 %v500
        %v1033 = vpack.c.b16 %v1021, %v1017
        %v1034 = vpack.c.b16 %v1022, %v1018
        %v1035 = vpack.c.b16 %v1023, %v1019
        %v1036 = vpack.c.b16 %v1024, %v1020
        %v1037 = vpack.c.b16 %v1029, %v1025
        %v1038 = vpack.c.b16 %v1030, %v1026
        %v1039 = vpack.c.b16 %v1031, %v1027
        %v1040 = vpack.c.b16 %v1032, %v1028
        %v1050 = vsel %vm623, %v879, 0
        %1052 = vmatprep.subr.bf16.mxu0 %v1034
        %1053 = vmatpush1.bf16.msra.mxu0 %v1033
        %1054 = vmatprep.subr.bf16.mxu0 %v1038
        %1055 = vmatpush1.bf16.msra.mxu0 %v1037
        %1056 = vmatprep.subr.bf16.mxu0 0
        %1057 = vmatpush1.bf16.msra.mxu0 0
        %1058 = vmatprep.subr.bf16.mxu0 0
        %1059 = vmatpush1.bf16.msra.mxu0 0
        %1060 = vmatprep.subr.bf16.mxu0 0
        %1061 = vmatpush1.bf16.msra.mxu0 0
        %1062 = vmatprep.subr.bf16.mxu0 0
        %1063 = vmatpush1.bf16.msra.mxu0 0
        %1064 = vmatprep.subr.bf16.mxu0 0
        %1065 = vmatpush1.bf16.msra.mxu0 0
        %1066 = vmatprep.subr.bf16.mxu0 0
        %1067 = vmatpush1.bf16.msra.mxu0 0
        %1068 = vmatprep.subr.bf16.mxu0 0
        %1069 = vmatpush1.bf16.msra.mxu0 0
        %1070 = vmatprep.subr.bf16.mxu0 0
        %1071 = vmatpush1.bf16.msra.mxu0 0
        %1072 = vmatprep.subr.bf16.mxu0 0
        %1073 = vmatpush1.bf16.msra.mxu0 0
        %1074 = vmatprep.subr.bf16.mxu0 0
        %1075 = vmatpush1.bf16.msra.mxu0 0
        %1076 = vmatprep.subr.bf16.mxu0 0
        %1077 = vmatpush1.bf16.msra.mxu0 0
        %1078 = vmatprep.subr.bf16.mxu0 0
        %1079 = vmatpush1.bf16.msra.mxu0 0
        %1080 = vmatprep.subr.bf16.mxu0 0
        %1081 = vmatpush1.bf16.msra.mxu0 0
        %1082 = vmatprep.subr.bf16.mxu0 0
        %1083 = vmatpush1.bf16.msra.mxu0 0
        %1084 = vmatprep.mubr.bf16.mxu0 0
        %1085 = vmatmul.mubr.bf16.gmra.mrb[0].mxu0 %v1050
        %v1086 = vpop.f32.mrb[0].mxu0
        %v1087 = vadd.f32 %v958, %v1086
        %v1088 = vpop.f32.mrb[0].mxu0
        %v1089 = vadd.f32 %v960, %v1088
        %v1090 = vpop.f32.mrb[0].mxu0
        %v1091 = vadd.f32 %v962, %v1090
        %v1092 = vpop.f32.mrb[0].mxu0
        %v1093 = vadd.f32 %v964, %v1092
        %1094 = vdwg.mxu0
        %1095 = vmatprep.subr.bf16.mxu0 %v1036
        %1096 = vmatpush1.bf16.msra.mxu0 %v1035
        %1097 = vmatprep.subr.bf16.mxu0 %v1040
        %1098 = vmatpush1.bf16.msra.mxu0 %v1039
        %1099 = vmatprep.subr.bf16.mxu0 0
        %1100 = vmatpush1.bf16.msra.mxu0 0
        %1101 = vmatprep.subr.bf16.mxu0 0
        %1102 = vmatpush1.bf16.msra.mxu0 0
        %1103 = vmatprep.subr.bf16.mxu0 0
        %1104 = vmatpush1.bf16.msra.mxu0 0
        %1105 = vmatprep.subr.bf16.mxu0 0
        %1106 = vmatpush1.bf16.msra.mxu0 0
        %1107 = vmatprep.subr.bf16.mxu0 0
        %1108 = vmatpush1.bf16.msra.mxu0 0
        %1109 = vmatprep.subr.bf16.mxu0 0
        %1110 = vmatpush1.bf16.msra.mxu0 0
        %1111 = vmatprep.subr.bf16.mxu0 0
        %1112 = vmatpush1.bf16.msra.mxu0 0
        %1113 = vmatprep.subr.bf16.mxu0 0
        %1114 = vmatpush1.bf16.msra.mxu0 0
        %1115 = vmatprep.subr.bf16.mxu0 0
        %1116 = vmatpush1.bf16.msra.mxu0 0
        %1117 = vmatprep.subr.bf16.mxu0 0
        %1118 = vmatpush1.bf16.msra.mxu0 0
        %1119 = vmatprep.subr.bf16.mxu0 0
        %1120 = vmatpush1.bf16.msra.mxu0 0
        %1121 = vmatprep.subr.bf16.mxu0 0
        %1122 = vmatpush1.bf16.msra.mxu0 0
        %1123 = vmatprep.subr.bf16.mxu0 0
        %1124 = vmatpush1.bf16.msra.mxu0 0
        %1125 = vmatprep.subr.bf16.mxu0 0
        %1126 = vmatpush1.bf16.msra.mxu0 0
        %1127 = vmatprep.mubr.bf16.mxu0 0
        %1128 = vmatmul.mubr.bf16.gmra.mrb[0].mxu0 %v1050
        %v1129 = vpop.f32.mrb[0].mxu0
        %v1130 = vadd.f32 %v1001, %v1129
        %v1131 = vpop.f32.mrb[0].mxu0
        %v1132 = vadd.f32 %v1003, %v1131
        %v1133 = vpop.f32.mrb[0].mxu0
        %v1134 = vadd.f32 %v1005, %v1133
        %v1135 = vpop.f32.mrb[0].mxu0
        %v1136 = vadd.f32 %v1007, %v1135
        %1137 = vdwg.mxu0
        %v1138 = vadd.f32 %v1087, %v544
        %v1139 = vadd.f32 %v1089, %v548
        %v1140 = vadd.f32 %v1130, %v552
        %v1141 = vadd.f32 %v1132, %v556
        %v1142 = vadd.f32 %v1091, %v544
        %v1143 = vadd.f32 %v1093, %v548
        %v1144 = vadd.f32 %v1134, %v552
        %v1145 = vadd.f32 %v1136, %v556
        %v1146 = vxor.u32 %v1138, 2147483648
        %v1147 = vxor.u32 %v1142, 2147483648
        %v1148 = vmul.f32 %v1146, 1.442695
        %v1149 = vpow.pop %v1148
        %v1150 = vmul.f32 %v1147, 1.442695
        %v1151 = vpow.pop %v1150
        %v1152 = vadd.f32 %v1149, 1.0
        %v1153 = vadd.f32 %v1151, 1.0
        %v1154 = vrcp.pop %v1152
        %v1155 = vmul.f32 1.0, %v1154
        %v1156 = vrcp.pop %v1153
        %v1157 = vmul.f32 1.0, %v1156
        %v1158 = vxor.u32 %v1139, 2147483648
        %v1159 = vxor.u32 %v1143, 2147483648
        %v1160 = vmul.f32 %v1158, 1.442695
        %v1161 = vpow.pop %v1160
        %v1162 = vmul.f32 %v1159, 1.442695
        %v1163 = vpow.pop %v1162
        %v1164 = vadd.f32 %v1161, 1.0
        %v1165 = vadd.f32 %v1163, 1.0
        %v1166 = vrcp.pop %v1164
        %v1167 = vmul.f32 1.0, %v1166
        %v1168 = vrcp.pop %v1165
        %v1169 = vmul.f32 1.0, %v1168
        %v1170 = vtanh.pop %v1140
        %v1171 = vtanh.pop %v1144
        %v1172 = vxor.u32 %v1141, 2147483648
        %v1173 = vxor.u32 %v1145, 2147483648
        %v1174 = vmul.f32 %v1172, 1.442695
        %v1175 = vpow.pop %v1174
        %v1176 = vmul.f32 %v1173, 1.442695
        %v1177 = vpow.pop %v1176
        %v1178 = vadd.f32 %v1175, 1.0
        %v1179 = vadd.f32 %v1177, 1.0
        %v1180 = vrcp.pop %v1178
        %v1181 = vmul.f32 1.0, %v1180
        %v1182 = vrcp.pop %v1179
        %v1183 = vmul.f32 1.0, %v1182
        %v1184 = vmul.f32 %v1167, %v580
        %v1185 = vmul.f32 %v1169, %v581
        %v1186 = vmul.f32 %v1155, %v1170
        %v1187 = vmul.f32 %v1157, %v1171
        %v1188 = vadd.f32 %v1184, %v1186
        %v1189 = vadd.f32 %v1185, %v1187
        %v1190 = vtanh.pop %v1188
        %v1191 = vtanh.pop %v1189
        %v1192 = vmul.f32 %v1181, %v1190
        %v1193 = vmul.f32 %v1183, %v1191
        %v1194 = vpack.c.bf16 %v1193, %v1192
        %v1199 = vunpack.c.l.b16 %v561
        %v1200 = vunpack.c.l.b16 %v562
        %v1201 = vunpack.c.l.b16 %v563
        %v1202 = vunpack.c.l.b16 %v564
        %v1203 = vpack.c.b16 %v1200, %v1199
        %v1204 = vpack.c.b16 %v1202, %v1201
        %v1208 = vsel %vm623, %v1194, 0
        %1210 = vmatprep.subr.bf16.mxu0 0
        %1211 = vmatpush1.bf16.msra.mxu0 %v1203
        %1212 = vmatprep.subr.bf16.mxu0 0
        %1213 = vmatpush1.bf16.msra.mxu0 %v1204
        %1214 = vmatprep.subr.bf16.mxu0 0
        %1215 = vmatpush1.bf16.msra.mxu0 0
        %1216 = vmatprep.subr.bf16.mxu0 0
        %1217 = vmatpush1.bf16.msra.mxu0 0
        %1218 = vmatprep.subr.bf16.mxu0 0
        %1219 = vmatpush1.bf16.msra.mxu0 0
        %1220 = vmatprep.subr.bf16.mxu0 0
        %1221 = vmatpush1.bf16.msra.mxu0 0
        %1222 = vmatprep.subr.bf16.mxu0 0
        %1223 = vmatpush1.bf16.msra.mxu0 0
        %1224 = vmatprep.subr.bf16.mxu0 0
        %1225 = vmatpush1.bf16.msra.mxu0 0
        %1226 = vmatprep.subr.bf16.mxu0 0
        %1227 = vmatpush1.bf16.msra.mxu0 0
        %1228 = vmatprep.subr.bf16.mxu0 0
        %1229 = vmatpush1.bf16.msra.mxu0 0
        %1230 = vmatprep.subr.bf16.mxu0 0
        %1231 = vmatpush1.bf16.msra.mxu0 0
        %1232 = vmatprep.subr.bf16.mxu0 0
        %1233 = vmatpush1.bf16.msra.mxu0 0
        %1234 = vmatprep.subr.bf16.mxu0 0
        %1235 = vmatpush1.bf16.msra.mxu0 0
        %1236 = vmatprep.subr.bf16.mxu0 0
        %1237 = vmatpush1.bf16.msra.mxu0 0
        %1238 = vmatprep.subr.bf16.mxu0 0
        %1239 = vmatpush1.bf16.msra.mxu0 0
        %1240 = vmatprep.subr.bf16.mxu0 0
        %1241 = vmatpush1.bf16.msra.mxu0 0
        %1242 = vmatprep.mubr.bf16.mxu0 0
        %1243 = vmatmul.mubr.bf16.gmra.mrb[0].mxu0 %v1208
        %v1244 = vpop.f32.mrb[0].mxu0
        %v1245 = vadd.f32 %v570, %v1244
        %v1246 = vpop.f32.mrb[0].mxu0
        %v1247 = vpop.f32.mrb[0].mxu0
        %v1248 = vadd.f32 %v570, %v1247
        %v1249 = vpop.f32.mrb[0].mxu0
        %1250 = vdwg.mxu0
        %1251 = vst [vmem:[%s436] sm:$0xff] %v1245
        %1252 = vst [vmem:[%s436 + $0x8] sm:$0xff] %v1248
        %1253 = vmax.xlane.f32.xlu0 %v1245
        %v1254 = vpop.xlane.xlu0 %1253
        %1255 = vmax.xlane.f32.xlu0 %v1248
        %v1256 = vpop.xlane.xlu0 %1255
        %vm1257 = vcmp.ge.f32.partialorder %v1245, %v1254
        %vm1258 = vcmp.ge.f32.partialorder %v1248, %v1256
        %v1259 = vsel %vm1257, %v573, 128
        %v1260 = vsel %vm1258, %v573, 128
        %v1261 = vand.u32 %v1259, 65535
        %v1262 = vshra.s32 %v1259, 16
        %v1263 = vcvt.s32.f32 %v1261
        %v1264 = vcvt.s32.f32 %v1262
        %1265 = vmin.xlane.f32.xlu0 %v1264
        %v1266 = vpop.xlane.xlu0 %1265
        %vm1267 = vcmp.eq.f32.partialorder %v1264, %v1266
        %v1268 = vsel %vm1267, %v1263, inf
        %1269 = vmin.xlane.f32.xlu0 %v1268
        %v1270 = vpop.xlane.xlu0 %1269
        %v1271 = vcvt.f32.s32 %v1270
        %v1272 = vcvt.f32.s32 %v1266
        %v1273 = vshll.u32 %v1272, 16
        %v1274 = vadd.s32 %v1273, %v1271
        %v1275 = vand.u32 %v1260, 65535
        %v1276 = vshra.s32 %v1260, 16
        %v1277 = vcvt.s32.f32 %v1275
        %v1278 = vcvt.s32.f32 %v1276
        %1279 = vmin.xlane.f32.xlu0 %v1278
        %v1280 = vpop.xlane.xlu0 %1279
        %vm1281 = vcmp.eq.f32.partialorder %v1278, %v1280
        %v1282 = vsel %vm1281, %v1277, inf
        %1283 = vmin.xlane.f32.xlu0 %v1282
        %v1284 = vpop.xlane.xlu0 %1283
        %v1285 = vcvt.f32.s32 %v1284
        %v1286 = vcvt.f32.s32 %v1280
        %v1287 = vshll.u32 %v1286, 16
        %v1288 = vadd.s32 %v1287, %v1285
        %vm1289 = vcmp.eq.s32.totalorder %v1259, %v1274
        %vm1290 = vcmp.eq.s32.totalorder %v1260, %v1288
        %v1291 = vsel %vm1289, 1, 0
        %v1292 = vsel %vm1290, 1, 0
        %v1293 = vcvt.s32.f32 %v1291
        %v1294 = vcvt.s32.f32 %v1292
        %v1295 = vpack.c.bf16 %v1294, %v1293
        %v1312 = vunpack.c.l.b16 %v473
        %v1313 = vunpack.c.l.b16 %v474
        %v1314 = vunpack.c.l.b16 %v475
        %v1315 = vunpack.c.l.b16 %v476
        %v1316 = vunpack.c.l.b16 %v477
        %v1317 = vunpack.c.l.b16 %v478
        %v1318 = vunpack.c.l.b16 %v479
        %v1319 = vunpack.c.l.b16 %v480
        %v1320 = vunpack.c.l.b16 %v481
        %v1321 = vunpack.c.l.b16 %v482
        %v1322 = vunpack.c.l.b16 %v483
        %v1323 = vunpack.c.l.b16 %v484
        %v1324 = vunpack.c.l.b16 %v485
        %v1325 = vunpack.c.l.b16 %v486
        %v1326 = vunpack.c.l.b16 %v487
        %v1327 = vunpack.c.l.b16 %v488
        %v1328 = vpack.c.b16 %v1313, %v1312
        %v1329 = vpack.c.b16 %v1315, %v1314
        %v1330 = vpack.c.b16 %v1317, %v1316
        %v1331 = vpack.c.b16 %v1319, %v1318
        %v1332 = vpack.c.b16 %v1321, %v1320
        %v1333 = vpack.c.b16 %v1323, %v1322
        %v1334 = vpack.c.b16 %v1325, %v1324
        %v1335 = vpack.c.b16 %v1327, %v1326
        %1344 = vmatprep.subr.bf16.mxu0 0
        %1345 = vmatpush1.bf16.msra.mxu0 %v1328
        %1346 = vmatprep.subr.bf16.mxu0 0
        %1347 = vmatpush1.bf16.msra.mxu0 %v1329
        %1348 = vmatprep.subr.bf16.mxu0 0
        %1349 = vmatpush1.bf16.msra.mxu0 %v1330
        %1350 = vmatprep.subr.bf16.mxu0 0
        %1351 = vmatpush1.bf16.msra.mxu0 %v1331
        %1352 = vmatprep.subr.bf16.mxu0 0
        %1353 = vmatpush1.bf16.msra.mxu0 %v1332
        %1354 = vmatprep.subr.bf16.mxu0 0
        %1355 = vmatpush1.bf16.msra.mxu0 %v1333
        %1356 = vmatprep.subr.bf16.mxu0 0
        %1357 = vmatpush1.bf16.msra.mxu0 %v1334
        %1358 = vmatprep.subr.bf16.mxu0 0
        %1359 = vmatpush1.bf16.msra.mxu0 %v1335
        %1360 = vmatprep.subr.bf16.mxu0 0
        %1361 = vmatpush1.bf16.msra.mxu0 0
        %1362 = vmatprep.subr.bf16.mxu0 0
        %1363 = vmatpush1.bf16.msra.mxu0 0
        %1364 = vmatprep.subr.bf16.mxu0 0
        %1365 = vmatpush1.bf16.msra.mxu0 0
        %1366 = vmatprep.subr.bf16.mxu0 0
        %1367 = vmatpush1.bf16.msra.mxu0 0
        %1368 = vmatprep.subr.bf16.mxu0 0
        %1369 = vmatpush1.bf16.msra.mxu0 0
        %1370 = vmatprep.subr.bf16.mxu0 0
        %1371 = vmatpush1.bf16.msra.mxu0 0
        %1372 = vmatprep.subr.bf16.mxu0 0
        %1373 = vmatpush1.bf16.msra.mxu0 0
        %1374 = vmatprep.subr.bf16.mxu0 0
        %1375 = vmatpush1.bf16.msra.mxu0 0
        %1376 = vmatprep.mubr.bf16.mxu0 0
        %1377 = vmatmul.mubr.bf16.gmra.mrb[0].mxu0 %v1295
        %v1378 = vpop.f32.mrb[0].mxu0
        %v1379 = vadd.f32 0.0, %v1378
        %v1380 = vpop.f32.mrb[0].mxu0
        %v1381 = vpop.f32.mrb[0].mxu0
        %v1382 = vadd.f32 0.0, %v1381
        %v1383 = vpop.f32.mrb[0].mxu0
        %1384 = vdwg.mxu0
        %v1385 = vpack.c.bf16 %v1382, %v1379
        %1386 = vmatprep.subr.bf16.mxu0 %v608
        %1387 = vmatpush1.bf16.msra.mxu0 %v607
        %1388 = vmatprep.subr.bf16.mxu0 %v612
        %1389 = vmatpush1.bf16.msra.mxu0 %v611
        %1390 = vmatprep.subr.bf16.mxu0 0
        %1391 = vmatpush1.bf16.msra.mxu0 0
        %1392 = vmatprep.subr.bf16.mxu0 0
        %1393 = vmatpush1.bf16.msra.mxu0 0
        %1394 = vmatprep.subr.bf16.mxu0 0
        %1395 = vmatpush1.bf16.msra.mxu0 0
        %1396 = vmatprep.subr.bf16.mxu0 0
        %1397 = vmatpush1.bf16.msra.mxu0 0
        %1398 = vmatprep.subr.bf16.mxu0 0
        %1399 = vmatpush1.bf16.msra.mxu0 0
        %1400 = vmatprep.subr.bf16.mxu0 0
        %1401 = vmatpush1.bf16.msra.mxu0 0
        %1402 = vmatprep.subr.bf16.mxu0 0
        %1403 = vmatpush1.bf16.msra.mxu0 0
        %1404 = vmatprep.subr.bf16.mxu0 0
        %1405 = vmatpush1.bf16.msra.mxu0 0
        %1406 = vmatprep.subr.bf16.mxu0 0
        %1407 = vmatpush1.bf16.msra.mxu0 0
        %1408 = vmatprep.subr.bf16.mxu0 0
        %1409 = vmatpush1.bf16.msra.mxu0 0
        %1410 = vmatprep.subr.bf16.mxu0 0
        %1411 = vmatpush1.bf16.msra.mxu0 0
        %1412 = vmatprep.subr.bf16.mxu0 0
        %1413 = vmatpush1.bf16.msra.mxu0 0
        %1414 = vmatprep.subr.bf16.mxu0 0
        %1415 = vmatpush1.bf16.msra.mxu0 0
        %1416 = vmatprep.subr.bf16.mxu0 0
        %1417 = vmatpush1.bf16.msra.mxu0 0
        %1418 = vmatprep.mubr.bf16.mxu0 0
        %1419 = vmatmul.mubr.bf16.gmra.mrb[0].mxu0 %v1050
        %v1420 = vpop.f32.mrb[0].mxu0
        %v1421 = vadd.f32 0.0, %v1420
        %v1422 = vpop.f32.mrb[0].mxu0
        %v1423 = vadd.f32 0.0, %v1422
        %v1424 = vpop.f32.mrb[0].mxu0
        %v1425 = vadd.f32 0.0, %v1424
        %v1426 = vpop.f32.mrb[0].mxu0
        %v1427 = vadd.f32 0.0, %v1426
        %1428 = vdwg.mxu0
        %1429 = vmatprep.subr.bf16.mxu0 %v610
        %1430 = vmatpush1.bf16.msra.mxu0 %v609
        %1431 = vmatprep.subr.bf16.mxu0 %v614
        %1432 = vmatpush1.bf16.msra.mxu0 %v613
        %1433 = vmatprep.subr.bf16.mxu0 0
        %1434 = vmatpush1.bf16.msra.mxu0 0
        %1435 = vmatprep.subr.bf16.mxu0 0
        %1436 = vmatpush1.bf16.msra.mxu0 0
        %1437 = vmatprep.subr.bf16.mxu0 0
        %1438 = vmatpush1.bf16.msra.mxu0 0
        %1439 = vmatprep.subr.bf16.mxu0 0
        %1440 = vmatpush1.bf16.msra.mxu0 0
        %1441 = vmatprep.subr.bf16.mxu0 0
        %1442 = vmatpush1.bf16.msra.mxu0 0
        %1443 = vmatprep.subr.bf16.mxu0 0
        %1444 = vmatpush1.bf16.msra.mxu0 0
        %1445 = vmatprep.subr.bf16.mxu0 0
        %1446 = vmatpush1.bf16.msra.mxu0 0
        %1447 = vmatprep.subr.bf16.mxu0 0
        %1448 = vmatpush1.bf16.msra.mxu0 0
        %1449 = vmatprep.subr.bf16.mxu0 0
        %1450 = vmatpush1.bf16.msra.mxu0 0
        %1451 = vmatprep.subr.bf16.mxu0 0
        %1452 = vmatpush1.bf16.msra.mxu0 0
        %1453 = vmatprep.subr.bf16.mxu0 0
        %1454 = vmatpush1.bf16.msra.mxu0 0
        %1455 = vmatprep.subr.bf16.mxu0 0
        %1456 = vmatpush1.bf16.msra.mxu0 0
        %1457 = vmatprep.subr.bf16.mxu0 0
        %1458 = vmatpush1.bf16.msra.mxu0 0
        %1459 = vmatprep.subr.bf16.mxu0 0
        %1460 = vmatpush1.bf16.msra.mxu0 0
        %1461 = vmatprep.mubr.bf16.mxu0 0
        %1462 = vmatmul.mubr.bf16.gmra.mrb[0].mxu0 %v1050
        %v1463 = vpop.f32.mrb[0].mxu0
        %v1464 = vadd.f32 0.0, %v1463
        %v1465 = vpop.f32.mrb[0].mxu0
        %v1466 = vadd.f32 0.0, %v1465
        %v1467 = vpop.f32.mrb[0].mxu0
        %v1468 = vadd.f32 0.0, %v1467
        %v1469 = vpop.f32.mrb[0].mxu0
        %v1470 = vadd.f32 0.0, %v1469
        %1471 = vdwg.mxu0
        %v1473 = vsel %vm733, %v1385, 0
        %1475 = vmatprep.subr.bf16.mxu0 %v726
        %1476 = vmatpush1.bf16.msra.mxu0 %v725
        %1477 = vmatprep.subr.bf16.mxu0 0
        %1478 = vmatpush1.bf16.msra.mxu0 0
        %1479 = vmatprep.subr.bf16.mxu0 0
        %1480 = vmatpush1.bf16.msra.mxu0 0
        %1481 = vmatprep.subr.bf16.mxu0 0
        %1482 = vmatpush1.bf16.msra.mxu0 0
        %1483 = vmatprep.subr.bf16.mxu0 0
        %1484 = vmatpush1.bf16.msra.mxu0 0
        %1485 = vmatprep.subr.bf16.mxu0 0
        %1486 = vmatpush1.bf16.msra.mxu0 0
        %1487 = vmatprep.subr.bf16.mxu0 0
        %1488 = vmatpush1.bf16.msra.mxu0 0
        %1489 = vmatprep.subr.bf16.mxu0 0
        %1490 = vmatpush1.bf16.msra.mxu0 0
        %1491 = vmatprep.subr.bf16.mxu0 0
        %1492 = vmatpush1.bf16.msra.mxu0 0
        %1493 = vmatprep.subr.bf16.mxu0 0
        %1494 = vmatpush1.bf16.msra.mxu0 0
        %1495 = vmatprep.subr.bf16.mxu0 0
        %1496 = vmatpush1.bf16.msra.mxu0 0
        %1497 = vmatprep.subr.bf16.mxu0 0
        %1498 = vmatpush1.bf16.msra.mxu0 0
        %1499 = vmatprep.subr.bf16.mxu0 0
        %1500 = vmatpush1.bf16.msra.mxu0 0
        %1501 = vmatprep.subr.bf16.mxu0 0
        %1502 = vmatpush1.bf16.msra.mxu0 0
        %1503 = vmatprep.subr.bf16.mxu0 0
        %1504 = vmatpush1.bf16.msra.mxu0 0
        %1505 = vmatprep.subr.bf16.mxu0 0
        %1506 = vmatpush1.bf16.msra.mxu0 0
        %1507 = vmatprep.mubr.bf16.mxu0 0
        %1508 = vmatmul.mubr.bf16.gmra.mrb[0].mxu0 %v1473
        %v1509 = vpop.f32.mrb[0].mxu0
        %v1510 = vadd.f32 %v1421, %v1509
        %v1511 = vpop.f32.mrb[0].mxu0
        %v1512 = vadd.f32 %v1423, %v1511
        %v1513 = vpop.f32.mrb[0].mxu0
        %v1514 = vadd.f32 %v1425, %v1513
        %v1515 = vpop.f32.mrb[0].mxu0
        %v1516 = vadd.f32 %v1427, %v1515
        %1517 = vdwg.mxu0
        %1518 = vmatprep.subr.bf16.mxu0 %v728
        %1519 = vmatpush1.bf16.msra.mxu0 %v727
        %1520 = vmatprep.subr.bf16.mxu0 0
        %1521 = vmatpush1.bf16.msra.mxu0 0
        %1522 = vmatprep.subr.bf16.mxu0 0
        %1523 = vmatpush1.bf16.msra.mxu0 0
        %1524 = vmatprep.subr.bf16.mxu0 0
        %1525 = vmatpush1.bf16.msra.mxu0 0
        %1526 = vmatprep.subr.bf16.mxu0 0
        %1527 = vmatpush1.bf16.msra.mxu0 0
        %1528 = vmatprep.subr.bf16.mxu0 0
        %1529 = vmatpush1.bf16.msra.mxu0 0
        %1530 = vmatprep.subr.bf16.mxu0 0
        %1531 = vmatpush1.bf16.msra.mxu0 0
        %1532 = vmatprep.subr.bf16.mxu0 0
        %1533 = vmatpush1.bf16.msra.mxu0 0
        %1534 = vmatprep.subr.bf16.mxu0 0
        %1535 = vmatpush1.bf16.msra.mxu0 0
        %1536 = vmatprep.subr.bf16.mxu0 0
        %1537 = vmatpush1.bf16.msra.mxu0 0
        %1538 = vmatprep.subr.bf16.mxu0 0
        %1539 = vmatpush1.bf16.msra.mxu0 0
        %1540 = vmatprep.subr.bf16.mxu0 0
        %1541 = vmatpush1.bf16.msra.mxu0 0
        %1542 = vmatprep.subr.bf16.mxu0 0
        %1543 = vmatpush1.bf16.msra.mxu0 0
        %1544 = vmatprep.subr.bf16.mxu0 0
        %1545 = vmatpush1.bf16.msra.mxu0 0
        %1546 = vmatprep.subr.bf16.mxu0 0
        %1547 = vmatpush1.bf16.msra.mxu0 0
        %1548 = vmatprep.subr.bf16.mxu0 0
        %1549 = vmatpush1.bf16.msra.mxu0 0
        %1550 = vmatprep.mubr.bf16.mxu0 0
        %1551 = vmatmul.mubr.bf16.gmra.mrb[0].mxu0 %v1473
        %v1552 = vpop.f32.mrb[0].mxu0
        %v1553 = vadd.f32 %v1464, %v1552
        %v1554 = vpop.f32.mrb[0].mxu0
        %v1555 = vadd.f32 %v1466, %v1554
        %v1556 = vpop.f32.mrb[0].mxu0
        %v1557 = vadd.f32 %v1468, %v1556
        %v1558 = vpop.f32.mrb[0].mxu0
        %v1559 = vadd.f32 %v1470, %v1558
        %1560 = vdwg.mxu0
        %v1561 = vadd.f32 %v1510, %v522
        %v1562 = vadd.f32 %v1512, %v526
        %v1563 = vadd.f32 %v1553, %v530
        %v1564 = vadd.f32 %v1555, %v534
        %v1565 = vadd.f32 %v1514, %v522
        %v1566 = vadd.f32 %v1516, %v526
        %v1567 = vadd.f32 %v1557, %v530
        %v1568 = vadd.f32 %v1559, %v534
        %v1569 = vxor.u32 %v1561, 2147483648
        %v1570 = vxor.u32 %v1565, 2147483648
        %v1571 = vmul.f32 %v1569, 1.442695
        %v1572 = vpow.pop %v1571
        %v1573 = vmul.f32 %v1570, 1.442695
        %v1574 = vpow.pop %v1573
        %v1575 = vadd.f32 %v1572, 1.0
        %v1576 = vadd.f32 %v1574, 1.0
        %v1577 = vrcp.pop %v1575
        %v1578 = vmul.f32 1.0, %v1577
        %v1579 = vrcp.pop %v1576
        %v1580 = vmul.f32 1.0, %v1579
        %v1581 = vxor.u32 %v1562, 2147483648
        %v1582 = vxor.u32 %v1566, 2147483648
        %v1583 = vmul.f32 %v1581, 1.442695
        %v1584 = vpow.pop %v1583
        %v1585 = vmul.f32 %v1582, 1.442695
        %v1586 = vpow.pop %v1585
        %v1587 = vadd.f32 %v1584, 1.0
        %v1588 = vadd.f32 %v1586, 1.0
        %v1589 = vrcp.pop %v1587
        %v1590 = vmul.f32 1.0, %v1589
        %v1591 = vrcp.pop %v1588
        %v1592 = vmul.f32 1.0, %v1591
        %v1593 = vtanh.pop %v1563
        %v1594 = vtanh.pop %v1567
        %v1595 = vxor.u32 %v1564, 2147483648
        %v1596 = vxor.u32 %v1568, 2147483648
        %v1597 = vmul.f32 %v1595, 1.442695
        %v1598 = vpow.pop %v1597
        %v1599 = vmul.f32 %v1596, 1.442695
        %v1600 = vpow.pop %v1599
        %v1601 = vadd.f32 %v1598, 1.0
        %v1602 = vadd.f32 %v1600, 1.0
        %v1603 = vrcp.pop %v1601
        %v1604 = vmul.f32 1.0, %v1603
        %v1605 = vrcp.pop %v1602
        %v1606 = vmul.f32 1.0, %v1605
        %v1607 = vmul.f32 %v1590, %v873
        %v1608 = vmul.f32 %v1592, %v874
        %v1609 = vmul.f32 %v1578, %v1593
        %v1610 = vmul.f32 %v1580, %v1594
        %v1611 = vadd.f32 %v1607, %v1609
        %v1612 = vadd.f32 %v1608, %v1610
        %v1613 = vtanh.pop %v1611
        %v1614 = vtanh.pop %v1612
        %v1615 = vmul.f32 %v1604, %v1613
        %v1616 = vmul.f32 %v1606, %v1614
        %v1617 = vpack.c.bf16 %v1616, %v1615
        %1618 = vmatprep.subr.bf16.mxu0 %v905
        %1619 = vmatpush1.bf16.msra.mxu0 %v904
        %1620 = vmatprep.subr.bf16.mxu0 %v909
        %1621 = vmatpush1.bf16.msra.mxu0 %v908
        %1622 = vmatprep.subr.bf16.mxu0 0
        %1623 = vmatpush1.bf16.msra.mxu0 0
        %1624 = vmatprep.subr.bf16.mxu0 0
        %1625 = vmatpush1.bf16.msra.mxu0 0
        %1626 = vmatprep.subr.bf16.mxu0 0
        %1627 = vmatpush1.bf16.msra.mxu0 0
        %1628 = vmatprep.subr.bf16.mxu0 0
        %1629 = vmatpush1.bf16.msra.mxu0 0
        %1630 = vmatprep.subr.bf16.mxu0 0
        %1631 = vmatpush1.bf16.msra.mxu0 0
        %1632 = vmatprep.subr.bf16.mxu0 0
        %1633 = vmatpush1.bf16.msra.mxu0 0
        %1634 = vmatprep.subr.bf16.mxu0 0
        %1635 = vmatpush1.bf16.msra.mxu0 0
        %1636 = vmatprep.subr.bf16.mxu0 0
        %1637 = vmatpush1.bf16.msra.mxu0 0
        %1638 = vmatprep.subr.bf16.mxu0 0
        %1639 = vmatpush1.bf16.msra.mxu0 0
        %1640 = vmatprep.subr.bf16.mxu0 0
        %1641 = vmatpush1.bf16.msra.mxu0 0
        %1642 = vmatprep.subr.bf16.mxu0 0
        %1643 = vmatpush1.bf16.msra.mxu0 0
        %1644 = vmatprep.subr.bf16.mxu0 0
        %1645 = vmatpush1.bf16.msra.mxu0 0
        %1646 = vmatprep.subr.bf16.mxu0 0
        %1647 = vmatpush1.bf16.msra.mxu0 0
        %1648 = vmatprep.subr.bf16.mxu0 0
        %1649 = vmatpush1.bf16.msra.mxu0 0
        %1650 = vmatprep.mubr.bf16.mxu0 0
        %1651 = vmatmul.mubr.bf16.gmra.mrb[0].mxu0 %v1208
        %v1652 = vpop.f32.mrb[0].mxu0
        %v1653 = vadd.f32 0.0, %v1652
        %v1654 = vpop.f32.mrb[0].mxu0
        %v1655 = vadd.f32 0.0, %v1654
        %v1656 = vpop.f32.mrb[0].mxu0
        %v1657 = vadd.f32 0.0, %v1656
        %v1658 = vpop.f32.mrb[0].mxu0
        %v1659 = vadd.f32 0.0, %v1658
        %1660 = vdwg.mxu0
        %1661 = vmatprep.subr.bf16.mxu0 %v907
        %1662 = vmatpush1.bf16.msra.mxu0 %v906
        %1663 = vmatprep.subr.bf16.mxu0 %v911
        %1664 = vmatpush1.bf16.msra.mxu0 %v910
        %1665 = vmatprep.subr.bf16.mxu0 0
        %1666 = vmatpush1.bf16.msra.mxu0 0
        %1667 = vmatprep.subr.bf16.mxu0 0
        %1668 = vmatpush1.bf16.msra.mxu0 0
        %1669 = vmatprep.subr.bf16.mxu0 0
        %1670 = vmatpush1.bf16.msra.mxu0 0
        %1671 = vmatprep.subr.bf16.mxu0 0
        %1672 = vmatpush1.bf16.msra.mxu0 0
        %1673 = vmatprep.subr.bf16.mxu0 0
        %1674 = vmatpush1.bf16.msra.mxu0 0
        %1675 = vmatprep.subr.bf16.mxu0 0
        %1676 = vmatpush1.bf16.msra.mxu0 0
        %1677 = vmatprep.subr.bf16.mxu0 0
        %1678 = vmatpush1.bf16.msra.mxu0 0
        %1679 = vmatprep.subr.bf16.mxu0 0
        %1680 = vmatpush1.bf16.msra.mxu0 0
        %1681 = vmatprep.subr.bf16.mxu0 0
        %1682 = vmatpush1.bf16.msra.mxu0 0
        %1683 = vmatprep.subr.bf16.mxu0 0
        %1684 = vmatpush1.bf16.msra.mxu0 0
        %1685 = vmatprep.subr.bf16.mxu0 0
        %1686 = vmatpush1.bf16.msra.mxu0 0
        %1687 = vmatprep.subr.bf16.mxu0 0
        %1688 = vmatpush1.bf16.msra.mxu0 0
        %1689 = vmatprep.subr.bf16.mxu0 0
        %1690 = vmatpush1.bf16.msra.mxu0 0
        %1691 = vmatprep.subr.bf16.mxu0 0
        %1692 = vmatpush1.bf16.msra.mxu0 0
        %1693 = vmatprep.mubr.bf16.mxu0 0
        %1694 = vmatmul.mubr.bf16.gmra.mrb[0].mxu0 %v1208
        %v1695 = vpop.f32.mrb[0].mxu0
        %v1696 = vadd.f32 0.0, %v1695
        %v1697 = vpop.f32.mrb[0].mxu0
        %v1698 = vadd.f32 0.0, %v1697
        %v1699 = vpop.f32.mrb[0].mxu0
        %v1700 = vadd.f32 0.0, %v1699
        %v1701 = vpop.f32.mrb[0].mxu0
        %v1702 = vadd.f32 0.0, %v1701
        %1703 = vdwg.mxu0
        %v1705 = vsel %vm623, %v1617, 0
        %1707 = vmatprep.subr.bf16.mxu0 %v1034
        %1708 = vmatpush1.bf16.msra.mxu0 %v1033
        %1709 = vmatprep.subr.bf16.mxu0 %v1038
        %1710 = vmatpush1.bf16.msra.mxu0 %v1037
        %1711 = vmatprep.subr.bf16.mxu0 0
        %1712 = vmatpush1.bf16.msra.mxu0 0
        %1713 = vmatprep.subr.bf16.mxu0 0
        %1714 = vmatpush1.bf16.msra.mxu0 0
        %1715 = vmatprep.subr.bf16.mxu0 0
        %1716 = vmatpush1.bf16.msra.mxu0 0
        %1717 = vmatprep.subr.bf16.mxu0 0
        %1718 = vmatpush1.bf16.msra.mxu0 0
        %1719 = vmatprep.subr.bf16.mxu0 0
        %1720 = vmatpush1.bf16.msra.mxu0 0
        %1721 = vmatprep.subr.bf16.mxu0 0
        %1722 = vmatpush1.bf16.msra.mxu0 0
        %1723 = vmatprep.subr.bf16.mxu0 0
        %1724 = vmatpush1.bf16.msra.mxu0 0
        %1725 = vmatprep.subr.bf16.mxu0 0
        %1726 = vmatpush1.bf16.msra.mxu0 0
        %1727 = vmatprep.subr.bf16.mxu0 0
        %1728 = vmatpush1.bf16.msra.mxu0 0
        %1729 = vmatprep.subr.bf16.mxu0 0
        %1730 = vmatpush1.bf16.msra.mxu0 0
        %1731 = vmatprep.subr.bf16.mxu0 0
        %1732 = vmatpush1.bf16.msra.mxu0 0
        %1733 = vmatprep.subr.bf16.mxu0 0
        %1734 = vmatpush1.bf16.msra.mxu0 0
        %1735 = vmatprep.subr.bf16.mxu0 0
        %1736 = vmatpush1.bf16.msra.mxu0 0
        %1737 = vmatprep.subr.bf16.mxu0 0
        %1738 = vmatpush1.bf16.msra.mxu0 0
        %1739 = vmatprep.mubr.bf16.mxu0 0
        %1740 = vmatmul.mubr.bf16.gmra.mrb[0].mxu0 %v1705
        %v1741 = vpop.f32.mrb[0].mxu0
        %v1742 = vadd.f32 %v1653, %v1741
        %v1743 = vpop.f32.mrb[0].mxu0
        %v1744 = vadd.f32 %v1655, %v1743
        %v1745 = vpop.f32.mrb[0].mxu0
        %v1746 = vadd.f32 %v1657, %v1745
        %v1747 = vpop.f32.mrb[0].mxu0
        %v1748 = vadd.f32 %v1659, %v1747
        %1749 = vdwg.mxu0
        %1750 = vmatprep.subr.bf16.mxu0 %v1036
        %1751 = vmatpush1.bf16.msra.mxu0 %v1035
        %1752 = vmatprep.subr.bf16.mxu0 %v1040
        %1753 = vmatpush1.bf16.msra.mxu0 %v1039
        %1754 = vmatprep.subr.bf16.mxu0 0
        %1755 = vmatpush1.bf16.msra.mxu0 0
        %1756 = vmatprep.subr.bf16.mxu0 0
        %1757 = vmatpush1.bf16.msra.mxu0 0
        %1758 = vmatprep.subr.bf16.mxu0 0
        %1759 = vmatpush1.bf16.msra.mxu0 0
        %1760 = vmatprep.subr.bf16.mxu0 0
        %1761 = vmatpush1.bf16.msra.mxu0 0
        %1762 = vmatprep.subr.bf16.mxu0 0
        %1763 = vmatpush1.bf16.msra.mxu0 0
        %1764 = vmatprep.subr.bf16.mxu0 0
        %1765 = vmatpush1.bf16.msra.mxu0 0
        %1766 = vmatprep.subr.bf16.mxu0 0
        %1767 = vmatpush1.bf16.msra.mxu0 0
        %1768 = vmatprep.subr.bf16.mxu0 0
        %1769 = vmatpush1.bf16.msra.mxu0 0
        %1770 = vmatprep.subr.bf16.mxu0 0
        %1771 = vmatpush1.bf16.msra.mxu0 0
        %1772 = vmatprep.subr.bf16.mxu0 0
        %1773 = vmatpush1.bf16.msra.mxu0 0
        %1774 = vmatprep.subr.bf16.mxu0 0
        %1775 = vmatpush1.bf16.msra.mxu0 0
        %1776 = vmatprep.subr.bf16.mxu0 0
        %1777 = vmatpush1.bf16.msra.mxu0 0
        %1778 = vmatprep.subr.bf16.mxu0 0
        %1779 = vmatpush1.bf16.msra.mxu0 0
        %1780 = vmatprep.subr.bf16.mxu0 0
        %1781 = vmatpush1.bf16.msra.mxu0 0
        %1782 = vmatprep.mubr.bf16.mxu0 0
        %1783 = vmatmul.mubr.bf16.gmra.mrb[0].mxu0 %v1705
        %v1784 = vpop.f32.mrb[0].mxu0
        %v1785 = vadd.f32 %v1696, %v1784
        %v1786 = vpop.f32.mrb[0].mxu0
        %v1787 = vadd.f32 %v1698, %v1786
        %v1788 = vpop.f32.mrb[0].mxu0
        %v1789 = vadd.f32 %v1700, %v1788
        %v1790 = vpop.f32.mrb[0].mxu0
        %v1791 = vadd.f32 %v1702, %v1790
        %1792 = vdwg.mxu0
        %v1793 = vadd.f32 %v1742, %v544
        %v1794 = vadd.f32 %v1744, %v548
        %v1795 = vadd.f32 %v1785, %v552
        %v1796 = vadd.f32 %v1787, %v556
        %v1797 = vadd.f32 %v1746, %v544
        %v1798 = vadd.f32 %v1748, %v548
        %v1799 = vadd.f32 %v1789, %v552
        %v1800 = vadd.f32 %v1791, %v556
        %v1801 = vxor.u32 %v1793, 2147483648
        %v1802 = vxor.u32 %v1797, 2147483648
        %v1803 = vmul.f32 %v1801, 1.442695
        %v1804 = vpow.pop %v1803
        %v1805 = vmul.f32 %v1802, 1.442695
        %v1806 = vpow.pop %v1805
        %v1807 = vadd.f32 %v1804, 1.0
        %v1808 = vadd.f32 %v1806, 1.0
        %v1809 = vrcp.pop %v1807
        %v1810 = vmul.f32 1.0, %v1809
        %v1811 = vrcp.pop %v1808
        %v1812 = vmul.f32 1.0, %v1811
        %v1813 = vxor.u32 %v1794, 2147483648
        %v1814 = vxor.u32 %v1798, 2147483648
        %v1815 = vmul.f32 %v1813, 1.442695
        %v1816 = vpow.pop %v1815
        %v1817 = vmul.f32 %v1814, 1.442695
        %v1818 = vpow.pop %v1817
        %v1819 = vadd.f32 %v1816, 1.0
        %v1820 = vadd.f32 %v1818, 1.0
        %v1821 = vrcp.pop %v1819
        %v1822 = vmul.f32 1.0, %v1821
        %v1823 = vrcp.pop %v1820
        %v1824 = vmul.f32 1.0, %v1823
        %v1825 = vtanh.pop %v1795
        %v1826 = vtanh.pop %v1799
        %v1827 = vxor.u32 %v1796, 2147483648
        %v1828 = vxor.u32 %v1800, 2147483648
        %v1829 = vmul.f32 %v1827, 1.442695
        %v1830 = vpow.pop %v1829
        %v1831 = vmul.f32 %v1828, 1.442695
        %v1832 = vpow.pop %v1831
        %v1833 = vadd.f32 %v1830, 1.0
        %v1834 = vadd.f32 %v1832, 1.0
        %v1835 = vrcp.pop %v1833
        %v1836 = vmul.f32 1.0, %v1835
        %v1837 = vrcp.pop %v1834
        %v1838 = vmul.f32 1.0, %v1837
        %v1839 = vmul.f32 %v1822, %v1188
        %v1840 = vmul.f32 %v1824, %v1189
        %v1841 = vmul.f32 %v1810, %v1825
        %v1842 = vmul.f32 %v1812, %v1826
        %v1843 = vadd.f32 %v1839, %v1841
        %v1844 = vadd.f32 %v1840, %v1842
        %v1845 = vtanh.pop %v1843
        %v1846 = vtanh.pop %v1844
        %v1847 = vmul.f32 %v1836, %v1845
        %v1848 = vmul.f32 %v1838, %v1846
        %v1849 = vpack.c.bf16 %v1848, %v1847
        %v1851 = vsel %vm623, %v1849, 0
        %1853 = vmatprep.subr.bf16.mxu0 0
        %1854 = vmatpush1.bf16.msra.mxu0 %v1203
        %1855 = vmatprep.subr.bf16.mxu0 0
        %1856 = vmatpush1.bf16.msra.mxu0 %v1204
        %1857 = vmatprep.subr.bf16.mxu0 0
        %1858 = vmatpush1.bf16.msra.mxu0 0
        %1859 = vmatprep.subr.bf16.mxu0 0
        %1860 = vmatpush1.bf16.msra.mxu0 0
        %1861 = vmatprep.subr.bf16.mxu0 0
        %1862 = vmatpush1.bf16.msra.mxu0 0
        %1863 = vmatprep.subr.bf16.mxu0 0
        %1864 = vmatpush1.bf16.msra.mxu0 0
        %1865 = vmatprep.subr.bf16.mxu0 0
        %1866 = vmatpush1.bf16.msra.mxu0 0
        %1867 = vmatprep.subr.bf16.mxu0 0
        %1868 = vmatpush1.bf16.msra.mxu0 0
        %1869 = vmatprep.subr.bf16.mxu0 0
        %1870 = vmatpush1.bf16.msra.mxu0 0
        %1871 = vmatprep.subr.bf16.mxu0 0
        %1872 = vmatpush1.bf16.msra.mxu0 0
        %1873 = vmatprep.subr.bf16.mxu0 0
        %1874 = vmatpush1.bf16.msra.mxu0 0
        %1875 = vmatprep.subr.bf16.mxu0 0
        %1876 = vmatpush1.bf16.msra.mxu0 0
        %1877 = vmatprep.subr.bf16.mxu0 0
        %1878 = vmatpush1.bf16.msra.mxu0 0
        %1879 = vmatprep.subr.bf16.mxu0 0
        %1880 = vmatpush1.bf16.msra.mxu0 0
        %1881 = vmatprep.subr.bf16.mxu0 0
        %1882 = vmatpush1.bf16.msra.mxu0 0
        %1883 = vmatprep.subr.bf16.mxu0 0
        %1884 = vmatpush1.bf16.msra.mxu0 0
        %1885 = vmatprep.mubr.bf16.mxu0 0
        %1886 = vmatmul.mubr.bf16.gmra.mrb[0].mxu0 %v1851
        %v1887 = vpop.f32.mrb[0].mxu0
        %v1888 = vadd.f32 %v570, %v1887
        %v1889 = vpop.f32.mrb[0].mxu0
        %v1890 = vpop.f32.mrb[0].mxu0
        %v1891 = vadd.f32 %v570, %v1890
        %v1892 = vpop.f32.mrb[0].mxu0
        %1893 = vdwg.mxu0
        %s1894 = scalar_lea.vmem %s436, 16 [#allocation14]
        %1895 = vst [vmem:[%s1894] sm:$0xff] %v1888
        %1896 = vst [vmem:[%s1894 + $0x8] sm:$0xff] %v1891
        %1897 = vmax.xlane.f32.xlu0 %v1888
        %v1898 = vpop.xlane.xlu0 %1897
        %1899 = vmax.xlane.f32.xlu0 %v1891
        %v1900 = vpop.xlane.xlu0 %1899
        %vm1901 = vcmp.ge.f32.partialorder %v1888, %v1898
        %vm1902 = vcmp.ge.f32.partialorder %v1891, %v1900
        %v1903 = vsel %vm1901, %v573, 128
        %v1904 = vsel %vm1902, %v573, 128
        %v1905 = vand.u32 %v1903, 65535
        %v1906 = vshra.s32 %v1903, 16
        %v1907 = vcvt.s32.f32 %v1905
        %v1908 = vcvt.s32.f32 %v1906
        %1909 = vmin.xlane.f32.xlu0 %v1908
        %v1910 = vpop.xlane.xlu0 %1909
        %vm1911 = vcmp.eq.f32.partialorder %v1908, %v1910
        %v1912 = vsel %vm1911, %v1907, inf
        %1913 = vmin.xlane.f32.xlu0 %v1912
        %v1914 = vpop.xlane.xlu0 %1913
        %v1915 = vcvt.f32.s32 %v1914
        %v1916 = vcvt.f32.s32 %v1910
        %v1917 = vshll.u32 %v1916, 16
        %v1918 = vadd.s32 %v1917, %v1915
        %v1919 = vand.u32 %v1904, 65535
        %v1920 = vshra.s32 %v1904, 16
        %v1921 = vcvt.s32.f32 %v1919
        %v1922 = vcvt.s32.f32 %v1920
        %1923 = vmin.xlane.f32.xlu0 %v1922
        %v1924 = vpop.xlane.xlu0 %1923
        %vm1925 = vcmp.eq.f32.partialorder %v1922, %v1924
        %v1926 = vsel %vm1925, %v1921, inf
        %1927 = vmin.xlane.f32.xlu0 %v1926
        %v1928 = vpop.xlane.xlu0 %1927
        %v1929 = vcvt.f32.s32 %v1928
        %v1930 = vcvt.f32.s32 %v1924
        %v1931 = vshll.u32 %v1930, 16
        %v1932 = vadd.s32 %v1931, %v1929
        %vm1933 = vcmp.eq.s32.totalorder %v1903, %v1918
        %vm1934 = vcmp.eq.s32.totalorder %v1904, %v1932
        %v1935 = vsel %vm1933, 1, 0
        %v1936 = vsel %vm1934, 1, 0
        %v1937 = vcvt.s32.f32 %v1935
        %v1938 = vcvt.s32.f32 %v1936
        %v1939 = vpack.c.bf16 %v1938, %v1937
        %1940 = vmatprep.subr.bf16.mxu0 0
        %1941 = vmatpush1.bf16.msra.mxu0 %v1328
        %1942 = vmatprep.subr.bf16.mxu0 0
        %1943 = vmatpush1.bf16.msra.mxu0 %v1329
        %1944 = vmatprep.subr.bf16.mxu0 0
        %1945 = vmatpush1.bf16.msra.mxu0 %v1330
        %1946 = vmatprep.subr.bf16.mxu0 0
        %1947 = vmatpush1.bf16.msra.mxu0 %v1331
        %1948 = vmatprep.subr.bf16.mxu0 0
        %1949 = vmatpush1.bf16.msra.mxu0 %v1332
        %1950 = vmatprep.subr.bf16.mxu0 0
        %1951 = vmatpush1.bf16.msra.mxu0 %v1333
        %1952 = vmatprep.subr.bf16.mxu0 0
        %1953 = vmatpush1.bf16.msra.mxu0 %v1334
        %1954 = vmatprep.subr.bf16.mxu0 0
        %1955 = vmatpush1.bf16.msra.mxu0 %v1335
        %1956 = vmatprep.subr.bf16.mxu0 0
        %1957 = vmatpush1.bf16.msra.mxu0 0
        %1958 = vmatprep.subr.bf16.mxu0 0
        %1959 = vmatpush1.bf16.msra.mxu0 0
        %1960 = vmatprep.subr.bf16.mxu0 0
        %1961 = vmatpush1.bf16.msra.mxu0 0
        %1962 = vmatprep.subr.bf16.mxu0 0
        %1963 = vmatpush1.bf16.msra.mxu0 0
        %1964 = vmatprep.subr.bf16.mxu0 0
        %1965 = vmatpush1.bf16.msra.mxu0 0
        %1966 = vmatprep.subr.bf16.mxu0 0
        %1967 = vmatpush1.bf16.msra.mxu0 0
        %1968 = vmatprep.subr.bf16.mxu0 0
        %1969 = vmatpush1.bf16.msra.mxu0 0
        %1970 = vmatprep.subr.bf16.mxu0 0
        %1971 = vmatpush1.bf16.msra.mxu0 0
        %1972 = vmatprep.mubr.bf16.mxu0 0
        %1973 = vmatmul.mubr.bf16.gmra.mrb[0].mxu0 %v1939
        %v1974 = vpop.f32.mrb[0].mxu0
        %v1975 = vadd.f32 0.0, %v1974
        %v1976 = vpop.f32.mrb[0].mxu0
        %v1977 = vpop.f32.mrb[0].mxu0
        %v1978 = vadd.f32 0.0, %v1977
        %v1979 = vpop.f32.mrb[0].mxu0
        %1980 = vdwg.mxu0
        %v1981 = vpack.c.bf16 %v1978, %v1975
        %1982 = vmatprep.subr.bf16.mxu0 %v608
        %1983 = vmatpush1.bf16.msra.mxu0 %v607
        %1984 = vmatprep.subr.bf16.mxu0 %v612
        %1985 = vmatpush1.bf16.msra.mxu0 %v611
        %1986 = vmatprep.subr.bf16.mxu0 0
        %1987 = vmatpush1.bf16.msra.mxu0 0
        %1988 = vmatprep.subr.bf16.mxu0 0
        %1989 = vmatpush1.bf16.msra.mxu0 0
        %1990 = vmatprep.subr.bf16.mxu0 0
        %1991 = vmatpush1.bf16.msra.mxu0 0
        %1992 = vmatprep.subr.bf16.mxu0 0
        %1993 = vmatpush1.bf16.msra.mxu0 0
        %1994 = vmatprep.subr.bf16.mxu0 0
        %1995 = vmatpush1.bf16.msra.mxu0 0
        %1996 = vmatprep.subr.bf16.mxu0 0
        %1997 = vmatpush1.bf16.msra.mxu0 0
        %1998 = vmatprep.subr.bf16.mxu0 0
        %1999 = vmatpush1.bf16.msra.mxu0 0
        %2000 = vmatprep.subr.bf16.mxu0 0
        %2001 = vmatpush1.bf16.msra.mxu0 0
        %2002 = vmatprep.subr.bf16.mxu0 0
        %2003 = vmatpush1.bf16.msra.mxu0 0
        %2004 = vmatprep.subr.bf16.mxu0 0
        %2005 = vmatpush1.bf16.msra.mxu0 0
        %2006 = vmatprep.subr.bf16.mxu0 0
        %2007 = vmatpush1.bf16.msra.mxu0 0
        %2008 = vmatprep.subr.bf16.mxu0 0
        %2009 = vmatpush1.bf16.msra.mxu0 0
        %2010 = vmatprep.subr.bf16.mxu0 0
        %2011 = vmatpush1.bf16.msra.mxu0 0
        %2012 = vmatprep.subr.bf16.mxu0 0
        %2013 = vmatpush1.bf16.msra.mxu0 0
        %2014 = vmatprep.mubr.bf16.mxu0 0
        %2015 = vmatmul.mubr.bf16.gmra.mrb[0].mxu0 %v1705
        %v2016 = vpop.f32.mrb[0].mxu0
        %v2017 = vadd.f32 0.0, %v2016
        %v2018 = vpop.f32.mrb[0].mxu0
        %v2019 = vadd.f32 0.0, %v2018
        %v2020 = vpop.f32.mrb[0].mxu0
        %v2021 = vadd.f32 0.0, %v2020
        %v2022 = vpop.f32.mrb[0].mxu0
        %v2023 = vadd.f32 0.0, %v2022
        %2024 = vdwg.mxu0
        %2025 = vmatprep.subr.bf16.mxu0 %v610
        %2026 = vmatpush1.bf16.msra.mxu0 %v609
        %2027 = vmatprep.subr.bf16.mxu0 %v614
        %2028 = vmatpush1.bf16.msra.mxu0 %v613
        %2029 = vmatprep.subr.bf16.mxu0 0
        %2030 = vmatpush1.bf16.msra.mxu0 0
        %2031 = vmatprep.subr.bf16.mxu0 0
        %2032 = vmatpush1.bf16.msra.mxu0 0
        %2033 = vmatprep.subr.bf16.mxu0 0
        %2034 = vmatpush1.bf16.msra.mxu0 0
        %2035 = vmatprep.subr.bf16.mxu0 0
        %2036 = vmatpush1.bf16.msra.mxu0 0
        %2037 = vmatprep.subr.bf16.mxu0 0
        %2038 = vmatpush1.bf16.msra.mxu0 0
        %2039 = vmatprep.subr.bf16.mxu0 0
        %2040 = vmatpush1.bf16.msra.mxu0 0
        %2041 = vmatprep.subr.bf16.mxu0 0
        %2042 = vmatpush1.bf16.msra.mxu0 0
        %2043 = vmatprep.subr.bf16.mxu0 0
        %2044 = vmatpush1.bf16.msra.mxu0 0
        %2045 = vmatprep.subr.bf16.mxu0 0
        %2046 = vmatpush1.bf16.msra.mxu0 0
        %2047 = vmatprep.subr.bf16.mxu0 0
        %2048 = vmatpush1.bf16.msra.mxu0 0
        %2049 = vmatprep.subr.bf16.mxu0 0
        %2050 = vmatpush1.bf16.msra.mxu0 0
        %2051 = vmatprep.subr.bf16.mxu0 0
        %2052 = vmatpush1.bf16.msra.mxu0 0
        %2053 = vmatprep.subr.bf16.mxu0 0
        %2054 = vmatpush1.bf16.msra.mxu0 0
        %2055 = vmatprep.subr.bf16.mxu0 0
        %2056 = vmatpush1.bf16.msra.mxu0 0
        %2057 = vmatprep.mubr.bf16.mxu0 0
        %2058 = vmatmul.mubr.bf16.gmra.mrb[0].mxu0 %v1705
        %v2059 = vpop.f32.mrb[0].mxu0
        %v2060 = vadd.f32 0.0, %v2059
        %v2061 = vpop.f32.mrb[0].mxu0
        %v2062 = vadd.f32 0.0, %v2061
        %v2063 = vpop.f32.mrb[0].mxu0
        %v2064 = vadd.f32 0.0, %v2063
        %v2065 = vpop.f32.mrb[0].mxu0
        %v2066 = vadd.f32 0.0, %v2065
        %2067 = vdwg.mxu0
        %v2069 = vsel %vm733, %v1981, 0
        %2071 = vmatprep.subr.bf16.mxu0 %v726
        %2072 = vmatpush1.bf16.msra.mxu0 %v725
        %2073 = vmatprep.subr.bf16.mxu0 0
        %2074 = vmatpush1.bf16.msra.mxu0 0
        %2075 = vmatprep.subr.bf16.mxu0 0
        %2076 = vmatpush1.bf16.msra.mxu0 0
        %2077 = vmatprep.subr.bf16.mxu0 0
        %2078 = vmatpush1.bf16.msra.mxu0 0
        %2079 = vmatprep.subr.bf16.mxu0 0
        %2080 = vmatpush1.bf16.msra.mxu0 0
        %2081 = vmatprep.subr.bf16.mxu0 0
        %2082 = vmatpush1.bf16.msra.mxu0 0
        %2083 = vmatprep.subr.bf16.mxu0 0
        %2084 = vmatpush1.bf16.msra.mxu0 0
        %2085 = vmatprep.subr.bf16.mxu0 0
        %2086 = vmatpush1.bf16.msra.mxu0 0
        %2087 = vmatprep.subr.bf16.mxu0 0
        %2088 = vmatpush1.bf16.msra.mxu0 0
        %2089 = vmatprep.subr.bf16.mxu0 0
        %2090 = vmatpush1.bf16.msra.mxu0 0
        %2091 = vmatprep.subr.bf16.mxu0 0
        %2092 = vmatpush1.bf16.msra.mxu0 0
        %2093 = vmatprep.subr.bf16.mxu0 0
        %2094 = vmatpush1.bf16.msra.mxu0 0
        %2095 = vmatprep.subr.bf16.mxu0 0
        %2096 = vmatpush1.bf16.msra.mxu0 0
        %2097 = vmatprep.subr.bf16.mxu0 0
        %2098 = vmatpush1.bf16.msra.mxu0 0
        %2099 = vmatprep.subr.bf16.mxu0 0
        %2100 = vmatpush1.bf16.msra.mxu0 0
        %2101 = vmatprep.subr.bf16.mxu0 0
        %2102 = vmatpush1.bf16.msra.mxu0 0
        %2103 = vmatprep.mubr.bf16.mxu0 0
        %2104 = vmatmul.mubr.bf16.gmra.mrb[0].mxu0 %v2069
        %v2105 = vpop.f32.mrb[0].mxu0
        %v2106 = vadd.f32 %v2017, %v2105
        %v2107 = vpop.f32.mrb[0].mxu0
        %v2108 = vadd.f32 %v2019, %v2107
        %v2109 = vpop.f32.mrb[0].mxu0
        %v2110 = vadd.f32 %v2021, %v2109
        %v2111 = vpop.f32.mrb[0].mxu0
        %v2112 = vadd.f32 %v2023, %v2111
        %2113 = vdwg.mxu0
        %2114 = vmatprep.subr.bf16.mxu0 %v728
        %2115 = vmatpush1.bf16.msra.mxu0 %v727
        %2116 = vmatprep.subr.bf16.mxu0 0
        %2117 = vmatpush1.bf16.msra.mxu0 0
        %2118 = vmatprep.subr.bf16.mxu0 0
        %2119 = vmatpush1.bf16.msra.mxu0 0
        %2120 = vmatprep.subr.bf16.mxu0 0
        %2121 = vmatpush1.bf16.msra.mxu0 0
        %2122 = vmatprep.subr.bf16.mxu0 0
        %2123 = vmatpush1.bf16.msra.mxu0 0
        %2124 = vmatprep.subr.bf16.mxu0 0
        %2125 = vmatpush1.bf16.msra.mxu0 0
        %2126 = vmatprep.subr.bf16.mxu0 0
        %2127 = vmatpush1.bf16.msra.mxu0 0
        %2128 = vmatprep.subr.bf16.mxu0 0
        %2129 = vmatpush1.bf16.msra.mxu0 0
        %2130 = vmatprep.subr.bf16.mxu0 0
        %2131 = vmatpush1.bf16.msra.mxu0 0
        %2132 = vmatprep.subr.bf16.mxu0 0
        %2133 = vmatpush1.bf16.msra.mxu0 0
        %2134 = vmatprep.subr.bf16.mxu0 0
        %2135 = vmatpush1.bf16.msra.mxu0 0
        %2136 = vmatprep.subr.bf16.mxu0 0
        %2137 = vmatpush1.bf16.msra.mxu0 0
        %2138 = vmatprep.subr.bf16.mxu0 0
        %2139 = vmatpush1.bf16.msra.mxu0 0
        %2140 = vmatprep.subr.bf16.mxu0 0
        %2141 = vmatpush1.bf16.msra.mxu0 0
        %2142 = vmatprep.subr.bf16.mxu0 0
        %2143 = vmatpush1.bf16.msra.mxu0 0
        %2144 = vmatprep.subr.bf16.mxu0 0
        %2145 = vmatpush1.bf16.msra.mxu0 0
        %2146 = vmatprep.mubr.bf16.mxu0 0
        %2147 = vmatmul.mubr.bf16.gmra.mrb[0].mxu0 %v2069
        %v2148 = vpop.f32.mrb[0].mxu0
        %v2149 = vadd.f32 %v2060, %v2148
        %v2150 = vpop.f32.mrb[0].mxu0
        %v2151 = vadd.f32 %v2062, %v2150
        %v2152 = vpop.f32.mrb[0].mxu0
        %v2153 = vadd.f32 %v2064, %v2152
        %v2154 = vpop.f32.mrb[0].mxu0
        %v2155 = vadd.f32 %v2066, %v2154
        %2156 = vdwg.mxu0
        %v2157 = vadd.f32 %v2106, %v522
        %v2158 = vadd.f32 %v2108, %v526
        %v2159 = vadd.f32 %v2149, %v530
        %v2160 = vadd.f32 %v2151, %v534
        %v2161 = vadd.f32 %v2110, %v522
        %v2162 = vadd.f32 %v2112, %v526
        %v2163 = vadd.f32 %v2153, %v530
        %v2164 = vadd.f32 %v2155, %v534
        %v2165 = vxor.u32 %v2157, 2147483648
        %v2166 = vxor.u32 %v2161, 2147483648
        %v2167 = vmul.f32 %v2165, 1.442695
        %v2168 = vpow.pop %v2167
        %v2169 = vmul.f32 %v2166, 1.442695
        %v2170 = vpow.pop %v2169
        %v2171 = vadd.f32 %v2168, 1.0
        %v2172 = vadd.f32 %v2170, 1.0
        %v2173 = vrcp.pop %v2171
        %v2174 = vmul.f32 1.0, %v2173
        %v2175 = vrcp.pop %v2172
        %v2176 = vmul.f32 1.0, %v2175
        %v2177 = vxor.u32 %v2158, 2147483648
        %v2178 = vxor.u32 %v2162, 2147483648
        %v2179 = vmul.f32 %v2177, 1.442695
        %v2180 = vpow.pop %v2179
        %v2181 = vmul.f32 %v2178, 1.442695
        %v2182 = vpow.pop %v2181
        %v2183 = vadd.f32 %v2180, 1.0
        %v2184 = vadd.f32 %v2182, 1.0
        %v2185 = vrcp.pop %v2183
        %v2186 = vmul.f32 1.0, %v2185
        %v2187 = vrcp.pop %v2184
        %v2188 = vmul.f32 1.0, %v2187
        %v2189 = vtanh.pop %v2159
        %v2190 = vtanh.pop %v2163
        %v2191 = vxor.u32 %v2160, 2147483648
        %v2192 = vxor.u32 %v2164, 2147483648
        %v2193 = vmul.f32 %v2191, 1.442695
        %v2194 = vpow.pop %v2193
        %v2195 = vmul.f32 %v2192, 1.442695
        %v2196 = vpow.pop %v2195
        %v2197 = vadd.f32 %v2194, 1.0
        %v2198 = vadd.f32 %v2196, 1.0
        %v2199 = vrcp.pop %v2197
        %v2200 = vmul.f32 1.0, %v2199
        %v2201 = vrcp.pop %v2198
        %v2202 = vmul.f32 1.0, %v2201
        %v2203 = vmul.f32 %v2186, %v1611
        %v2204 = vmul.f32 %v2188, %v1612
        %v2205 = vmul.f32 %v2174, %v2189
        %v2206 = vmul.f32 %v2176, %v2190
        %v2207 = vadd.f32 %v2203, %v2205
        %v2208 = vadd.f32 %v2204, %v2206
        %v2209 = vtanh.pop %v2207
        %v2210 = vtanh.pop %v2208
        %v2211 = vmul.f32 %v2200, %v2209
        %v2212 = vmul.f32 %v2202, %v2210
        %v2213 = vpack.c.bf16 %v2212, %v2211
        %2214 = vmatprep.subr.bf16.mxu0 %v905
        %2215 = vmatpush1.bf16.msra.mxu0 %v904
        %2216 = vmatprep.subr.bf16.mxu0 %v909
        %2217 = vmatpush1.bf16.msra.mxu0 %v908
        %2218 = vmatprep.subr.bf16.mxu0 0
        %2219 = vmatpush1.bf16.msra.mxu0 0
        %2220 = vmatprep.subr.bf16.mxu0 0
        %2221 = vmatpush1.bf16.msra.mxu0 0
        %2222 = vmatprep.subr.bf16.mxu0 0
        %2223 = vmatpush1.bf16.msra.mxu0 0
        %2224 = vmatprep.subr.bf16.mxu0 0
        %2225 = vmatpush1.bf16.msra.mxu0 0
        %2226 = vmatprep.subr.bf16.mxu0 0
        %2227 = vmatpush1.bf16.msra.mxu0 0
        %2228 = vmatprep.subr.bf16.mxu0 0
        %2229 = vmatpush1.bf16.msra.mxu0 0
        %2230 = vmatprep.subr.bf16.mxu0 0
        %2231 = vmatpush1.bf16.msra.mxu0 0
        %2232 = vmatprep.subr.bf16.mxu0 0
        %2233 = vmatpush1.bf16.msra.mxu0 0
        %2234 = vmatprep.subr.bf16.mxu0 0
        %2235 = vmatpush1.bf16.msra.mxu0 0
        %2236 = vmatprep.subr.bf16.mxu0 0
        %2237 = vmatpush1.bf16.msra.mxu0 0
        %2238 = vmatprep.subr.bf16.mxu0 0
        %2239 = vmatpush1.bf16.msra.mxu0 0
        %2240 = vmatprep.subr.bf16.mxu0 0
        %2241 = vmatpush1.bf16.msra.mxu0 0
        %2242 = vmatprep.subr.bf16.mxu0 0
        %2243 = vmatpush1.bf16.msra.mxu0 0
        %2244 = vmatprep.subr.bf16.mxu0 0
        %2245 = vmatpush1.bf16.msra.mxu0 0
        %2246 = vmatprep.mubr.bf16.mxu0 0
        %2247 = vmatmul.mubr.bf16.gmra.mrb[0].mxu0 %v1851
        %v2248 = vpop.f32.mrb[0].mxu0
        %v2249 = vadd.f32 0.0, %v2248
        %v2250 = vpop.f32.mrb[0].mxu0
        %v2251 = vadd.f32 0.0, %v2250
        %v2252 = vpop.f32.mrb[0].mxu0
        %v2253 = vadd.f32 0.0, %v2252
        %v2254 = vpop.f32.mrb[0].mxu0
        %v2255 = vadd.f32 0.0, %v2254
        %2256 = vdwg.mxu0
        %2257 = vmatprep.subr.bf16.mxu0 %v907
        %2258 = vmatpush1.bf16.msra.mxu0 %v906
        %2259 = vmatprep.subr.bf16.mxu0 %v911
        %2260 = vmatpush1.bf16.msra.mxu0 %v910
        %2261 = vmatprep.subr.bf16.mxu0 0
        %2262 = vmatpush1.bf16.msra.mxu0 0
        %2263 = vmatprep.subr.bf16.mxu0 0
        %2264 = vmatpush1.bf16.msra.mxu0 0
        %2265 = vmatprep.subr.bf16.mxu0 0
        %2266 = vmatpush1.bf16.msra.mxu0 0
        %2267 = vmatprep.subr.bf16.mxu0 0
        %2268 = vmatpush1.bf16.msra.mxu0 0
        %2269 = vmatprep.subr.bf16.mxu0 0
        %2270 = vmatpush1.bf16.msra.mxu0 0
        %2271 = vmatprep.subr.bf16.mxu0 0
        %2272 = vmatpush1.bf16.msra.mxu0 0
        %2273 = vmatprep.subr.bf16.mxu0 0
        %2274 = vmatpush1.bf16.msra.mxu0 0
        %2275 = vmatprep.subr.bf16.mxu0 0
        %2276 = vmatpush1.bf16.msra.mxu0 0
        %2277 = vmatprep.subr.bf16.mxu0 0
        %2278 = vmatpush1.bf16.msra.mxu0 0
        %2279 = vmatprep.subr.bf16.mxu0 0
        %2280 = vmatpush1.bf16.msra.mxu0 0
        %2281 = vmatprep.subr.bf16.mxu0 0
        %2282 = vmatpush1.bf16.msra.mxu0 0
        %2283 = vmatprep.subr.bf16.mxu0 0
        %2284 = vmatpush1.bf16.msra.mxu0 0
        %2285 = vmatprep.subr.bf16.mxu0 0
        %2286 = vmatpush1.bf16.msra.mxu0 0
        %2287 = vmatprep.subr.bf16.mxu0 0
        %2288 = vmatpush1.bf16.msra.mxu0 0
        %2289 = vmatprep.mubr.bf16.mxu0 0
        %2290 = vmatmul.mubr.bf16.gmra.mrb[0].mxu0 %v1851
        %v2291 = vpop.f32.mrb[0].mxu0
        %v2292 = vadd.f32 0.0, %v2291
        %v2293 = vpop.f32.mrb[0].mxu0
        %v2294 = vadd.f32 0.0, %v2293
        %v2295 = vpop.f32.mrb[0].mxu0
        %v2296 = vadd.f32 0.0, %v2295
        %v2297 = vpop.f32.mrb[0].mxu0
        %v2298 = vadd.f32 0.0, %v2297
        %2299 = vdwg.mxu0
        %v2301 = vsel %vm623, %v2213, 0
        %2303 = vmatprep.subr.bf16.mxu0 %v1034
        %2304 = vmatpush1.bf16.msra.mxu0 %v1033
        %2305 = vmatprep.subr.bf16.mxu0 %v1038
        %2306 = vmatpush1.bf16.msra.mxu0 %v1037
        %2307 = vmatprep.subr.bf16.mxu0 0
        %2308 = vmatpush1.bf16.msra.mxu0 0
        %2309 = vmatprep.subr.bf16.mxu0 0
        %2310 = vmatpush1.bf16.msra.mxu0 0
        %2311 = vmatprep.subr.bf16.mxu0 0
        %2312 = vmatpush1.bf16.msra.mxu0 0
        %2313 = vmatprep.subr.bf16.mxu0 0
        %2314 = vmatpush1.bf16.msra.mxu0 0
        %2315 = vmatprep.subr.bf16.mxu0 0
        %2316 = vmatpush1.bf16.msra.mxu0 0
        %2317 = vmatprep.subr.bf16.mxu0 0
        %2318 = vmatpush1.bf16.msra.mxu0 0
        %2319 = vmatprep.subr.bf16.mxu0 0
        %2320 = vmatpush1.bf16.msra.mxu0 0
        %2321 = vmatprep.subr.bf16.mxu0 0
        %2322 = vmatpush1.bf16.msra.mxu0 0
        %2323 = vmatprep.subr.bf16.mxu0 0
        %2324 = vmatpush1.bf16.msra.mxu0 0
        %2325 = vmatprep.subr.bf16.mxu0 0
        %2326 = vmatpush1.bf16.msra.mxu0 0
        %2327 = vmatprep.subr.bf16.mxu0 0
        %2328 = vmatpush1.bf16.msra.mxu0 0
        %2329 = vmatprep.subr.bf16.mxu0 0
        %2330 = vmatpush1.bf16.msra.mxu0 0
        %2331 = vmatprep.subr.bf16.mxu0 0
        %2332 = vmatpush1.bf16.msra.mxu0 0
        %2333 = vmatprep.subr.bf16.mxu0 0
        %2334 = vmatpush1.bf16.msra.mxu0 0
        %2335 = vmatprep.mubr.bf16.mxu0 0
        %2336 = vmatmul.mubr.bf16.gmra.mrb[0].mxu0 %v2301
        %v2337 = vpop.f32.mrb[0].mxu0
        %v2338 = vadd.f32 %v2249, %v2337
        %v2339 = vpop.f32.mrb[0].mxu0
        %v2340 = vadd.f32 %v2251, %v2339
        %v2341 = vpop.f32.mrb[0].mxu0
        %v2342 = vadd.f32 %v2253, %v2341
        %v2343 = vpop.f32.mrb[0].mxu0
        %v2344 = vadd.f32 %v2255, %v2343
        %2345 = vdwg.mxu0
        %2346 = vmatprep.subr.bf16.mxu0 %v1036
        %2347 = vmatpush1.bf16.msra.mxu0 %v1035
        %2348 = vmatprep.subr.bf16.mxu0 %v1040
        %2349 = vmatpush1.bf16.msra.mxu0 %v1039
        %2350 = vmatprep.subr.bf16.mxu0 0
        %2351 = vmatpush1.bf16.msra.mxu0 0
        %2352 = vmatprep.subr.bf16.mxu0 0
        %2353 = vmatpush1.bf16.msra.mxu0 0
        %2354 = vmatprep.subr.bf16.mxu0 0
        %2355 = vmatpush1.bf16.msra.mxu0 0
        %2356 = vmatprep.subr.bf16.mxu0 0
        %2357 = vmatpush1.bf16.msra.mxu0 0
        %2358 = vmatprep.subr.bf16.mxu0 0
        %2359 = vmatpush1.bf16.msra.mxu0 0
        %2360 = vmatprep.subr.bf16.mxu0 0
        %2361 = vmatpush1.bf16.msra.mxu0 0
        %2362 = vmatprep.subr.bf16.mxu0 0
        %2363 = vmatpush1.bf16.msra.mxu0 0
        %2364 = vmatprep.subr.bf16.mxu0 0
        %2365 = vmatpush1.bf16.msra.mxu0 0
        %2366 = vmatprep.subr.bf16.mxu0 0
        %2367 = vmatpush1.bf16.msra.mxu0 0
        %2368 = vmatprep.subr.bf16.mxu0 0
        %2369 = vmatpush1.bf16.msra.mxu0 0
        %2370 = vmatprep.subr.bf16.mxu0 0
        %2371 = vmatpush1.bf16.msra.mxu0 0
        %2372 = vmatprep.subr.bf16.mxu0 0
        %2373 = vmatpush1.bf16.msra.mxu0 0
        %2374 = vmatprep.subr.bf16.mxu0 0
        %2375 = vmatpush1.bf16.msra.mxu0 0
        %2376 = vmatprep.subr.bf16.mxu0 0
        %2377 = vmatpush1.bf16.msra.mxu0 0
        %2378 = vmatprep.mubr.bf16.mxu0 0
        %2379 = vmatmul.mubr.bf16.gmra.mrb[0].mxu0 %v2301
        %v2380 = vpop.f32.mrb[0].mxu0
        %v2381 = vadd.f32 %v2292, %v2380
        %v2382 = vpop.f32.mrb[0].mxu0
        %v2383 = vadd.f32 %v2294, %v2382
        %v2384 = vpop.f32.mrb[0].mxu0
        %v2385 = vadd.f32 %v2296, %v2384
        %v2386 = vpop.f32.mrb[0].mxu0
        %v2387 = vadd.f32 %v2298, %v2386
        %2388 = vdwg.mxu0
        %v2389 = vadd.f32 %v2338, %v544
        %v2390 = vadd.f32 %v2340, %v548
        %v2391 = vadd.f32 %v2381, %v552
        %v2392 = vadd.f32 %v2383, %v556
        %v2393 = vadd.f32 %v2342, %v544
        %v2394 = vadd.f32 %v2344, %v548
        %v2395 = vadd.f32 %v2385, %v552
        %v2396 = vadd.f32 %v2387, %v556
        %v2397 = vxor.u32 %v2389, 2147483648
        %v2398 = vxor.u32 %v2393, 2147483648
        %v2399 = vmul.f32 %v2397, 1.442695
        %v2400 = vpow.pop %v2399
        %v2401 = vmul.f32 %v2398, 1.442695
        %v2402 = vpow.pop %v2401
        %v2403 = vadd.f32 %v2400, 1.0
        %v2404 = vadd.f32 %v2402, 1.0
        %v2405 = vrcp.pop %v2403
        %v2406 = vmul.f32 1.0, %v2405
        %v2407 = vrcp.pop %v2404
        %v2408 = vmul.f32 1.0, %v2407
        %v2409 = vxor.u32 %v2390, 2147483648
        %v2410 = vxor.u32 %v2394, 2147483648
        %v2411 = vmul.f32 %v2409, 1.442695
        %v2412 = vpow.pop %v2411
        %v2413 = vmul.f32 %v2410, 1.442695
        %v2414 = vpow.pop %v2413
        %v2415 = vadd.f32 %v2412, 1.0
        %v2416 = vadd.f32 %v2414, 1.0
        %v2417 = vrcp.pop %v2415
        %v2418 = vmul.f32 1.0, %v2417
        %v2419 = vrcp.pop %v2416
        %v2420 = vmul.f32 1.0, %v2419
        %v2421 = vtanh.pop %v2391
        %v2422 = vtanh.pop %v2395
        %v2423 = vxor.u32 %v2392, 2147483648
        %v2424 = vxor.u32 %v2396, 2147483648
        %v2425 = vmul.f32 %v2423, 1.442695
        %v2426 = vpow.pop %v2425
        %v2427 = vmul.f32 %v2424, 1.442695
        %v2428 = vpow.pop %v2427
        %v2429 = vadd.f32 %v2426, 1.0
        %v2430 = vadd.f32 %v2428, 1.0
        %v2431 = vrcp.pop %v2429
        %v2432 = vmul.f32 1.0, %v2431
        %v2433 = vrcp.pop %v2430
        %v2434 = vmul.f32 1.0, %v2433
        %v2435 = vmul.f32 %v2418, %v1843
        %v2436 = vmul.f32 %v2420, %v1844
        %v2437 = vmul.f32 %v2406, %v2421
        %v2438 = vmul.f32 %v2408, %v2422
        %v2439 = vadd.f32 %v2435, %v2437
        %v2440 = vadd.f32 %v2436, %v2438
        %v2441 = vtanh.pop %v2439
        %v2442 = vtanh.pop %v2440
        %v2443 = vmul.f32 %v2432, %v2441
        %v2444 = vmul.f32 %v2434, %v2442
        %v2445 = vpack.c.bf16 %v2444, %v2443
        %v2447 = vsel %vm623, %v2445, 0
        %2449 = vmatprep.subr.bf16.mxu0 0
        %2450 = vmatpush1.bf16.msra.mxu0 %v1203
        %2451 = vmatprep.subr.bf16.mxu0 0
        %2452 = vmatpush1.bf16.msra.mxu0 %v1204
        %2453 = vmatprep.subr.bf16.mxu0 0
        %2454 = vmatpush1.bf16.msra.mxu0 0
        %2455 = vmatprep.subr.bf16.mxu0 0
        %2456 = vmatpush1.bf16.msra.mxu0 0
        %2457 = vmatprep.subr.bf16.mxu0 0
        %2458 = vmatpush1.bf16.msra.mxu0 0
        %2459 = vmatprep.subr.bf16.mxu0 0
        %2460 = vmatpush1.bf16.msra.mxu0 0
        %2461 = vmatprep.subr.bf16.mxu0 0
        %2462 = vmatpush1.bf16.msra.mxu0 0
        %2463 = vmatprep.subr.bf16.mxu0 0
        %2464 = vmatpush1.bf16.msra.mxu0 0
        %2465 = vmatprep.subr.bf16.mxu0 0
        %2466 = vmatpush1.bf16.msra.mxu0 0
        %2467 = vmatprep.subr.bf16.mxu0 0
        %2468 = vmatpush1.bf16.msra.mxu0 0
        %2469 = vmatprep.subr.bf16.mxu0 0
        %2470 = vmatpush1.bf16.msra.mxu0 0
        %2471 = vmatprep.subr.bf16.mxu0 0
        %2472 = vmatpush1.bf16.msra.mxu0 0
        %2473 = vmatprep.subr.bf16.mxu0 0
        %2474 = vmatpush1.bf16.msra.mxu0 0
        %2475 = vmatprep.subr.bf16.mxu0 0
        %2476 = vmatpush1.bf16.msra.mxu0 0
        %2477 = vmatprep.subr.bf16.mxu0 0
        %2478 = vmatpush1.bf16.msra.mxu0 0
        %2479 = vmatprep.subr.bf16.mxu0 0
        %2480 = vmatpush1.bf16.msra.mxu0 0
        %2481 = vmatprep.mubr.bf16.mxu0 0
        %2482 = vmatmul.mubr.bf16.gmra.mrb[0].mxu0 %v2447
        %v2483 = vpop.f32.mrb[0].mxu0
        %v2484 = vadd.f32 %v570, %v2483
        %v2485 = vpop.f32.mrb[0].mxu0
        %v2486 = vpop.f32.mrb[0].mxu0
        %v2487 = vadd.f32 %v570, %v2486
        %v2488 = vpop.f32.mrb[0].mxu0
        %2489 = vdwg.mxu0
        %s2490 = scalar_lea.vmem %s436, 32 [#allocation14]
        %2491 = vst [vmem:[%s2490] sm:$0xff] %v2484
        %2492 = vst [vmem:[%s2490 + $0x8] sm:$0xff] %v2487
        %2493 = vmax.xlane.f32.xlu0 %v2484
        %v2494 = vpop.xlane.xlu0 %2493
        %2495 = vmax.xlane.f32.xlu0 %v2487
        %v2496 = vpop.xlane.xlu0 %2495
        %vm2497 = vcmp.ge.f32.partialorder %v2484, %v2494
        %vm2498 = vcmp.ge.f32.partialorder %v2487, %v2496
        %v2499 = vsel %vm2497, %v573, 128
        %v2500 = vsel %vm2498, %v573, 128
        %v2501 = vand.u32 %v2499, 65535
        %v2502 = vshra.s32 %v2499, 16
        %v2503 = vcvt.s32.f32 %v2501
        %v2504 = vcvt.s32.f32 %v2502
        %2505 = vmin.xlane.f32.xlu0 %v2504
        %v2506 = vpop.xlane.xlu0 %2505
        %vm2507 = vcmp.eq.f32.partialorder %v2504, %v2506
        %v2508 = vsel %vm2507, %v2503, inf
        %2509 = vmin.xlane.f32.xlu0 %v2508
        %v2510 = vpop.xlane.xlu0 %2509
        %v2511 = vcvt.f32.s32 %v2510
        %v2512 = vcvt.f32.s32 %v2506
        %v2513 = vshll.u32 %v2512, 16
        %v2514 = vadd.s32 %v2513, %v2511
        %v2515 = vand.u32 %v2500, 65535
        %v2516 = vshra.s32 %v2500, 16
        %v2517 = vcvt.s32.f32 %v2515
        %v2518 = vcvt.s32.f32 %v2516
        %2519 = vmin.xlane.f32.xlu0 %v2518
        %v2520 = vpop.xlane.xlu0 %2519
        %vm2521 = vcmp.eq.f32.partialorder %v2518, %v2520
        %v2522 = vsel %vm2521, %v2517, inf
        %2523 = vmin.xlane.f32.xlu0 %v2522
        %v2524 = vpop.xlane.xlu0 %2523
        %v2525 = vcvt.f32.s32 %v2524
        %v2526 = vcvt.f32.s32 %v2520
        %v2527 = vshll.u32 %v2526, 16
        %v2528 = vadd.s32 %v2527, %v2525
        %vm2529 = vcmp.eq.s32.totalorder %v2499, %v2514
        %vm2530 = vcmp.eq.s32.totalorder %v2500, %v2528
        %v2531 = vsel %vm2529, 1, 0
        %v2532 = vsel %vm2530, 1, 0
        %v2533 = vcvt.s32.f32 %v2531
        %v2534 = vcvt.s32.f32 %v2532
        %v2535 = vpack.c.bf16 %v2534, %v2533
        %2536 = vmatprep.subr.bf16.mxu0 0
        %2537 = vmatpush1.bf16.msra.mxu0 %v1328
        %2538 = vmatprep.subr.bf16.mxu0 0
        %2539 = vmatpush1.bf16.msra.mxu0 %v1329
        %2540 = vmatprep.subr.bf16.mxu0 0
        %2541 = vmatpush1.bf16.msra.mxu0 %v1330
        %2542 = vmatprep.subr.bf16.mxu0 0
        %2543 = vmatpush1.bf16.msra.mxu0 %v1331
        %2544 = vmatprep.subr.bf16.mxu0 0
        %2545 = vmatpush1.bf16.msra.mxu0 %v1332
        %2546 = vmatprep.subr.bf16.mxu0 0
        %2547 = vmatpush1.bf16.msra.mxu0 %v1333
        %2548 = vmatprep.subr.bf16.mxu0 0
        %2549 = vmatpush1.bf16.msra.mxu0 %v1334
        %2550 = vmatprep.subr.bf16.mxu0 0
        %2551 = vmatpush1.bf16.msra.mxu0 %v1335
        %2552 = vmatprep.subr.bf16.mxu0 0
        %2553 = vmatpush1.bf16.msra.mxu0 0
        %2554 = vmatprep.subr.bf16.mxu0 0
        %2555 = vmatpush1.bf16.msra.mxu0 0
        %2556 = vmatprep.subr.bf16.mxu0 0
        %2557 = vmatpush1.bf16.msra.mxu0 0
        %2558 = vmatprep.subr.bf16.mxu0 0
        %2559 = vmatpush1.bf16.msra.mxu0 0
        %2560 = vmatprep.subr.bf16.mxu0 0
        %2561 = vmatpush1.bf16.msra.mxu0 0
        %2562 = vmatprep.subr.bf16.mxu0 0
        %2563 = vmatpush1.bf16.msra.mxu0 0
        %2564 = vmatprep.subr.bf16.mxu0 0
        %2565 = vmatpush1.bf16.msra.mxu0 0
        %2566 = vmatprep.subr.bf16.mxu0 0
        %2567 = vmatpush1.bf16.msra.mxu0 0
        %2568 = vmatprep.mubr.bf16.mxu0 0
        %2569 = vmatmul.mubr.bf16.gmra.mrb[0].mxu0 %v2535
        %v2570 = vpop.f32.mrb[0].mxu0
        %v2571 = vadd.f32 0.0, %v2570
        %v2572 = vpop.f32.mrb[0].mxu0
        %v2573 = vpop.f32.mrb[0].mxu0
        %v2574 = vadd.f32 0.0, %v2573
        %v2575 = vpop.f32.mrb[0].mxu0
        %2576 = vdwg.mxu0
        %v2577 = vpack.c.bf16 %v2574, %v2571
        %2578 = vmatprep.subr.bf16.mxu0 %v608
        %2579 = vmatpush1.bf16.msra.mxu0 %v607
        %2580 = vmatprep.subr.bf16.mxu0 %v612
        %2581 = vmatpush1.bf16.msra.mxu0 %v611
        %2582 = vmatprep.subr.bf16.mxu0 0
        %2583 = vmatpush1.bf16.msra.mxu0 0
        %2584 = vmatprep.subr.bf16.mxu0 0
        %2585 = vmatpush1.bf16.msra.mxu0 0
        %2586 = vmatprep.subr.bf16.mxu0 0
        %2587 = vmatpush1.bf16.msra.mxu0 0
        %2588 = vmatprep.subr.bf16.mxu0 0
        %2589 = vmatpush1.bf16.msra.mxu0 0
        %2590 = vmatprep.subr.bf16.mxu0 0
        %2591 = vmatpush1.bf16.msra.mxu0 0
        %2592 = vmatprep.subr.bf16.mxu0 0
        %2593 = vmatpush1.bf16.msra.mxu0 0
        %2594 = vmatprep.subr.bf16.mxu0 0
        %2595 = vmatpush1.bf16.msra.mxu0 0
        %2596 = vmatprep.subr.bf16.mxu0 0
        %2597 = vmatpush1.bf16.msra.mxu0 0
        %2598 = vmatprep.subr.bf16.mxu0 0
        %2599 = vmatpush1.bf16.msra.mxu0 0
        %2600 = vmatprep.subr.bf16.mxu0 0
        %2601 = vmatpush1.bf16.msra.mxu0 0
        %2602 = vmatprep.subr.bf16.mxu0 0
        %2603 = vmatpush1.bf16.msra.mxu0 0
        %2604 = vmatprep.subr.bf16.mxu0 0
        %2605 = vmatpush1.bf16.msra.mxu0 0
        %2606 = vmatprep.subr.bf16.mxu0 0
        %2607 = vmatpush1.bf16.msra.mxu0 0
        %2608 = vmatprep.subr.bf16.mxu0 0
        %2609 = vmatpush1.bf16.msra.mxu0 0
        %2610 = vmatprep.mubr.bf16.mxu0 0
        %2611 = vmatmul.mubr.bf16.gmra.mrb[0].mxu0 %v2301
        %v2612 = vpop.f32.mrb[0].mxu0
        %v2613 = vadd.f32 0.0, %v2612
        %v2614 = vpop.f32.mrb[0].mxu0
        %v2615 = vadd.f32 0.0, %v2614
        %v2616 = vpop.f32.mrb[0].mxu0
        %v2617 = vadd.f32 0.0, %v2616
        %v2618 = vpop.f32.mrb[0].mxu0
        %v2619 = vadd.f32 0.0, %v2618
        %2620 = vdwg.mxu0
        %2621 = vmatprep.subr.bf16.mxu0 %v610
        %2622 = vmatpush1.bf16.msra.mxu0 %v609
        %2623 = vmatprep.subr.bf16.mxu0 %v614
        %2624 = vmatpush1.bf16.msra.mxu0 %v613
        %2625 = vmatprep.subr.bf16.mxu0 0
        %2626 = vmatpush1.bf16.msra.mxu0 0
        %2627 = vmatprep.subr.bf16.mxu0 0
        %2628 = vmatpush1.bf16.msra.mxu0 0
        %2629 = vmatprep.subr.bf16.mxu0 0
        %2630 = vmatpush1.bf16.msra.mxu0 0
        %2631 = vmatprep.subr.bf16.mxu0 0
        %2632 = vmatpush1.bf16.msra.mxu0 0
        %2633 = vmatprep.subr.bf16.mxu0 0
        %2634 = vmatpush1.bf16.msra.mxu0 0
        %2635 = vmatprep.subr.bf16.mxu0 0
        %2636 = vmatpush1.bf16.msra.mxu0 0
        %2637 = vmatprep.subr.bf16.mxu0 0
        %2638 = vmatpush1.bf16.msra.mxu0 0
        %2639 = vmatprep.subr.bf16.mxu0 0
        %2640 = vmatpush1.bf16.msra.mxu0 0
        %2641 = vmatprep.subr.bf16.mxu0 0
        %2642 = vmatpush1.bf16.msra.mxu0 0
        %2643 = vmatprep.subr.bf16.mxu0 0
        %2644 = vmatpush1.bf16.msra.mxu0 0
        %2645 = vmatprep.subr.bf16.mxu0 0
        %2646 = vmatpush1.bf16.msra.mxu0 0
        %2647 = vmatprep.subr.bf16.mxu0 0
        %2648 = vmatpush1.bf16.msra.mxu0 0
        %2649 = vmatprep.subr.bf16.mxu0 0
        %2650 = vmatpush1.bf16.msra.mxu0 0
        %2651 = vmatprep.subr.bf16.mxu0 0
        %2652 = vmatpush1.bf16.msra.mxu0 0
        %2653 = vmatprep.mubr.bf16.mxu0 0
        %2654 = vmatmul.mubr.bf16.gmra.mrb[0].mxu0 %v2301
        %v2655 = vpop.f32.mrb[0].mxu0
        %v2656 = vadd.f32 0.0, %v2655
        %v2657 = vpop.f32.mrb[0].mxu0
        %v2658 = vadd.f32 0.0, %v2657
        %v2659 = vpop.f32.mrb[0].mxu0
        %v2660 = vadd.f32 0.0, %v2659
        %v2661 = vpop.f32.mrb[0].mxu0
        %v2662 = vadd.f32 0.0, %v2661
        %2663 = vdwg.mxu0
        %v2665 = vsel %vm733, %v2577, 0
        %2667 = vmatprep.subr.bf16.mxu0 %v726
        %2668 = vmatpush1.bf16.msra.mxu0 %v725
        %2669 = vmatprep.subr.bf16.mxu0 0
        %2670 = vmatpush1.bf16.msra.mxu0 0
        %2671 = vmatprep.subr.bf16.mxu0 0
        %2672 = vmatpush1.bf16.msra.mxu0 0
        %2673 = vmatprep.subr.bf16.mxu0 0
        %2674 = vmatpush1.bf16.msra.mxu0 0
        %2675 = vmatprep.subr.bf16.mxu0 0
        %2676 = vmatpush1.bf16.msra.mxu0 0
        %2677 = vmatprep.subr.bf16.mxu0 0
        %2678 = vmatpush1.bf16.msra.mxu0 0
        %2679 = vmatprep.subr.bf16.mxu0 0
        %2680 = vmatpush1.bf16.msra.mxu0 0
        %2681 = vmatprep.subr.bf16.mxu0 0
        %2682 = vmatpush1.bf16.msra.mxu0 0
        %2683 = vmatprep.subr.bf16.mxu0 0
        %2684 = vmatpush1.bf16.msra.mxu0 0
        %2685 = vmatprep.subr.bf16.mxu0 0
        %2686 = vmatpush1.bf16.msra.mxu0 0
        %2687 = vmatprep.subr.bf16.mxu0 0
        %2688 = vmatpush1.bf16.msra.mxu0 0
        %2689 = vmatprep.subr.bf16.mxu0 0
        %2690 = vmatpush1.bf16.msra.mxu0 0
        %2691 = vmatprep.subr.bf16.mxu0 0
        %2692 = vmatpush1.bf16.msra.mxu0 0
        %2693 = vmatprep.subr.bf16.mxu0 0
        %2694 = vmatpush1.bf16.msra.mxu0 0
        %2695 = vmatprep.subr.bf16.mxu0 0
        %2696 = vmatpush1.bf16.msra.mxu0 0
        %2697 = vmatprep.subr.bf16.mxu0 0
        %2698 = vmatpush1.bf16.msra.mxu0 0
        %2699 = vmatprep.mubr.bf16.mxu0 0
        %2700 = vmatmul.mubr.bf16.gmra.mrb[0].mxu0 %v2665
        %v2701 = vpop.f32.mrb[0].mxu0
        %v2702 = vadd.f32 %v2613, %v2701
        %v2703 = vpop.f32.mrb[0].mxu0
        %v2704 = vadd.f32 %v2615, %v2703
        %v2705 = vpop.f32.mrb[0].mxu0
        %v2706 = vadd.f32 %v2617, %v2705
        %v2707 = vpop.f32.mrb[0].mxu0
        %v2708 = vadd.f32 %v2619, %v2707
        %2709 = vdwg.mxu0
        %2710 = vmatprep.subr.bf16.mxu0 %v728
        %2711 = vmatpush1.bf16.msra.mxu0 %v727
        %2712 = vmatprep.subr.bf16.mxu0 0
        %2713 = vmatpush1.bf16.msra.mxu0 0
        %2714 = vmatprep.subr.bf16.mxu0 0
        %2715 = vmatpush1.bf16.msra.mxu0 0
        %2716 = vmatprep.subr.bf16.mxu0 0
        %2717 = vmatpush1.bf16.msra.mxu0 0
        %2718 = vmatprep.subr.bf16.mxu0 0
        %2719 = vmatpush1.bf16.msra.mxu0 0
        %2720 = vmatprep.subr.bf16.mxu0 0
        %2721 = vmatpush1.bf16.msra.mxu0 0
        %2722 = vmatprep.subr.bf16.mxu0 0
        %2723 = vmatpush1.bf16.msra.mxu0 0
        %2724 = vmatprep.subr.bf16.mxu0 0
        %2725 = vmatpush1.bf16.msra.mxu0 0
        %2726 = vmatprep.subr.bf16.mxu0 0
        %2727 = vmatpush1.bf16.msra.mxu0 0
        %2728 = vmatprep.subr.bf16.mxu0 0
        %2729 = vmatpush1.bf16.msra.mxu0 0
        %2730 = vmatprep.subr.bf16.mxu0 0
        %2731 = vmatpush1.bf16.msra.mxu0 0
        %2732 = vmatprep.subr.bf16.mxu0 0
        %2733 = vmatpush1.bf16.msra.mxu0 0
        %2734 = vmatprep.subr.bf16.mxu0 0
        %2735 = vmatpush1.bf16.msra.mxu0 0
        %2736 = vmatprep.subr.bf16.mxu0 0
        %2737 = vmatpush1.bf16.msra.mxu0 0
        %2738 = vmatprep.subr.bf16.mxu0 0
        %2739 = vmatpush1.bf16.msra.mxu0 0
        %2740 = vmatprep.subr.bf16.mxu0 0
        %2741 = vmatpush1.bf16.msra.mxu0 0
        %2742 = vmatprep.mubr.bf16.mxu0 0
        %2743 = vmatmul.mubr.bf16.gmra.mrb[0].mxu0 %v2665
        %v2744 = vpop.f32.mrb[0].mxu0
        %v2745 = vadd.f32 %v2656, %v2744
        %v2746 = vpop.f32.mrb[0].mxu0
        %v2747 = vadd.f32 %v2658, %v2746
        %v2748 = vpop.f32.mrb[0].mxu0
        %v2749 = vadd.f32 %v2660, %v2748
        %v2750 = vpop.f32.mrb[0].mxu0
        %v2751 = vadd.f32 %v2662, %v2750
        %2752 = vdwg.mxu0
        %v2753 = vadd.f32 %v2702, %v522
        %v2754 = vadd.f32 %v2704, %v526
        %v2755 = vadd.f32 %v2745, %v530
        %v2756 = vadd.f32 %v2747, %v534
        %v2757 = vadd.f32 %v2706, %v522
        %v2758 = vadd.f32 %v2708, %v526
        %v2759 = vadd.f32 %v2749, %v530
        %v2760 = vadd.f32 %v2751, %v534
        %v2761 = vxor.u32 %v2753, 2147483648
        %v2762 = vxor.u32 %v2757, 2147483648
        %v2763 = vmul.f32 %v2761, 1.442695
        %v2764 = vpow.pop %v2763
        %v2765 = vmul.f32 %v2762, 1.442695
        %v2766 = vpow.pop %v2765
        %v2767 = vadd.f32 %v2764, 1.0
        %v2768 = vadd.f32 %v2766, 1.0
        %v2769 = vrcp.pop %v2767
        %v2770 = vmul.f32 1.0, %v2769
        %v2771 = vrcp.pop %v2768
        %v2772 = vmul.f32 1.0, %v2771
        %v2773 = vxor.u32 %v2754, 2147483648
        %v2774 = vxor.u32 %v2758, 2147483648
        %v2775 = vmul.f32 %v2773, 1.442695
        %v2776 = vpow.pop %v2775
        %v2777 = vmul.f32 %v2774, 1.442695
        %v2778 = vpow.pop %v2777
        %v2779 = vadd.f32 %v2776, 1.0
        %v2780 = vadd.f32 %v2778, 1.0
        %v2781 = vrcp.pop %v2779
        %v2782 = vmul.f32 1.0, %v2781
        %v2783 = vrcp.pop %v2780
        %v2784 = vmul.f32 1.0, %v2783
        %v2785 = vtanh.pop %v2755
        %v2786 = vtanh.pop %v2759
        %v2787 = vxor.u32 %v2756, 2147483648
        %v2788 = vxor.u32 %v2760, 2147483648
        %v2789 = vmul.f32 %v2787, 1.442695
        %v2790 = vpow.pop %v2789
        %v2791 = vmul.f32 %v2788, 1.442695
        %v2792 = vpow.pop %v2791
        %v2793 = vadd.f32 %v2790, 1.0
        %v2794 = vadd.f32 %v2792, 1.0
        %v2795 = vrcp.pop %v2793
        %v2796 = vmul.f32 1.0, %v2795
        %v2797 = vrcp.pop %v2794
        %v2798 = vmul.f32 1.0, %v2797
        %v2799 = vmul.f32 %v2782, %v2207
        %v2800 = vmul.f32 %v2784, %v2208
        %v2801 = vmul.f32 %v2770, %v2785
        %v2802 = vmul.f32 %v2772, %v2786
        %v2803 = vadd.f32 %v2799, %v2801
        %v2804 = vadd.f32 %v2800, %v2802
        %v2805 = vtanh.pop %v2803
        %v2806 = vtanh.pop %v2804
        %v2807 = vmul.f32 %v2796, %v2805
        %v2808 = vmul.f32 %v2798, %v2806
        %v2809 = vpack.c.bf16 %v2808, %v2807
        %2810 = vmatprep.subr.bf16.mxu0 %v905
        %2811 = vmatpush1.bf16.msra.mxu0 %v904
        %2812 = vmatprep.subr.bf16.mxu0 %v909
        %2813 = vmatpush1.bf16.msra.mxu0 %v908
        %2814 = vmatprep.subr.bf16.mxu0 0
        %2815 = vmatpush1.bf16.msra.mxu0 0
        %2816 = vmatprep.subr.bf16.mxu0 0
        %2817 = vmatpush1.bf16.msra.mxu0 0
        %2818 = vmatprep.subr.bf16.mxu0 0
        %2819 = vmatpush1.bf16.msra.mxu0 0
        %2820 = vmatprep.subr.bf16.mxu0 0
        %2821 = vmatpush1.bf16.msra.mxu0 0
        %2822 = vmatprep.subr.bf16.mxu0 0
        %2823 = vmatpush1.bf16.msra.mxu0 0
        %2824 = vmatprep.subr.bf16.mxu0 0
        %2825 = vmatpush1.bf16.msra.mxu0 0
        %2826 = vmatprep.subr.bf16.mxu0 0
        %2827 = vmatpush1.bf16.msra.mxu0 0
        %2828 = vmatprep.subr.bf16.mxu0 0
        %2829 = vmatpush1.bf16.msra.mxu0 0
        %2830 = vmatprep.subr.bf16.mxu0 0
        %2831 = vmatpush1.bf16.msra.mxu0 0
        %2832 = vmatprep.subr.bf16.mxu0 0
        %2833 = vmatpush1.bf16.msra.mxu0 0
        %2834 = vmatprep.subr.bf16.mxu0 0
        %2835 = vmatpush1.bf16.msra.mxu0 0
        %2836 = vmatprep.subr.bf16.mxu0 0
        %2837 = vmatpush1.bf16.msra.mxu0 0
        %2838 = vmatprep.subr.bf16.mxu0 0
        %2839 = vmatpush1.bf16.msra.mxu0 0
        %2840 = vmatprep.subr.bf16.mxu0 0
        %2841 = vmatpush1.bf16.msra.mxu0 0
        %2842 = vmatprep.mubr.bf16.mxu0 0
        %2843 = vmatmul.mubr.bf16.gmra.mrb[0].mxu0 %v2447
        %v2844 = vpop.f32.mrb[0].mxu0
        %v2845 = vadd.f32 0.0, %v2844
        %v2846 = vpop.f32.mrb[0].mxu0
        %v2847 = vadd.f32 0.0, %v2846
        %v2848 = vpop.f32.mrb[0].mxu0
        %v2849 = vadd.f32 0.0, %v2848
        %v2850 = vpop.f32.mrb[0].mxu0
        %v2851 = vadd.f32 0.0, %v2850
        %2852 = vdwg.mxu0
        %2853 = vmatprep.subr.bf16.mxu0 %v907
        %2854 = vmatpush1.bf16.msra.mxu0 %v906
        %2855 = vmatprep.subr.bf16.mxu0 %v911
        %2856 = vmatpush1.bf16.msra.mxu0 %v910
        %2857 = vmatprep.subr.bf16.mxu0 0
        %2858 = vmatpush1.bf16.msra.mxu0 0
        %2859 = vmatprep.subr.bf16.mxu0 0
        %2860 = vmatpush1.bf16.msra.mxu0 0
        %2861 = vmatprep.subr.bf16.mxu0 0
        %2862 = vmatpush1.bf16.msra.mxu0 0
        %2863 = vmatprep.subr.bf16.mxu0 0
        %2864 = vmatpush1.bf16.msra.mxu0 0
        %2865 = vmatprep.subr.bf16.mxu0 0
        %2866 = vmatpush1.bf16.msra.mxu0 0
        %2867 = vmatprep.subr.bf16.mxu0 0
        %2868 = vmatpush1.bf16.msra.mxu0 0
        %2869 = vmatprep.subr.bf16.mxu0 0
        %2870 = vmatpush1.bf16.msra.mxu0 0
        %2871 = vmatprep.subr.bf16.mxu0 0
        %2872 = vmatpush1.bf16.msra.mxu0 0
        %2873 = vmatprep.subr.bf16.mxu0 0
        %2874 = vmatpush1.bf16.msra.mxu0 0
        %2875 = vmatprep.subr.bf16.mxu0 0
        %2876 = vmatpush1.bf16.msra.mxu0 0
        %2877 = vmatprep.subr.bf16.mxu0 0
        %2878 = vmatpush1.bf16.msra.mxu0 0
        %2879 = vmatprep.subr.bf16.mxu0 0
        %2880 = vmatpush1.bf16.msra.mxu0 0
        %2881 = vmatprep.subr.bf16.mxu0 0
        %2882 = vmatpush1.bf16.msra.mxu0 0
        %2883 = vmatprep.subr.bf16.mxu0 0
        %2884 = vmatpush1.bf16.msra.mxu0 0
        %2885 = vmatprep.mubr.bf16.mxu0 0
        %2886 = vmatmul.mubr.bf16.gmra.mrb[0].mxu0 %v2447
        %v2887 = vpop.f32.mrb[0].mxu0
        %v2888 = vadd.f32 0.0, %v2887
        %v2889 = vpop.f32.mrb[0].mxu0
        %v2890 = vadd.f32 0.0, %v2889
        %v2891 = vpop.f32.mrb[0].mxu0
        %v2892 = vadd.f32 0.0, %v2891
        %v2893 = vpop.f32.mrb[0].mxu0
        %v2894 = vadd.f32 0.0, %v2893
        %2895 = vdwg.mxu0
        %v2897 = vsel %vm623, %v2809, 0
        %2899 = vmatprep.subr.bf16.mxu0 %v1034
        %2900 = vmatpush1.bf16.msra.mxu0 %v1033
        %2901 = vmatprep.subr.bf16.mxu0 %v1038
        %2902 = vmatpush1.bf16.msra.mxu0 %v1037
        %2903 = vmatprep.subr.bf16.mxu0 0
        %2904 = vmatpush1.bf16.msra.mxu0 0
        %2905 = vmatprep.subr.bf16.mxu0 0
        %2906 = vmatpush1.bf16.msra.mxu0 0
        %2907 = vmatprep.subr.bf16.mxu0 0
        %2908 = vmatpush1.bf16.msra.mxu0 0
        %2909 = vmatprep.subr.bf16.mxu0 0
        %2910 = vmatpush1.bf16.msra.mxu0 0
        %2911 = vmatprep.subr.bf16.mxu0 0
        %2912 = vmatpush1.bf16.msra.mxu0 0
        %2913 = vmatprep.subr.bf16.mxu0 0
        %2914 = vmatpush1.bf16.msra.mxu0 0
        %2915 = vmatprep.subr.bf16.mxu0 0
        %2916 = vmatpush1.bf16.msra.mxu0 0
        %2917 = vmatprep.subr.bf16.mxu0 0
        %2918 = vmatpush1.bf16.msra.mxu0 0
        %2919 = vmatprep.subr.bf16.mxu0 0
        %2920 = vmatpush1.bf16.msra.mxu0 0
        %2921 = vmatprep.subr.bf16.mxu0 0
        %2922 = vmatpush1.bf16.msra.mxu0 0
        %2923 = vmatprep.subr.bf16.mxu0 0
        %2924 = vmatpush1.bf16.msra.mxu0 0
        %2925 = vmatprep.subr.bf16.mxu0 0
        %2926 = vmatpush1.bf16.msra.mxu0 0
        %2927 = vmatprep.subr.bf16.mxu0 0
        %2928 = vmatpush1.bf16.msra.mxu0 0
        %2929 = vmatprep.subr.bf16.mxu0 0
        %2930 = vmatpush1.bf16.msra.mxu0 0
        %2931 = vmatprep.mubr.bf16.mxu0 0
        %2932 = vmatmul.mubr.bf16.gmra.mrb[0].mxu0 %v2897
        %v2933 = vpop.f32.mrb[0].mxu0
        %v2934 = vadd.f32 %v2845, %v2933
        %v2935 = vpop.f32.mrb[0].mxu0
        %v2936 = vadd.f32 %v2847, %v2935
        %v2937 = vpop.f32.mrb[0].mxu0
        %v2938 = vadd.f32 %v2849, %v2937
        %v2939 = vpop.f32.mrb[0].mxu0
        %v2940 = vadd.f32 %v2851, %v2939
        %2941 = vdwg.mxu0
        %2942 = vmatprep.subr.bf16.mxu0 %v1036
        %2943 = vmatpush1.bf16.msra.mxu0 %v1035
        %2944 = vmatprep.subr.bf16.mxu0 %v1040
        %2945 = vmatpush1.bf16.msra.mxu0 %v1039
        %2946 = vmatprep.subr.bf16.mxu0 0
        %2947 = vmatpush1.bf16.msra.mxu0 0
        %2948 = vmatprep.subr.bf16.mxu0 0
        %2949 = vmatpush1.bf16.msra.mxu0 0
        %2950 = vmatprep.subr.bf16.mxu0 0
        %2951 = vmatpush1.bf16.msra.mxu0 0
        %2952 = vmatprep.subr.bf16.mxu0 0
        %2953 = vmatpush1.bf16.msra.mxu0 0
        %2954 = vmatprep.subr.bf16.mxu0 0
        %2955 = vmatpush1.bf16.msra.mxu0 0
        %2956 = vmatprep.subr.bf16.mxu0 0
        %2957 = vmatpush1.bf16.msra.mxu0 0
        %2958 = vmatprep.subr.bf16.mxu0 0
        %2959 = vmatpush1.bf16.msra.mxu0 0
        %2960 = vmatprep.subr.bf16.mxu0 0
        %2961 = vmatpush1.bf16.msra.mxu0 0
        %2962 = vmatprep.subr.bf16.mxu0 0
        %2963 = vmatpush1.bf16.msra.mxu0 0
        %2964 = vmatprep.subr.bf16.mxu0 0
        %2965 = vmatpush1.bf16.msra.mxu0 0
        %2966 = vmatprep.subr.bf16.mxu0 0
        %2967 = vmatpush1.bf16.msra.mxu0 0
        %2968 = vmatprep.subr.bf16.mxu0 0
        %2969 = vmatpush1.bf16.msra.mxu0 0
        %2970 = vmatprep.subr.bf16.mxu0 0
        %2971 = vmatpush1.bf16.msra.mxu0 0
        %2972 = vmatprep.subr.bf16.mxu0 0
        %2973 = vmatpush1.bf16.msra.mxu0 0
        %2974 = vmatprep.mubr.bf16.mxu0 0
        %2975 = vmatmul.mubr.bf16.gmra.mrb[0].mxu0 %v2897
        %v2976 = vpop.f32.mrb[0].mxu0
        %v2977 = vadd.f32 %v2888, %v2976
        %v2978 = vpop.f32.mrb[0].mxu0
        %v2979 = vadd.f32 %v2890, %v2978
        %v2980 = vpop.f32.mrb[0].mxu0
        %v2981 = vadd.f32 %v2892, %v2980
        %v2982 = vpop.f32.mrb[0].mxu0
        %v2983 = vadd.f32 %v2894, %v2982
        %2984 = vdwg.mxu0
        %v2985 = vadd.f32 %v2934, %v544
        %v2986 = vadd.f32 %v2936, %v548
        %v2987 = vadd.f32 %v2977, %v552
        %v2988 = vadd.f32 %v2979, %v556
        %v2989 = vadd.f32 %v2938, %v544
        %v2990 = vadd.f32 %v2940, %v548
        %v2991 = vadd.f32 %v2981, %v552
        %v2992 = vadd.f32 %v2983, %v556
        %v2993 = vxor.u32 %v2985, 2147483648
        %v2994 = vxor.u32 %v2989, 2147483648
        %v2995 = vmul.f32 %v2993, 1.442695
        %v2996 = vpow.pop %v2995
        %v2997 = vmul.f32 %v2994, 1.442695
        %v2998 = vpow.pop %v2997
        %v2999 = vadd.f32 %v2996, 1.0
        %v3000 = vadd.f32 %v2998, 1.0
        %v3001 = vrcp.pop %v2999
        %v3002 = vmul.f32 1.0, %v3001
        %v3003 = vrcp.pop %v3000
        %v3004 = vmul.f32 1.0, %v3003
        %v3005 = vxor.u32 %v2986, 2147483648
        %v3006 = vxor.u32 %v2990, 2147483648
        %v3007 = vmul.f32 %v3005, 1.442695
        %v3008 = vpow.pop %v3007
        %v3009 = vmul.f32 %v3006, 1.442695
        %v3010 = vpow.pop %v3009
        %v3011 = vadd.f32 %v3008, 1.0
        %v3012 = vadd.f32 %v3010, 1.0
        %v3013 = vrcp.pop %v3011
        %v3014 = vmul.f32 1.0, %v3013
        %v3015 = vrcp.pop %v3012
        %v3016 = vmul.f32 1.0, %v3015
        %v3017 = vtanh.pop %v2987
        %v3018 = vtanh.pop %v2991
        %v3019 = vxor.u32 %v2988, 2147483648
        %v3020 = vxor.u32 %v2992, 2147483648
        %v3021 = vmul.f32 %v3019, 1.442695
        %v3022 = vpow.pop %v3021
        %v3023 = vmul.f32 %v3020, 1.442695
        %v3024 = vpow.pop %v3023
        %v3025 = vadd.f32 %v3022, 1.0
        %v3026 = vadd.f32 %v3024, 1.0
        %v3027 = vrcp.pop %v3025
        %v3028 = vmul.f32 1.0, %v3027
        %v3029 = vrcp.pop %v3026
        %v3030 = vmul.f32 1.0, %v3029
        %v3031 = vmul.f32 %v3014, %v2439
        %v3032 = vmul.f32 %v3016, %v2440
        %v3033 = vmul.f32 %v3002, %v3017
        %v3034 = vmul.f32 %v3004, %v3018
        %v3035 = vadd.f32 %v3031, %v3033
        %v3036 = vadd.f32 %v3032, %v3034
        %v3037 = vtanh.pop %v3035
        %v3038 = vtanh.pop %v3036
        %v3039 = vmul.f32 %v3028, %v3037
        %v3040 = vmul.f32 %v3030, %v3038
        %v3041 = vpack.c.bf16 %v3040, %v3039
        %v3043 = vsel %vm623, %v3041, 0
        %3045 = vmatprep.subr.bf16.mxu0 0
        %3046 = vmatpush1.bf16.msra.mxu0 %v1203
        %3047 = vmatprep.subr.bf16.mxu0 0
        %3048 = vmatpush1.bf16.msra.mxu0 %v1204
        %3049 = vmatprep.subr.bf16.mxu0 0
        %3050 = vmatpush1.bf16.msra.mxu0 0
        %3051 = vmatprep.subr.bf16.mxu0 0
        %3052 = vmatpush1.bf16.msra.mxu0 0
        %3053 = vmatprep.subr.bf16.mxu0 0
        %3054 = vmatpush1.bf16.msra.mxu0 0
        %3055 = vmatprep.subr.bf16.mxu0 0
        %3056 = vmatpush1.bf16.msra.mxu0 0
        %3057 = vmatprep.subr.bf16.mxu0 0
        %3058 = vmatpush1.bf16.msra.mxu0 0
        %3059 = vmatprep.subr.bf16.mxu0 0
        %3060 = vmatpush1.bf16.msra.mxu0 0
        %3061 = vmatprep.subr.bf16.mxu0 0
        %3062 = vmatpush1.bf16.msra.mxu0 0
        %3063 = vmatprep.subr.bf16.mxu0 0
        %3064 = vmatpush1.bf16.msra.mxu0 0
        %3065 = vmatprep.subr.bf16.mxu0 0
        %3066 = vmatpush1.bf16.msra.mxu0 0
        %3067 = vmatprep.subr.bf16.mxu0 0
        %3068 = vmatpush1.bf16.msra.mxu0 0
        %3069 = vmatprep.subr.bf16.mxu0 0
        %3070 = vmatpush1.bf16.msra.mxu0 0
        %3071 = vmatprep.subr.bf16.mxu0 0
        %3072 = vmatpush1.bf16.msra.mxu0 0
        %3073 = vmatprep.subr.bf16.mxu0 0
        %3074 = vmatpush1.bf16.msra.mxu0 0
        %3075 = vmatprep.subr.bf16.mxu0 0
        %3076 = vmatpush1.bf16.msra.mxu0 0
        %3077 = vmatprep.mubr.bf16.mxu0 0
        %3078 = vmatmul.mubr.bf16.gmra.mrb[0].mxu0 %v3043
        %v3079 = vpop.f32.mrb[0].mxu0
        %v3080 = vadd.f32 %v570, %v3079
        %v3081 = vpop.f32.mrb[0].mxu0
        %v3082 = vpop.f32.mrb[0].mxu0
        %v3083 = vadd.f32 %v570, %v3082
        %v3084 = vpop.f32.mrb[0].mxu0
        %3085 = vdwg.mxu0
        %s3086 = scalar_lea.vmem %s436, 48 [#allocation14]
        %3087 = vst [vmem:[%s3086] sm:$0xff] %v3080
        %3088 = vst [vmem:[%s3086 + $0x8] sm:$0xff] %v3083
        %3089 = vmax.xlane.f32.xlu0 %v3080
        %v3090 = vpop.xlane.xlu0 %3089
        %3091 = vmax.xlane.f32.xlu0 %v3083
        %v3092 = vpop.xlane.xlu0 %3091
        %vm3093 = vcmp.ge.f32.partialorder %v3080, %v3090
        %vm3094 = vcmp.ge.f32.partialorder %v3083, %v3092
        %v3095 = vsel %vm3093, %v573, 128
        %v3096 = vsel %vm3094, %v573, 128
        %v3097 = vand.u32 %v3095, 65535
        %v3098 = vshra.s32 %v3095, 16
        %v3099 = vcvt.s32.f32 %v3097
        %v3100 = vcvt.s32.f32 %v3098
        %3101 = vmin.xlane.f32.xlu0 %v3100
        %v3102 = vpop.xlane.xlu0 %3101
        %vm3103 = vcmp.eq.f32.partialorder %v3100, %v3102
        %v3104 = vsel %vm3103, %v3099, inf
        %3105 = vmin.xlane.f32.xlu0 %v3104
        %v3106 = vpop.xlane.xlu0 %3105
        %v3107 = vcvt.f32.s32 %v3106
        %v3108 = vcvt.f32.s32 %v3102
        %v3109 = vshll.u32 %v3108, 16
        %v3110 = vadd.s32 %v3109, %v3107
        %v3111 = vand.u32 %v3096, 65535
        %v3112 = vshra.s32 %v3096, 16
        %v3113 = vcvt.s32.f32 %v3111
        %v3114 = vcvt.s32.f32 %v3112
        %3115 = vmin.xlane.f32.xlu0 %v3114
        %v3116 = vpop.xlane.xlu0 %3115
        %vm3117 = vcmp.eq.f32.partialorder %v3114, %v3116
        %v3118 = vsel %vm3117, %v3113, inf
        %3119 = vmin.xlane.f32.xlu0 %v3118
        %v3120 = vpop.xlane.xlu0 %3119
        %v3121 = vcvt.f32.s32 %v3120
        %v3122 = vcvt.f32.s32 %v3116
        %v3123 = vshll.u32 %v3122, 16
        %v3124 = vadd.s32 %v3123, %v3121
        %vm3125 = vcmp.eq.s32.totalorder %v3095, %v3110
        %vm3126 = vcmp.eq.s32.totalorder %v3096, %v3124
        %v3127 = vsel %vm3125, 1, 0
        %v3128 = vsel %vm3126, 1, 0
        %v3129 = vcvt.s32.f32 %v3127
        %v3130 = vcvt.s32.f32 %v3128
        %v3131 = vpack.c.bf16 %v3130, %v3129
        %3132 = vmatprep.subr.bf16.mxu0 0
        %3133 = vmatpush1.bf16.msra.mxu0 %v1328
        %3134 = vmatprep.subr.bf16.mxu0 0
        %3135 = vmatpush1.bf16.msra.mxu0 %v1329
        %3136 = vmatprep.subr.bf16.mxu0 0
        %3137 = vmatpush1.bf16.msra.mxu0 %v1330
        %3138 = vmatprep.subr.bf16.mxu0 0
        %3139 = vmatpush1.bf16.msra.mxu0 %v1331
        %3140 = vmatprep.subr.bf16.mxu0 0
        %3141 = vmatpush1.bf16.msra.mxu0 %v1332
        %3142 = vmatprep.subr.bf16.mxu0 0
        %3143 = vmatpush1.bf16.msra.mxu0 %v1333
        %3144 = vmatprep.subr.bf16.mxu0 0
        %3145 = vmatpush1.bf16.msra.mxu0 %v1334
        %3146 = vmatprep.subr.bf16.mxu0 0
        %3147 = vmatpush1.bf16.msra.mxu0 %v1335
        %3148 = vmatprep.subr.bf16.mxu0 0
        %3149 = vmatpush1.bf16.msra.mxu0 0
        %3150 = vmatprep.subr.bf16.mxu0 0
        %3151 = vmatpush1.bf16.msra.mxu0 0
        %3152 = vmatprep.subr.bf16.mxu0 0
        %3153 = vmatpush1.bf16.msra.mxu0 0
        %3154 = vmatprep.subr.bf16.mxu0 0
        %3155 = vmatpush1.bf16.msra.mxu0 0
        %3156 = vmatprep.subr.bf16.mxu0 0
        %3157 = vmatpush1.bf16.msra.mxu0 0
        %3158 = vmatprep.subr.bf16.mxu0 0
        %3159 = vmatpush1.bf16.msra.mxu0 0
        %3160 = vmatprep.subr.bf16.mxu0 0
        %3161 = vmatpush1.bf16.msra.mxu0 0
        %3162 = vmatprep.subr.bf16.mxu0 0
        %3163 = vmatpush1.bf16.msra.mxu0 0
        %3164 = vmatprep.mubr.bf16.mxu0 0
        %3165 = vmatmul.mubr.bf16.gmra.mrb[0].mxu0 %v3131
        %v3166 = vpop.f32.mrb[0].mxu0
        %v3167 = vadd.f32 0.0, %v3166
        %v3168 = vpop.f32.mrb[0].mxu0
        %v3169 = vpop.f32.mrb[0].mxu0
        %v3170 = vadd.f32 0.0, %v3169
        %v3171 = vpop.f32.mrb[0].mxu0
        %3172 = vdwg.mxu0
        %v3173 = vpack.c.bf16 %v3170, %v3167
        %3174 = vst.msk [vmem:[#allocation2] sm:$0xff] %vm623, %v2809
        %3175 = vst.msk [vmem:[#allocation3] sm:$0xff] %vm623, %v2803
        %3176 = vst.msk [vmem:[#allocation3 + $0x8] sm:$0xff] %vm623, %v2804
        %3177 = vst.msk [vmem:[%s575] sm:$0xff] %vm623, %v3041
        %3178 = vst.msk [vmem:[%s579] sm:$0xff] %vm623, %v3035
        %3179 = vst.msk [vmem:[%s579 + $0x8] sm:$0xff] %vm623, %v3036
        %3180 = vst.msk [vmem:[#allocation4] sm:$0xff] %vm733, %v3173
        %s3181 = sand.u32 %s264, 1
        %s3182 = scalar_lea.sflag [#allocation7], %s3181
        %s3183 = sand.u32 %s264, 1
        %s3184 = smul.addr %s3183, 64
        %s3185 = scalar_lea.vmem [#allocation14], %s3184
        // Predicated region
        $region85: #{tpu_custom_call.1} parent=59 // pred_check
          %p3186 = pneg %p274
        $region86: #{tpu_custom_call.1} parent=59 // pred_check_branch
          %3188 = sbr.rel (%p3186) target = $region88
        $region87: #{tpu_custom_call.1} parent=59 // pred_region
          %s3189 = smul.u32 4, %s32
          %s3190 = smul.u32 2, %s31
          %s3192 = ssub.s32 1024, 1024
          %3193 = vsyncadd %s3182, %s3192
          %s3194 = smul.addr %s3189, 2
          %s3195 = sadd.s32 %s3190, %s3194
          %s3196 = smul.addr %s3195, 128
          %s3197 = scalar_lea.hbm %s10, %s3196
          %s3198 = sshll.u32 %s3185, 4
          %s3199 = int_to_ptr.vmem [resolvable:$true] %s3198
          %3204 = dma.vmem_to_hbm [thread:$0]  %s3199, 1024, %s3197, %s3182, 128, 128, 8
        $region88: #{tpu_custom_call.1} parent=59 // pred_fallthru
          _
      $region60: #{tpu_custom_call.1} parent=5 // pred_fallthru
        _
      %p3205 = scmp.le.s32.totalorder 2, %s22
      // Predicated region
      $region89: #{tpu_custom_call.1} parent=5 // pred_check
        %p3206 = pneg %p3205
      $region90: #{tpu_custom_call.1} parent=5 // pred_check_branch
        %3208 = sbr.rel (%p3206) target = $region92
      $region91: #{tpu_custom_call.1} parent=5 // pred_region
        %s3209 = ssub.s32 %s22, 2
        // Predicated region
        $region93: #{tpu_custom_call.1} parent=91 // pred_check
          %p3210 = pneg %p280
        $region94: #{tpu_custom_call.1} parent=91 // pred_check_branch
          %3212 = sbr.rel (%p3210) target = $region96
        $region95: #{tpu_custom_call.1} parent=91 // pred_region
          %s3213 = sand.u32 %s265, 1
          %s3214 = scalar_lea.sflag [#allocation7], %s3213
          %s3215 = sand.u32 %s265, 1
          %s3216 = smul.addr %s3215, 64
          %s3217 = scalar_lea.vmem [#allocation14], %s3216
          %3218 = dma.done %s3214, 1024
        $region96: #{tpu_custom_call.1} parent=91 // pred_fallthru
          _
      $region92: #{tpu_custom_call.1} parent=5 // pred_fallthru
        _
    $region6: #{tpu_custom_call.1} parent=1 // loop_footer
      %s26 = sadd.s32 1, %s22
    $region7: #{tpu_custom_call.1} parent=1 // loop_footer_branch
      %21 = sbr.rel target = $region3
    $region8: #{tpu_custom_call.1} parent=1 // loop_exit
      _
    %3219 = vsyncpa [#allocation6], 1
    %s3220 = scalar_lea.sflag [#allocation6], 1
    %3221 = vsyncpa %s3220, 1
    %3222 = vsyncpa [#allocation9], 1
    %3223 = vsyncpa [#allocation12], 1
    %3224 = vsyncpa [#allocation7], 1
    %s3225 = scalar_lea.sflag [#allocation7], 1
    %3226 = vsyncpa %s3225, 1

</llo_original>
